<compile_context>
chip_gen: v7x
topology: tpu7x:2x2x1
jax: 0.10.0
libtpu: 0.0.40
codegen_flags: <defaults>
</compile_context>

<pallas_src>
import jax
import jax.numpy as jnp
from jax import lax
from jax.experimental import pallas as pl
from jax.experimental.pallas import tpu as pltpu

D_MODEL = 32
NHEAD = 4
D_FF = 64
NUM_LAYERS = 2
EPS = 1e-5

PARAM_KEYS = ("wqkv", "bqkv", "wo", "bo", "n1w", "n1b",
              "c1w", "c1b", "c2w", "c2b")
MATMUL_KEYS = ("wqkv", "wo", "c1w", "c2w")   # stored/consumed as bf16


def _layernorm(x, eps=EPS):
    # f32 math; rsqrt goes to the EUP slot instead of a VALU divide.
    mean = jnp.mean(x, axis=-1, keepdims=True)
    var = jnp.mean(jnp.square(x - mean), axis=-1, keepdims=True)
    return (x - mean) * lax.rsqrt(var + eps)


def _shift_rows_kernel(x, direction):
    # direction=+1: out[t] = x[t-1] (zero row at t=0)
    # direction=-1: out[t] = x[t+1] (zero row at t=T-1)
    T = x.shape[0]
    if direction == 1:
        rolled = pltpu.roll(x, shift=1, axis=0)
        mask_row = 0
    else:
        rolled = pltpu.roll(x, shift=T - 1, axis=0)
        mask_row = T - 1
    row = lax.broadcasted_iota(jnp.int32, x.shape, 0)
    return jnp.where(row == mask_row, jnp.zeros_like(rolled), rolled)


def _layer_body(x, g1p, beta,
                wqkv, bqkv, wo, bo, n1w, n1b, c1w, c1b, c2w, c2b):
    T, D = x.shape
    hd = D // NHEAD
    inv_sqrt_hd = 1.0 / (hd ** 0.5)

    # ---- fused Q/K/V projection: one [T, D] @ [D, 3D] matmul ----
    xb = x.astype(jnp.bfloat16)
    qkv = jnp.dot(xb, wqkv, preferred_element_type=jnp.float32) + bqkv  # [T, 3D]
    qb = qkv[:, :D].astype(jnp.bfloat16)
    kb = qkv[:, D:2 * D].astype(jnp.bfloat16)
    vb = qkv[:, 2 * D:].astype(jnp.bfloat16)

    # ---- multi-head self-attention (per-head outputs kept in registers) ----
    heads = []
    for h in range(NHEAD):  # static unrolled loop over heads
        lo, hi = h * hd, (h + 1) * hd
        s = lax.dot_general(qb[:, lo:hi], kb[:, lo:hi],
                            (((1,), (1,)), ((), ())),
                            preferred_element_type=jnp.float32) * inv_sqrt_hd
        s = s - jnp.max(s, axis=-1, keepdims=True)
        p = jnp.exp(s)
        p = p * pl.reciprocal(jnp.sum(p, axis=-1, keepdims=True), approx=True)
        heads.append(jnp.dot(p.astype(jnp.bfloat16), vb[:, lo:hi],
                             preferred_element_type=jnp.float32))
    attn = jnp.concatenate(heads, axis=-1)                               # [T, D]
    attn = jnp.dot(attn.astype(jnp.bfloat16), wo,
                   preferred_element_type=jnp.float32) + bo

    # ---- residual + LayerNorm (affine) ----
    x1 = _layernorm(x + attn) * n1w + n1b

    # ---- Conv feed-forward as two wide matmuls (taps fused along lanes) ----
    xcat = jnp.concatenate(
        [_shift_rows_kernel(x1, 1), x1, _shift_rows_kernel(x1, -1)], axis=-1)
    hmid = jnp.dot(xcat.astype(jnp.bfloat16), c1w,
                   preferred_element_type=jnp.float32) + c1b
    hmid = jnp.maximum(hmid, 0.0)

    hcat = jnp.concatenate(
        [_shift_rows_kernel(hmid, 1), hmid, _shift_rows_kernel(hmid, -1)],
        axis=-1)
    ff = jnp.dot(hcat.astype(jnp.bfloat16), c2w,
                 preferred_element_type=jnp.float32) + c2b

    # ---- residual + conditional LayerNorm (FiLM, gamma pre-folded to 1+g) ----
    return _layernorm(x1 + ff) * g1p + beta


def encoder_kernel(x_ref, g_ref, beta_ref,
                   wqkv_ref, bqkv_ref, wo_ref, bo_ref, n1w_ref, n1b_ref,
                   c1w_ref, c1b_ref, c2w_ref, c2b_ref, out_ref):
    x = x_ref[0]          # [T, D] f32
    g1p = g_ref[0]        # [T, D] f32 (already 1 + gamma)
    beta = beta_ref[0]    # [T, D] f32
    for l in range(NUM_LAYERS):  # both layers fused in one kernel
        x = _layer_body(x, g1p, beta,
                        wqkv_ref[l], bqkv_ref[l], wo_ref[l], bo_ref[l],
                        n1w_ref[l], n1b_ref[l],
                        c1w_ref[l], c1b_ref[l], c2w_ref[l], c2b_ref[l])
    out_ref[0] = x


def run_encoder(x, gamma1p, beta, W):
    B, T, D = x.shape
    seq_spec = pl.BlockSpec((1, T, D), lambda b: (b, 0, 0))

    def full_spec(a):
        return pl.BlockSpec(a.shape, lambda b: (0, 0, 0))

    weight_args = [W[k] for k in PARAM_KEYS]
    in_specs = [seq_spec, seq_spec, seq_spec] + [full_spec(w) for w in weight_args]

    return pl.pallas_call(
        encoder_kernel,
        out_shape=jax.ShapeDtypeStruct((B, T, D), jnp.float32),
        grid_spec=pltpu.PrefetchScalarGridSpec(
            num_scalar_prefetch=0,
            grid=(B,),
            in_specs=in_specs,
            out_specs=pl.BlockSpec((1, T, D), lambda b: (b, 0, 0))),
        compiler_params=pltpu.CompilerParams(
            dimension_semantics=("parallel",)),
    )(x, gamma1p, beta, *weight_args)


# ---------------- parameter construction (wrapper-side fusion) ----------------
def init_layer_params(key, d_model, d_ff):
    keys = jax.random.split(key, 12)

    def nrm(k, shape, scale=0.05):
        return scale * jax.random.normal(k, shape, dtype=jnp.float32)

    wqT = nrm(keys[0], (d_model, d_model))
    wkT = nrm(keys[1], (d_model, d_model))
    wvT = nrm(keys[2], (d_model, d_model))
    bq = nrm(keys[3], (1, d_model), 0.02)
    bk = nrm(keys[4], (1, d_model), 0.02)
    bv = nrm(keys[5], (1, d_model), 0.02)
    woT = nrm(keys[6], (d_model, d_model))
    bo = nrm(keys[7], (1, d_model), 0.02)
    n1w = jnp.ones((1, d_model), jnp.float32)
    n1b = jnp.zeros((1, d_model), jnp.float32)
    # ConvFeedForward weights, PyTorch layout [c_out, c_in, 3]
    c1 = nrm(keys[8], (d_ff, d_model, 3))
    c2 = nrm(keys[9], (d_model, d_ff, 3))
    c1b = nrm(keys[10], (1, d_ff), 0.02)
    c2b = nrm(keys[11], (1, d_model), 0.02)

    p = {}
    # fused QKV:  q|k|v = x @ [wqT | wkT | wvT]
    p["wqkv"] = jnp.concatenate([wqT, wkT, wvT], axis=1)        # [D, 3D]
    p["bqkv"] = jnp.concatenate([bq, bk, bv], axis=1)           # [1, 3D]
    p["wo"] = woT
    p["bo"] = bo
    p["n1w"] = n1w
    p["n1b"] = n1b
    # fused conv taps: rows 0:D <- x[t-1], D:2D <- x[t], 2D:3D <- x[t+1]
    p["c1w"] = jnp.concatenate([jnp.transpose(c1[:, :, t]) for t in range(3)],
                               axis=0)                          # [3D, D_FF]
    p["c2w"] = jnp.concatenate([jnp.transpose(c2[:, :, t]) for t in range(3)],
                               axis=0)                          # [3*D_FF, D]
    p["c1b"] = c1b
    p["c2b"] = c2b
    return p


def stack_layers(layer_params):
    stacked = {}
    for k in PARAM_KEYS:
        arr = jnp.stack([lp[k] for lp in layer_params], axis=0)
        if k in MATMUL_KEYS:
            arr = arr.astype(jnp.bfloat16)    # bf16 MXU inputs, f32 accumulation
        stacked[k] = arr
    return stacked


# ---------------- pure-JAX reference (same bf16 matmul precision) -------------
def _layernorm_ref(x, eps=EPS):
    mean = jnp.mean(x, axis=-1, keepdims=True)
    var = jnp.mean(jnp.square(x - mean), axis=-1, keepdims=True)
    return (x - mean) * lax.rsqrt(var + eps)


def _shift_ref(a, d):
    z = jnp.zeros_like(a[:, :1])
    if d == 1:
        return jnp.concatenate([z, a[:, :-1]], axis=1)
    return jnp.concatenate([a[:, 1:], z], axis=1)


def encoder_ref(x, g1p, beta, W):
    B, T, D = x.shape
    hd = D // NHEAD
    bf16 = jnp.bfloat16
    f32 = jnp.float32
    for l in range(NUM_LAYERS):
        qkv = jnp.einsum("btd,de->bte", x.astype(bf16), W["wqkv"][l],
                         preferred_element_type=f32) + W["bqkv"][l]
        q, k, v = qkv[..., :D], qkv[..., D:2 * D], qkv[..., 2 * D:]
        qh = q.reshape(B, T, NHEAD, hd).astype(bf16)
        kh = k.reshape(B, T, NHEAD, hd).astype(bf16)
        vh = v.reshape(B, T, NHEAD, hd).astype(bf16)
        s = jnp.einsum("bthd,bshd->bhts", qh, kh,
                       preferred_element_type=f32) / jnp.sqrt(jnp.float32(hd))
        pa = jax.nn.softmax(s, axis=-1)
        attn = jnp.einsum("bhts,bshd->bthd", pa.astype(bf16), vh,
                          preferred_element_type=f32).reshape(B, T, D)
        attn = jnp.einsum("btd,de->bte", attn.astype(bf16), W["wo"][l],
                          preferred_element_type=f32) + W["bo"][l]
        x1 = _layernorm_ref(x + attn) * W["n1w"][l] + W["n1b"][l]

        xcat = jnp.concatenate([_shift_ref(x1, 1), x1, _shift_ref(x1, -1)],
                               axis=-1).astype(bf16)
        h = jnp.einsum("btd,df->btf", xcat, W["c1w"][l],
                       preferred_element_type=f32) + W["c1b"][l]
        h = jnp.maximum(h, 0.0)
        hcat = jnp.concatenate([_shift_ref(h, 1), h, _shift_ref(h, -1)],
                               axis=-1).astype(bf16)
        ff = jnp.einsum("btf,fd->btd", hcat, W["c2w"][l],
                        preferred_element_type=f32) + W["c2b"][l]
        x = _layernorm_ref(x1 + ff) * g1p + beta
    return x


if __name__ == "__main__":
    B, T = 2, 16
    key = jax.random.PRNGKey(0)
    kx, kc, kp = jax.random.split(key, 3)

    x = jax.random.normal(kx, (B, T, D_MODEL), dtype=jnp.float32)
    cond = jax.random.normal(kc, (B, T, 2 * D_MODEL), dtype=jnp.float32)
    gamma = cond[..., :D_MODEL]
    beta = cond[..., D_MODEL:]
    gamma1p = 1.0 + gamma   # pre-fold (1 + gamma) at the wrapper level

    layer_keys = jax.random.split(kp, NUM_LAYERS)
    layers = [init_layer_params(layer_keys[i], D_MODEL, D_FF)
              for i in range(NUM_LAYERS)]
    stacked = stack_layers(layers)

    out = run_encoder(x, gamma1p, beta, stacked)
    ref = encoder_ref(x, gamma1p, beta, stacked)

    out = jax.block_until_ready(out)
    ref = jax.block_until_ready(ref)

    assert out.shape == (B, T, D_MODEL)
    max_err = float(jnp.max(jnp.abs(out - ref)))
    assert max_err < 2e-2, max_err
    print("KERNEL_OK")
</pallas_src>

<mosaic_0001>
module attributes {stable_mosaic.version = 11 : i64} {
  func.func @encoder_kernel(%arg0: i32, %arg1: memref<1x16x32xf32, #tpu.memory_space<vmem>>, %arg2: memref<1x16x32xf32, #tpu.memory_space<vmem>>, %arg3: memref<1x16x32xf32, #tpu.memory_space<vmem>>, %arg4: memref<2x32x96xbf16, #tpu.memory_space<vmem>>, %arg5: memref<2x1x96xf32, #tpu.memory_space<vmem>>, %arg6: memref<2x32x32xbf16, #tpu.memory_space<vmem>>, %arg7: memref<2x1x32xf32, #tpu.memory_space<vmem>>, %arg8: memref<2x1x32xf32, #tpu.memory_space<vmem>>, %arg9: memref<2x1x32xf32, #tpu.memory_space<vmem>>, %arg10: memref<2x96x64xbf16, #tpu.memory_space<vmem>>, %arg11: memref<2x1x64xf32, #tpu.memory_space<vmem>>, %arg12: memref<2x192x32xbf16, #tpu.memory_space<vmem>>, %arg13: memref<2x1x32xf32, #tpu.memory_space<vmem>>, %arg14: memref<1x16x32xf32, #tpu.memory_space<vmem>>) attributes {dimension_semantics = [#tpu.dimension_semantics<parallel>], iteration_bounds = array<i64: 2>, scalar_prefetch = 0 : i64, scratch_operands = 0 : i64, tpu.core_type = #tpu.core_type<tc>, window_params = [{transform_indices = @transform_0, window_bounds = array<i64: 1, 16, 32>}, {transform_indices = @transform_1, window_bounds = array<i64: 1, 16, 32>}, {transform_indices = @transform_2, window_bounds = array<i64: 1, 16, 32>}, {pipeline_mode = #tpu.pipeline_mode<synchronous>, transform_indices = @transform_3, window_bounds = array<i64: 2, 32, 96>}, {pipeline_mode = #tpu.pipeline_mode<synchronous>, transform_indices = @transform_4, window_bounds = array<i64: 2, 1, 96>}, {pipeline_mode = #tpu.pipeline_mode<synchronous>, transform_indices = @transform_5, window_bounds = array<i64: 2, 32, 32>}, {pipeline_mode = #tpu.pipeline_mode<synchronous>, transform_indices = @transform_6, window_bounds = array<i64: 2, 1, 32>}, {pipeline_mode = #tpu.pipeline_mode<synchronous>, transform_indices = @transform_7, window_bounds = array<i64: 2, 1, 32>}, {pipeline_mode = #tpu.pipeline_mode<synchronous>, transform_indices = @transform_8, window_bounds = array<i64: 2, 1, 32>}, {pipeline_mode = #tpu.pipeline_mode<synchronous>, transform_indices = @transform_9, window_bounds = array<i64: 2, 96, 64>}, {pipeline_mode = #tpu.pipeline_mode<synchronous>, transform_indices = @transform_10, window_bounds = array<i64: 2, 1, 64>}, {pipeline_mode = #tpu.pipeline_mode<synchronous>, transform_indices = @transform_11, window_bounds = array<i64: 2, 192, 32>}, {pipeline_mode = #tpu.pipeline_mode<synchronous>, transform_indices = @transform_12, window_bounds = array<i64: 2, 1, 32>}, {transform_indices = @transform_13, window_bounds = array<i64: 1, 16, 32>}]} {
    %c0 = arith.constant 0 : index
    %c0_0 = arith.constant 0 : index
    %c0_1 = arith.constant 0 : index
    %0 = vector.load %arg1[%c0, %c0_0, %c0_1] : memref<1x16x32xf32, #tpu.memory_space<vmem>>, vector<1x16x32xf32>
    %1 = vector.shape_cast %0 : vector<1x16x32xf32> to vector<16x32xf32>
    %c0_2 = arith.constant 0 : index
    %c0_3 = arith.constant 0 : index
    %c0_4 = arith.constant 0 : index
    %2 = vector.load %arg2[%c0_2, %c0_3, %c0_4] : memref<1x16x32xf32, #tpu.memory_space<vmem>>, vector<1x16x32xf32>
    %3 = vector.shape_cast %2 : vector<1x16x32xf32> to vector<16x32xf32>
    %c0_5 = arith.constant 0 : index
    %c0_6 = arith.constant 0 : index
    %c0_7 = arith.constant 0 : index
    %4 = vector.load %arg3[%c0_5, %c0_6, %c0_7] : memref<1x16x32xf32, #tpu.memory_space<vmem>>, vector<1x16x32xf32>
    %5 = vector.shape_cast %4 : vector<1x16x32xf32> to vector<16x32xf32>
    %c0_8 = arith.constant 0 : index
    %c0_9 = arith.constant 0 : index
    %c0_10 = arith.constant 0 : index
    %6 = vector.load %arg4[%c0_8, %c0_9, %c0_10] : memref<2x32x96xbf16, #tpu.memory_space<vmem>>, vector<1x32x96xbf16>
    %7 = vector.shape_cast %6 : vector<1x32x96xbf16> to vector<32x96xbf16>
    %c0_11 = arith.constant 0 : index
    %c0_12 = arith.constant 0 : index
    %c0_13 = arith.constant 0 : index
    %8 = vector.load %arg5[%c0_11, %c0_12, %c0_13] : memref<2x1x96xf32, #tpu.memory_space<vmem>>, vector<1x1x96xf32>
    %9 = vector.shape_cast %8 : vector<1x1x96xf32> to vector<1x96xf32>
    %c0_14 = arith.constant 0 : index
    %c0_15 = arith.constant 0 : index
    %c0_16 = arith.constant 0 : index
    %10 = vector.load %arg6[%c0_14, %c0_15, %c0_16] : memref<2x32x32xbf16, #tpu.memory_space<vmem>>, vector<1x32x32xbf16>
    %11 = vector.shape_cast %10 : vector<1x32x32xbf16> to vector<32x32xbf16>
    %c0_17 = arith.constant 0 : index
    %c0_18 = arith.constant 0 : index
    %c0_19 = arith.constant 0 : index
    %12 = vector.load %arg7[%c0_17, %c0_18, %c0_19] : memref<2x1x32xf32, #tpu.memory_space<vmem>>, vector<1x1x32xf32>
    %13 = vector.shape_cast %12 : vector<1x1x32xf32> to vector<1x32xf32>
    %c0_20 = arith.constant 0 : index
    %c0_21 = arith.constant 0 : index
    %c0_22 = arith.constant 0 : index
    %14 = vector.load %arg8[%c0_20, %c0_21, %c0_22] : memref<2x1x32xf32, #tpu.memory_space<vmem>>, vector<1x1x32xf32>
    %15 = vector.shape_cast %14 : vector<1x1x32xf32> to vector<1x32xf32>
    %c0_23 = arith.constant 0 : index
    %c0_24 = arith.constant 0 : index
    %c0_25 = arith.constant 0 : index
    %16 = vector.load %arg9[%c0_23, %c0_24, %c0_25] : memref<2x1x32xf32, #tpu.memory_space<vmem>>, vector<1x1x32xf32>
    %17 = vector.shape_cast %16 : vector<1x1x32xf32> to vector<1x32xf32>
    %c0_26 = arith.constant 0 : index
    %c0_27 = arith.constant 0 : index
    %c0_28 = arith.constant 0 : index
    %18 = vector.load %arg10[%c0_26, %c0_27, %c0_28] : memref<2x96x64xbf16, #tpu.memory_space<vmem>>, vector<1x96x64xbf16>
    %19 = vector.shape_cast %18 : vector<1x96x64xbf16> to vector<96x64xbf16>
    %c0_29 = arith.constant 0 : index
    %c0_30 = arith.constant 0 : index
    %c0_31 = arith.constant 0 : index
    %20 = vector.load %arg11[%c0_29, %c0_30, %c0_31] : memref<2x1x64xf32, #tpu.memory_space<vmem>>, vector<1x1x64xf32>
    %21 = vector.shape_cast %20 : vector<1x1x64xf32> to vector<1x64xf32>
    %c0_32 = arith.constant 0 : index
    %c0_33 = arith.constant 0 : index
    %c0_34 = arith.constant 0 : index
    %22 = vector.load %arg12[%c0_32, %c0_33, %c0_34] : memref<2x192x32xbf16, #tpu.memory_space<vmem>>, vector<1x192x32xbf16>
    %23 = vector.shape_cast %22 : vector<1x192x32xbf16> to vector<192x32xbf16>
    %c0_35 = arith.constant 0 : index
    %c0_36 = arith.constant 0 : index
    %c0_37 = arith.constant 0 : index
    %24 = vector.load %arg13[%c0_35, %c0_36, %c0_37] : memref<2x1x32xf32, #tpu.memory_space<vmem>>, vector<1x1x32xf32>
    %25 = vector.shape_cast %24 : vector<1x1x32xf32> to vector<1x32xf32>
    %26 = arith.truncf %1 : vector<16x32xf32> to vector<16x32xbf16>
    %cst = arith.constant dense<0.000000e+00> : vector<16x96xf32>
    %27 = tpu.matmul %26, %7, %cst {dimension_numbers = #tpu.dot_dimension_numbers<[1], [0], [0], [1], [0, 0, 1, 1], [], []>} : vector<16x32xbf16>, vector<32x96xbf16>, vector<16x96xf32> -> vector<16x96xf32>
    %28 = vector.broadcast %9 : vector<1x96xf32> to vector<16x96xf32>
    %29 = arith.addf %27, %28 : vector<16x96xf32>
    %30 = vector.extract_strided_slice %29 {offsets = [0, 0], sizes = [16, 32], strides = [1, 1]} : vector<16x96xf32> to vector<16x32xf32>
    %31 = arith.truncf %30 : vector<16x32xf32> to vector<16x32xbf16>
    %32 = vector.extract_strided_slice %29 {offsets = [0, 32], sizes = [16, 32], strides = [1, 1]} : vector<16x96xf32> to vector<16x32xf32>
    %33 = arith.truncf %32 : vector<16x32xf32> to vector<16x32xbf16>
    %34 = vector.extract_strided_slice %29 {offsets = [0, 64], sizes = [16, 32], strides = [1, 1]} : vector<16x96xf32> to vector<16x32xf32>
    %35 = arith.truncf %34 : vector<16x32xf32> to vector<16x32xbf16>
    %36 = vector.extract_strided_slice %31 {offsets = [0, 0], sizes = [16, 8], strides = [1, 1]} : vector<16x32xbf16> to vector<16x8xbf16>
    %37 = vector.extract_strided_slice %33 {offsets = [0, 0], sizes = [16, 8], strides = [1, 1]} : vector<16x32xbf16> to vector<16x8xbf16>
    %cst_38 = arith.constant dense<0.000000e+00> : vector<16x16xf32>
    %38 = tpu.matmul %36, %37, %cst_38 {dimension_numbers = #tpu.dot_dimension_numbers<[1], [1], [0], [0], [0, 0, 1, 0], [], []>} : vector<16x8xbf16>, vector<16x8xbf16>, vector<16x16xf32> -> vector<16x16xf32>
    %cst_39 = arith.constant 0.353553385 : f32
    %39 = vector.broadcast %cst_39 : f32 to vector<16x16xf32>
    %40 = arith.mulf %38, %39 : vector<16x16xf32>
    %cst_40 = arith.constant dense<0xFF800000> : vector<16xf32>
    %41 = vector.multi_reduction <maximumf>, %40, %cst_40 [1] : vector<16x16xf32> to vector<16xf32>
    %42 = vector.shape_cast %41 : vector<16xf32> to vector<16x1xf32>
    %43 = vector.broadcast %42 : vector<16x1xf32> to vector<16x16xf32>
    %44 = arith.subf %40, %43 : vector<16x16xf32>
    %45 = math.exp %44 : vector<16x16xf32>
    %cst_41 = arith.constant dense<0.000000e+00> : vector<16xf32>
    %46 = vector.multi_reduction <add>, %45, %cst_41 [1] : vector<16x16xf32> to vector<16xf32>
    %47 = vector.shape_cast %46 : vector<16xf32> to vector<16x1xf32>
    %48 = tpu.reciprocal %47 {approx = true} : vector<16x1xf32> -> vector<16x1xf32>
    %49 = vector.broadcast %48 : vector<16x1xf32> to vector<16x16xf32>
    %50 = arith.mulf %45, %49 : vector<16x16xf32>
    %51 = arith.truncf %50 : vector<16x16xf32> to vector<16x16xbf16>
    %52 = vector.extract_strided_slice %35 {offsets = [0, 0], sizes = [16, 8], strides = [1, 1]} : vector<16x32xbf16> to vector<16x8xbf16>
    %cst_42 = arith.constant dense<0.000000e+00> : vector<16x8xf32>
    %53 = tpu.matmul %51, %52, %cst_42 {dimension_numbers = #tpu.dot_dimension_numbers<[1], [0], [0], [1], [0, 0, 1, 1], [], []>} : vector<16x16xbf16>, vector<16x8xbf16>, vector<16x8xf32> -> vector<16x8xf32>
    %54 = vector.extract_strided_slice %31 {offsets = [0, 8], sizes = [16, 8], strides = [1, 1]} : vector<16x32xbf16> to vector<16x8xbf16>
    %55 = vector.extract_strided_slice %33 {offsets = [0, 8], sizes = [16, 8], strides = [1, 1]} : vector<16x32xbf16> to vector<16x8xbf16>
    %cst_43 = arith.constant dense<0.000000e+00> : vector<16x16xf32>
    %56 = tpu.matmul %54, %55, %cst_43 {dimension_numbers = #tpu.dot_dimension_numbers<[1], [1], [0], [0], [0, 0, 1, 0], [], []>} : vector<16x8xbf16>, vector<16x8xbf16>, vector<16x16xf32> -> vector<16x16xf32>
    %cst_44 = arith.constant 0.353553385 : f32
    %57 = vector.broadcast %cst_44 : f32 to vector<16x16xf32>
    %58 = arith.mulf %56, %57 : vector<16x16xf32>
    %cst_45 = arith.constant dense<0xFF800000> : vector<16xf32>
    %59 = vector.multi_reduction <maximumf>, %58, %cst_45 [1] : vector<16x16xf32> to vector<16xf32>
    %60 = vector.shape_cast %59 : vector<16xf32> to vector<16x1xf32>
    %61 = vector.broadcast %60 : vector<16x1xf32> to vector<16x16xf32>
    %62 = arith.subf %58, %61 : vector<16x16xf32>
    %63 = math.exp %62 : vector<16x16xf32>
    %cst_46 = arith.constant dense<0.000000e+00> : vector<16xf32>
    %64 = vector.multi_reduction <add>, %63, %cst_46 [1] : vector<16x16xf32> to vector<16xf32>
    %65 = vector.shape_cast %64 : vector<16xf32> to vector<16x1xf32>
    %66 = tpu.reciprocal %65 {approx = true} : vector<16x1xf32> -> vector<16x1xf32>
    %67 = vector.broadcast %66 : vector<16x1xf32> to vector<16x16xf32>
    %68 = arith.mulf %63, %67 : vector<16x16xf32>
    %69 = arith.truncf %68 : vector<16x16xf32> to vector<16x16xbf16>
    %70 = vector.extract_strided_slice %35 {offsets = [0, 8], sizes = [16, 8], strides = [1, 1]} : vector<16x32xbf16> to vector<16x8xbf16>
    %cst_47 = arith.constant dense<0.000000e+00> : vector<16x8xf32>
    %71 = tpu.matmul %69, %70, %cst_47 {dimension_numbers = #tpu.dot_dimension_numbers<[1], [0], [0], [1], [0, 0, 1, 1], [], []>} : vector<16x16xbf16>, vector<16x8xbf16>, vector<16x8xf32> -> vector<16x8xf32>
    %72 = vector.extract_strided_slice %31 {offsets = [0, 16], sizes = [16, 8], strides = [1, 1]} : vector<16x32xbf16> to vector<16x8xbf16>
    %73 = vector.extract_strided_slice %33 {offsets = [0, 16], sizes = [16, 8], strides = [1, 1]} : vector<16x32xbf16> to vector<16x8xbf16>
    %cst_48 = arith.constant dense<0.000000e+00> : vector<16x16xf32>
    %74 = tpu.matmul %72, %73, %cst_48 {dimension_numbers = #tpu.dot_dimension_numbers<[1], [1], [0], [0], [0, 0, 1, 0], [], []>} : vector<16x8xbf16>, vector<16x8xbf16>, vector<16x16xf32> -> vector<16x16xf32>
    %cst_49 = arith.constant 0.353553385 : f32
    %75 = vector.broadcast %cst_49 : f32 to vector<16x16xf32>
    %76 = arith.mulf %74, %75 : vector<16x16xf32>
    %cst_50 = arith.constant dense<0xFF800000> : vector<16xf32>
    %77 = vector.multi_reduction <maximumf>, %76, %cst_50 [1] : vector<16x16xf32> to vector<16xf32>
    %78 = vector.shape_cast %77 : vector<16xf32> to vector<16x1xf32>
    %79 = vector.broadcast %78 : vector<16x1xf32> to vector<16x16xf32>
    %80 = arith.subf %76, %79 : vector<16x16xf32>
    %81 = math.exp %80 : vector<16x16xf32>
    %cst_51 = arith.constant dense<0.000000e+00> : vector<16xf32>
    %82 = vector.multi_reduction <add>, %81, %cst_51 [1] : vector<16x16xf32> to vector<16xf32>
    %83 = vector.shape_cast %82 : vector<16xf32> to vector<16x1xf32>
    %84 = tpu.reciprocal %83 {approx = true} : vector<16x1xf32> -> vector<16x1xf32>
    %85 = vector.broadcast %84 : vector<16x1xf32> to vector<16x16xf32>
    %86 = arith.mulf %81, %85 : vector<16x16xf32>
    %87 = arith.truncf %86 : vector<16x16xf32> to vector<16x16xbf16>
    %88 = vector.extract_strided_slice %35 {offsets = [0, 16], sizes = [16, 8], strides = [1, 1]} : vector<16x32xbf16> to vector<16x8xbf16>
    %cst_52 = arith.constant dense<0.000000e+00> : vector<16x8xf32>
    %89 = tpu.matmul %87, %88, %cst_52 {dimension_numbers = #tpu.dot_dimension_numbers<[1], [0], [0], [1], [0, 0, 1, 1], [], []>} : vector<16x16xbf16>, vector<16x8xbf16>, vector<16x8xf32> -> vector<16x8xf32>
    %90 = vector.extract_strided_slice %31 {offsets = [0, 24], sizes = [16, 8], strides = [1, 1]} : vector<16x32xbf16> to vector<16x8xbf16>
    %91 = vector.extract_strided_slice %33 {offsets = [0, 24], sizes = [16, 8], strides = [1, 1]} : vector<16x32xbf16> to vector<16x8xbf16>
    %cst_53 = arith.constant dense<0.000000e+00> : vector<16x16xf32>
    %92 = tpu.matmul %90, %91, %cst_53 {dimension_numbers = #tpu.dot_dimension_numbers<[1], [1], [0], [0], [0, 0, 1, 0], [], []>} : vector<16x8xbf16>, vector<16x8xbf16>, vector<16x16xf32> -> vector<16x16xf32>
    %cst_54 = arith.constant 0.353553385 : f32
    %93 = vector.broadcast %cst_54 : f32 to vector<16x16xf32>
    %94 = arith.mulf %92, %93 : vector<16x16xf32>
    %cst_55 = arith.constant dense<0xFF800000> : vector<16xf32>
    %95 = vector.multi_reduction <maximumf>, %94, %cst_55 [1] : vector<16x16xf32> to vector<16xf32>
    %96 = vector.shape_cast %95 : vector<16xf32> to vector<16x1xf32>
    %97 = vector.broadcast %96 : vector<16x1xf32> to vector<16x16xf32>
    %98 = arith.subf %94, %97 : vector<16x16xf32>
    %99 = math.exp %98 : vector<16x16xf32>
    %cst_56 = arith.constant dense<0.000000e+00> : vector<16xf32>
    %100 = vector.multi_reduction <add>, %99, %cst_56 [1] : vector<16x16xf32> to vector<16xf32>
    %101 = vector.shape_cast %100 : vector<16xf32> to vector<16x1xf32>
    %102 = tpu.reciprocal %101 {approx = true} : vector<16x1xf32> -> vector<16x1xf32>
    %103 = vector.broadcast %102 : vector<16x1xf32> to vector<16x16xf32>
    %104 = arith.mulf %99, %103 : vector<16x16xf32>
    %105 = arith.truncf %104 : vector<16x16xf32> to vector<16x16xbf16>
    %106 = vector.extract_strided_slice %35 {offsets = [0, 24], sizes = [16, 8], strides = [1, 1]} : vector<16x32xbf16> to vector<16x8xbf16>
    %cst_57 = arith.constant dense<0.000000e+00> : vector<16x8xf32>
    %107 = tpu.matmul %105, %106, %cst_57 {dimension_numbers = #tpu.dot_dimension_numbers<[1], [0], [0], [1], [0, 0, 1, 1], [], []>} : vector<16x16xbf16>, vector<16x8xbf16>, vector<16x8xf32> -> vector<16x8xf32>
    %108 = tpu.concatenate %53, %71, %89, %107 in 1 : vector<16x8xf32>, vector<16x8xf32>, vector<16x8xf32>, vector<16x8xf32> -> vector<16x32xf32>
    %109 = arith.truncf %108 : vector<16x32xf32> to vector<16x32xbf16>
    %cst_58 = arith.constant dense<0.000000e+00> : vector<16x32xf32>
    %110 = tpu.matmul %109, %11, %cst_58 {dimension_numbers = #tpu.dot_dimension_numbers<[1], [0], [0], [1], [0, 0, 1, 1], [], []>} : vector<16x32xbf16>, vector<32x32xbf16>, vector<16x32xf32> -> vector<16x32xf32>
    %111 = vector.broadcast %13 : vector<1x32xf32> to vector<16x32xf32>
    %112 = arith.addf %110, %111 : vector<16x32xf32>
    %113 = arith.addf %1, %112 : vector<16x32xf32>
    %cst_59 = arith.constant dense<0.000000e+00> : vector<16xf32>
    %114 = vector.multi_reduction <add>, %113, %cst_59 [1] : vector<16x32xf32> to vector<16xf32>
    %115 = vector.shape_cast %114 : vector<16xf32> to vector<16x1xf32>
    %cst_60 = arith.constant 3.200000e+01 : f32
    %116 = vector.broadcast %cst_60 : f32 to vector<16x1xf32>
    %117 = arith.divf %115, %116 : vector<16x1xf32>
    %118 = vector.broadcast %117 : vector<16x1xf32> to vector<16x32xf32>
    %119 = arith.subf %113, %118 : vector<16x32xf32>
    %120 = arith.mulf %119, %119 : vector<16x32xf32>
    %cst_61 = arith.constant dense<0.000000e+00> : vector<16xf32>
    %121 = vector.multi_reduction <add>, %120, %cst_61 [1] : vector<16x32xf32> to vector<16xf32>
    %122 = vector.shape_cast %121 : vector<16xf32> to vector<16x1xf32>
    %cst_62 = arith.constant 3.200000e+01 : f32
    %123 = vector.broadcast %cst_62 : f32 to vector<16x1xf32>
    %124 = arith.divf %122, %123 : vector<16x1xf32>
    %125 = vector.broadcast %117 : vector<16x1xf32> to vector<16x32xf32>
    %126 = arith.subf %113, %125 : vector<16x32xf32>
    %cst_63 = arith.constant 9.99999974E-6 : f32
    %127 = vector.broadcast %cst_63 : f32 to vector<16x1xf32>
    %128 = arith.addf %124, %127 : vector<16x1xf32>
    %129 = math.rsqrt %128 : vector<16x1xf32>
    %130 = vector.broadcast %129 : vector<16x1xf32> to vector<16x32xf32>
    %131 = arith.mulf %126, %130 : vector<16x32xf32>
    %132 = vector.broadcast %15 : vector<1x32xf32> to vector<16x32xf32>
    %133 = arith.mulf %131, %132 : vector<16x32xf32>
    %134 = vector.broadcast %17 : vector<1x32xf32> to vector<16x32xf32>
    %135 = arith.addf %133, %134 : vector<16x32xf32>
    %c1_i32 = arith.constant 1 : i32
    %136 = tpu.dynamic_rotate %135 by %c1_i32 dim 0 : vector<16x32xf32>, i32 -> vector<16x32xf32>
    %137 = tpu.iota {dimensions = array<i32: 0>} : vector<16x32xi32>
    %c0_i32 = arith.constant 0 : i32
    %138 = vector.broadcast %c0_i32 : i32 to vector<16x32xi32>
    %139 = arith.cmpi eq, %137, %138 : vector<16x32xi32>
    %cst_64 = arith.constant 0.000000e+00 : f32
    %140 = vector.broadcast %cst_64 : f32 to vector<16x32xf32>
    %141 = arith.select %139, %140, %136 : vector<16x32xi1>, vector<16x32xf32>
    %c15_i32 = arith.constant 15 : i32
    %142 = tpu.dynamic_rotate %135 by %c15_i32 dim 0 : vector<16x32xf32>, i32 -> vector<16x32xf32>
    %143 = tpu.iota {dimensions = array<i32: 0>} : vector<16x32xi32>
    %c15_i32_65 = arith.constant 15 : i32
    %144 = vector.broadcast %c15_i32_65 : i32 to vector<16x32xi32>
    %145 = arith.cmpi eq, %143, %144 : vector<16x32xi32>
    %cst_66 = arith.constant 0.000000e+00 : f32
    %146 = vector.broadcast %cst_66 : f32 to vector<16x32xf32>
    %147 = arith.select %145, %146, %142 : vector<16x32xi1>, vector<16x32xf32>
    %148 = tpu.concatenate %141, %135, %147 in 1 : vector<16x32xf32>, vector<16x32xf32>, vector<16x32xf32> -> vector<16x96xf32>
    %149 = arith.truncf %148 : vector<16x96xf32> to vector<16x96xbf16>
    %cst_67 = arith.constant dense<0.000000e+00> : vector<16x64xf32>
    %150 = tpu.matmul %149, %19, %cst_67 {dimension_numbers = #tpu.dot_dimension_numbers<[1], [0], [0], [1], [0, 0, 1, 1], [], []>} : vector<16x96xbf16>, vector<96x64xbf16>, vector<16x64xf32> -> vector<16x64xf32>
    %151 = vector.broadcast %21 : vector<1x64xf32> to vector<16x64xf32>
    %152 = arith.addf %150, %151 : vector<16x64xf32>
    %cst_68 = arith.constant 0.000000e+00 : f32
    %153 = vector.broadcast %cst_68 : f32 to vector<16x64xf32>
    %154 = arith.maximumf %152, %153 : vector<16x64xf32>
    %c1_i32_69 = arith.constant 1 : i32
    %155 = tpu.dynamic_rotate %154 by %c1_i32_69 dim 0 : vector<16x64xf32>, i32 -> vector<16x64xf32>
    %156 = tpu.iota {dimensions = array<i32: 0>} : vector<16x64xi32>
    %c0_i32_70 = arith.constant 0 : i32
    %157 = vector.broadcast %c0_i32_70 : i32 to vector<16x64xi32>
    %158 = arith.cmpi eq, %156, %157 : vector<16x64xi32>
    %cst_71 = arith.constant 0.000000e+00 : f32
    %159 = vector.broadcast %cst_71 : f32 to vector<16x64xf32>
    %160 = arith.select %158, %159, %155 : vector<16x64xi1>, vector<16x64xf32>
    %c15_i32_72 = arith.constant 15 : i32
    %161 = tpu.dynamic_rotate %154 by %c15_i32_72 dim 0 : vector<16x64xf32>, i32 -> vector<16x64xf32>
    %162 = tpu.iota {dimensions = array<i32: 0>} : vector<16x64xi32>
    %c15_i32_73 = arith.constant 15 : i32
    %163 = vector.broadcast %c15_i32_73 : i32 to vector<16x64xi32>
    %164 = arith.cmpi eq, %162, %163 : vector<16x64xi32>
    %cst_74 = arith.constant 0.000000e+00 : f32
    %165 = vector.broadcast %cst_74 : f32 to vector<16x64xf32>
    %166 = arith.select %164, %165, %161 : vector<16x64xi1>, vector<16x64xf32>
    %167 = tpu.concatenate %160, %154, %166 in 1 : vector<16x64xf32>, vector<16x64xf32>, vector<16x64xf32> -> vector<16x192xf32>
    %168 = arith.truncf %167 : vector<16x192xf32> to vector<16x192xbf16>
    %cst_75 = arith.constant dense<0.000000e+00> : vector<16x32xf32>
    %169 = tpu.matmul %168, %23, %cst_75 {dimension_numbers = #tpu.dot_dimension_numbers<[1], [0], [0], [1], [0, 0, 1, 1], [], []>} : vector<16x192xbf16>, vector<192x32xbf16>, vector<16x32xf32> -> vector<16x32xf32>
    %170 = vector.broadcast %25 : vector<1x32xf32> to vector<16x32xf32>
    %171 = arith.addf %169, %170 : vector<16x32xf32>
    %172 = arith.addf %135, %171 : vector<16x32xf32>
    %cst_76 = arith.constant dense<0.000000e+00> : vector<16xf32>
    %173 = vector.multi_reduction <add>, %172, %cst_76 [1] : vector<16x32xf32> to vector<16xf32>
    %174 = vector.shape_cast %173 : vector<16xf32> to vector<16x1xf32>
    %cst_77 = arith.constant 3.200000e+01 : f32
    %175 = vector.broadcast %cst_77 : f32 to vector<16x1xf32>
    %176 = arith.divf %174, %175 : vector<16x1xf32>
    %177 = vector.broadcast %176 : vector<16x1xf32> to vector<16x32xf32>
    %178 = arith.subf %172, %177 : vector<16x32xf32>
    %179 = arith.mulf %178, %178 : vector<16x32xf32>
    %cst_78 = arith.constant dense<0.000000e+00> : vector<16xf32>
    %180 = vector.multi_reduction <add>, %179, %cst_78 [1] : vector<16x32xf32> to vector<16xf32>
    %181 = vector.shape_cast %180 : vector<16xf32> to vector<16x1xf32>
    %cst_79 = arith.constant 3.200000e+01 : f32
    %182 = vector.broadcast %cst_79 : f32 to vector<16x1xf32>
    %183 = arith.divf %181, %182 : vector<16x1xf32>
    %184 = vector.broadcast %176 : vector<16x1xf32> to vector<16x32xf32>
    %185 = arith.subf %172, %184 : vector<16x32xf32>
    %cst_80 = arith.constant 9.99999974E-6 : f32
    %186 = vector.broadcast %cst_80 : f32 to vector<16x1xf32>
    %187 = arith.addf %183, %186 : vector<16x1xf32>
    %188 = math.rsqrt %187 : vector<16x1xf32>
    %189 = vector.broadcast %188 : vector<16x1xf32> to vector<16x32xf32>
    %190 = arith.mulf %185, %189 : vector<16x32xf32>
    %191 = arith.mulf %190, %3 : vector<16x32xf32>
    %192 = arith.addf %191, %5 : vector<16x32xf32>
    %c1 = arith.constant 1 : index
    %c0_81 = arith.constant 0 : index
    %c0_82 = arith.constant 0 : index
    %193 = vector.load %arg4[%c1, %c0_81, %c0_82] : memref<2x32x96xbf16, #tpu.memory_space<vmem>>, vector<1x32x96xbf16>
    %194 = vector.shape_cast %193 : vector<1x32x96xbf16> to vector<32x96xbf16>
    %c1_83 = arith.constant 1 : index
    %c0_84 = arith.constant 0 : index
    %c0_85 = arith.constant 0 : index
    %195 = vector.load %arg5[%c1_83, %c0_84, %c0_85] : memref<2x1x96xf32, #tpu.memory_space<vmem>>, vector<1x1x96xf32>
    %196 = vector.shape_cast %195 : vector<1x1x96xf32> to vector<1x96xf32>
    %c1_86 = arith.constant 1 : index
    %c0_87 = arith.constant 0 : index
    %c0_88 = arith.constant 0 : index
    %197 = vector.load %arg6[%c1_86, %c0_87, %c0_88] : memref<2x32x32xbf16, #tpu.memory_space<vmem>>, vector<1x32x32xbf16>
    %198 = vector.shape_cast %197 : vector<1x32x32xbf16> to vector<32x32xbf16>
    %c1_89 = arith.constant 1 : index
    %c0_90 = arith.constant 0 : index
    %c0_91 = arith.constant 0 : index
    %199 = vector.load %arg7[%c1_89, %c0_90, %c0_91] : memref<2x1x32xf32, #tpu.memory_space<vmem>>, vector<1x1x32xf32>
    %200 = vector.shape_cast %199 : vector<1x1x32xf32> to vector<1x32xf32>
    %c1_92 = arith.constant 1 : index
    %c0_93 = arith.constant 0 : index
    %c0_94 = arith.constant 0 : index
    %201 = vector.load %arg8[%c1_92, %c0_93, %c0_94] : memref<2x1x32xf32, #tpu.memory_space<vmem>>, vector<1x1x32xf32>
    %202 = vector.shape_cast %201 : vector<1x1x32xf32> to vector<1x32xf32>
    %c1_95 = arith.constant 1 : index
    %c0_96 = arith.constant 0 : index
    %c0_97 = arith.constant 0 : index
    %203 = vector.load %arg9[%c1_95, %c0_96, %c0_97] : memref<2x1x32xf32, #tpu.memory_space<vmem>>, vector<1x1x32xf32>
    %204 = vector.shape_cast %203 : vector<1x1x32xf32> to vector<1x32xf32>
    %c1_98 = arith.constant 1 : index
    %c0_99 = arith.constant 0 : index
    %c0_100 = arith.constant 0 : index
    %205 = vector.load %arg10[%c1_98, %c0_99, %c0_100] : memref<2x96x64xbf16, #tpu.memory_space<vmem>>, vector<1x96x64xbf16>
    %206 = vector.shape_cast %205 : vector<1x96x64xbf16> to vector<96x64xbf16>
    %c1_101 = arith.constant 1 : index
    %c0_102 = arith.constant 0 : index
    %c0_103 = arith.constant 0 : index
    %207 = vector.load %arg11[%c1_101, %c0_102, %c0_103] : memref<2x1x64xf32, #tpu.memory_space<vmem>>, vector<1x1x64xf32>
    %208 = vector.shape_cast %207 : vector<1x1x64xf32> to vector<1x64xf32>
    %c1_104 = arith.constant 1 : index
    %c0_105 = arith.constant 0 : index
    %c0_106 = arith.constant 0 : index
    %209 = vector.load %arg12[%c1_104, %c0_105, %c0_106] : memref<2x192x32xbf16, #tpu.memory_space<vmem>>, vector<1x192x32xbf16>
    %210 = vector.shape_cast %209 : vector<1x192x32xbf16> to vector<192x32xbf16>
    %c1_107 = arith.constant 1 : index
    %c0_108 = arith.constant 0 : index
    %c0_109 = arith.constant 0 : index
    %211 = vector.load %arg13[%c1_107, %c0_108, %c0_109] : memref<2x1x32xf32, #tpu.memory_space<vmem>>, vector<1x1x32xf32>
    %212 = vector.shape_cast %211 : vector<1x1x32xf32> to vector<1x32xf32>
    %213 = arith.truncf %192 : vector<16x32xf32> to vector<16x32xbf16>
    %cst_110 = arith.constant dense<0.000000e+00> : vector<16x96xf32>
    %214 = tpu.matmul %213, %194, %cst_110 {dimension_numbers = #tpu.dot_dimension_numbers<[1], [0], [0], [1], [0, 0, 1, 1], [], []>} : vector<16x32xbf16>, vector<32x96xbf16>, vector<16x96xf32> -> vector<16x96xf32>
    %215 = vector.broadcast %196 : vector<1x96xf32> to vector<16x96xf32>
    %216 = arith.addf %214, %215 : vector<16x96xf32>
    %217 = vector.extract_strided_slice %216 {offsets = [0, 0], sizes = [16, 32], strides = [1, 1]} : vector<16x96xf32> to vector<16x32xf32>
    %218 = arith.truncf %217 : vector<16x32xf32> to vector<16x32xbf16>
    %219 = vector.extract_strided_slice %216 {offsets = [0, 32], sizes = [16, 32], strides = [1, 1]} : vector<16x96xf32> to vector<16x32xf32>
    %220 = arith.truncf %219 : vector<16x32xf32> to vector<16x32xbf16>
    %221 = vector.extract_strided_slice %216 {offsets = [0, 64], sizes = [16, 32], strides = [1, 1]} : vector<16x96xf32> to vector<16x32xf32>
    %222 = arith.truncf %221 : vector<16x32xf32> to vector<16x32xbf16>
    %223 = vector.extract_strided_slice %218 {offsets = [0, 0], sizes = [16, 8], strides = [1, 1]} : vector<16x32xbf16> to vector<16x8xbf16>
    %224 = vector.extract_strided_slice %220 {offsets = [0, 0], sizes = [16, 8], strides = [1, 1]} : vector<16x32xbf16> to vector<16x8xbf16>
    %cst_111 = arith.constant dense<0.000000e+00> : vector<16x16xf32>
    %225 = tpu.matmul %223, %224, %cst_111 {dimension_numbers = #tpu.dot_dimension_numbers<[1], [1], [0], [0], [0, 0, 1, 0], [], []>} : vector<16x8xbf16>, vector<16x8xbf16>, vector<16x16xf32> -> vector<16x16xf32>
    %cst_112 = arith.constant 0.353553385 : f32
    %226 = vector.broadcast %cst_112 : f32 to vector<16x16xf32>
    %227 = arith.mulf %225, %226 : vector<16x16xf32>
    %cst_113 = arith.constant dense<0xFF800000> : vector<16xf32>
    %228 = vector.multi_reduction <maximumf>, %227, %cst_113 [1] : vector<16x16xf32> to vector<16xf32>
    %229 = vector.shape_cast %228 : vector<16xf32> to vector<16x1xf32>
    %230 = vector.broadcast %229 : vector<16x1xf32> to vector<16x16xf32>
    %231 = arith.subf %227, %230 : vector<16x16xf32>
    %232 = math.exp %231 : vector<16x16xf32>
    %cst_114 = arith.constant dense<0.000000e+00> : vector<16xf32>
    %233 = vector.multi_reduction <add>, %232, %cst_114 [1] : vector<16x16xf32> to vector<16xf32>
    %234 = vector.shape_cast %233 : vector<16xf32> to vector<16x1xf32>
    %235 = tpu.reciprocal %234 {approx = true} : vector<16x1xf32> -> vector<16x1xf32>
    %236 = vector.broadcast %235 : vector<16x1xf32> to vector<16x16xf32>
    %237 = arith.mulf %232, %236 : vector<16x16xf32>
    %238 = arith.truncf %237 : vector<16x16xf32> to vector<16x16xbf16>
    %239 = vector.extract_strided_slice %222 {offsets = [0, 0], sizes = [16, 8], strides = [1, 1]} : vector<16x32xbf16> to vector<16x8xbf16>
    %cst_115 = arith.constant dense<0.000000e+00> : vector<16x8xf32>
    %240 = tpu.matmul %238, %239, %cst_115 {dimension_numbers = #tpu.dot_dimension_numbers<[1], [0], [0], [1], [0, 0, 1, 1], [], []>} : vector<16x16xbf16>, vector<16x8xbf16>, vector<16x8xf32> -> vector<16x8xf32>
    %241 = vector.extract_strided_slice %218 {offsets = [0, 8], sizes = [16, 8], strides = [1, 1]} : vector<16x32xbf16> to vector<16x8xbf16>
    %242 = vector.extract_strided_slice %220 {offsets = [0, 8], sizes = [16, 8], strides = [1, 1]} : vector<16x32xbf16> to vector<16x8xbf16>
    %cst_116 = arith.constant dense<0.000000e+00> : vector<16x16xf32>
    %243 = tpu.matmul %241, %242, %cst_116 {dimension_numbers = #tpu.dot_dimension_numbers<[1], [1], [0], [0], [0, 0, 1, 0], [], []>} : vector<16x8xbf16>, vector<16x8xbf16>, vector<16x16xf32> -> vector<16x16xf32>
    %cst_117 = arith.constant 0.353553385 : f32
    %244 = vector.broadcast %cst_117 : f32 to vector<16x16xf32>
    %245 = arith.mulf %243, %244 : vector<16x16xf32>
    %cst_118 = arith.constant dense<0xFF800000> : vector<16xf32>
    %246 = vector.multi_reduction <maximumf>, %245, %cst_118 [1] : vector<16x16xf32> to vector<16xf32>
    %247 = vector.shape_cast %246 : vector<16xf32> to vector<16x1xf32>
    %248 = vector.broadcast %247 : vector<16x1xf32> to vector<16x16xf32>
    %249 = arith.subf %245, %248 : vector<16x16xf32>
    %250 = math.exp %249 : vector<16x16xf32>
    %cst_119 = arith.constant dense<0.000000e+00> : vector<16xf32>
    %251 = vector.multi_reduction <add>, %250, %cst_119 [1] : vector<16x16xf32> to vector<16xf32>
    %252 = vector.shape_cast %251 : vector<16xf32> to vector<16x1xf32>
    %253 = tpu.reciprocal %252 {approx = true} : vector<16x1xf32> -> vector<16x1xf32>
    %254 = vector.broadcast %253 : vector<16x1xf32> to vector<16x16xf32>
    %255 = arith.mulf %250, %254 : vector<16x16xf32>
    %256 = arith.truncf %255 : vector<16x16xf32> to vector<16x16xbf16>
    %257 = vector.extract_strided_slice %222 {offsets = [0, 8], sizes = [16, 8], strides = [1, 1]} : vector<16x32xbf16> to vector<16x8xbf16>
    %cst_120 = arith.constant dense<0.000000e+00> : vector<16x8xf32>
    %258 = tpu.matmul %256, %257, %cst_120 {dimension_numbers = #tpu.dot_dimension_numbers<[1], [0], [0], [1], [0, 0, 1, 1], [], []>} : vector<16x16xbf16>, vector<16x8xbf16>, vector<16x8xf32> -> vector<16x8xf32>
    %259 = vector.extract_strided_slice %218 {offsets = [0, 16], sizes = [16, 8], strides = [1, 1]} : vector<16x32xbf16> to vector<16x8xbf16>
    %260 = vector.extract_strided_slice %220 {offsets = [0, 16], sizes = [16, 8], strides = [1, 1]} : vector<16x32xbf16> to vector<16x8xbf16>
    %cst_121 = arith.constant dense<0.000000e+00> : vector<16x16xf32>
    %261 = tpu.matmul %259, %260, %cst_121 {dimension_numbers = #tpu.dot_dimension_numbers<[1], [1], [0], [0], [0, 0, 1, 0], [], []>} : vector<16x8xbf16>, vector<16x8xbf16>, vector<16x16xf32> -> vector<16x16xf32>
    %cst_122 = arith.constant 0.353553385 : f32
    %262 = vector.broadcast %cst_122 : f32 to vector<16x16xf32>
    %263 = arith.mulf %261, %262 : vector<16x16xf32>
    %cst_123 = arith.constant dense<0xFF800000> : vector<16xf32>
    %264 = vector.multi_reduction <maximumf>, %263, %cst_123 [1] : vector<16x16xf32> to vector<16xf32>
    %265 = vector.shape_cast %264 : vector<16xf32> to vector<16x1xf32>
    %266 = vector.broadcast %265 : vector<16x1xf32> to vector<16x16xf32>
    %267 = arith.subf %263, %266 : vector<16x16xf32>
    %268 = math.exp %267 : vector<16x16xf32>
    %cst_124 = arith.constant dense<0.000000e+00> : vector<16xf32>
    %269 = vector.multi_reduction <add>, %268, %cst_124 [1] : vector<16x16xf32> to vector<16xf32>
    %270 = vector.shape_cast %269 : vector<16xf32> to vector<16x1xf32>
    %271 = tpu.reciprocal %270 {approx = true} : vector<16x1xf32> -> vector<16x1xf32>
    %272 = vector.broadcast %271 : vector<16x1xf32> to vector<16x16xf32>
    %273 = arith.mulf %268, %272 : vector<16x16xf32>
    %274 = arith.truncf %273 : vector<16x16xf32> to vector<16x16xbf16>
    %275 = vector.extract_strided_slice %222 {offsets = [0, 16], sizes = [16, 8], strides = [1, 1]} : vector<16x32xbf16> to vector<16x8xbf16>
    %cst_125 = arith.constant dense<0.000000e+00> : vector<16x8xf32>
    %276 = tpu.matmul %274, %275, %cst_125 {dimension_numbers = #tpu.dot_dimension_numbers<[1], [0], [0], [1], [0, 0, 1, 1], [], []>} : vector<16x16xbf16>, vector<16x8xbf16>, vector<16x8xf32> -> vector<16x8xf32>
    %277 = vector.extract_strided_slice %218 {offsets = [0, 24], sizes = [16, 8], strides = [1, 1]} : vector<16x32xbf16> to vector<16x8xbf16>
    %278 = vector.extract_strided_slice %220 {offsets = [0, 24], sizes = [16, 8], strides = [1, 1]} : vector<16x32xbf16> to vector<16x8xbf16>
    %cst_126 = arith.constant dense<0.000000e+00> : vector<16x16xf32>
    %279 = tpu.matmul %277, %278, %cst_126 {dimension_numbers = #tpu.dot_dimension_numbers<[1], [1], [0], [0], [0, 0, 1, 0], [], []>} : vector<16x8xbf16>, vector<16x8xbf16>, vector<16x16xf32> -> vector<16x16xf32>
    %cst_127 = arith.constant 0.353553385 : f32
    %280 = vector.broadcast %cst_127 : f32 to vector<16x16xf32>
    %281 = arith.mulf %279, %280 : vector<16x16xf32>
    %cst_128 = arith.constant dense<0xFF800000> : vector<16xf32>
    %282 = vector.multi_reduction <maximumf>, %281, %cst_128 [1] : vector<16x16xf32> to vector<16xf32>
    %283 = vector.shape_cast %282 : vector<16xf32> to vector<16x1xf32>
    %284 = vector.broadcast %283 : vector<16x1xf32> to vector<16x16xf32>
    %285 = arith.subf %281, %284 : vector<16x16xf32>
    %286 = math.exp %285 : vector<16x16xf32>
    %cst_129 = arith.constant dense<0.000000e+00> : vector<16xf32>
    %287 = vector.multi_reduction <add>, %286, %cst_129 [1] : vector<16x16xf32> to vector<16xf32>
    %288 = vector.shape_cast %287 : vector<16xf32> to vector<16x1xf32>
    %289 = tpu.reciprocal %288 {approx = true} : vector<16x1xf32> -> vector<16x1xf32>
    %290 = vector.broadcast %289 : vector<16x1xf32> to vector<16x16xf32>
    %291 = arith.mulf %286, %290 : vector<16x16xf32>
    %292 = arith.truncf %291 : vector<16x16xf32> to vector<16x16xbf16>
    %293 = vector.extract_strided_slice %222 {offsets = [0, 24], sizes = [16, 8], strides = [1, 1]} : vector<16x32xbf16> to vector<16x8xbf16>
    %cst_130 = arith.constant dense<0.000000e+00> : vector<16x8xf32>
    %294 = tpu.matmul %292, %293, %cst_130 {dimension_numbers = #tpu.dot_dimension_numbers<[1], [0], [0], [1], [0, 0, 1, 1], [], []>} : vector<16x16xbf16>, vector<16x8xbf16>, vector<16x8xf32> -> vector<16x8xf32>
    %295 = tpu.concatenate %240, %258, %276, %294 in 1 : vector<16x8xf32>, vector<16x8xf32>, vector<16x8xf32>, vector<16x8xf32> -> vector<16x32xf32>
    %296 = arith.truncf %295 : vector<16x32xf32> to vector<16x32xbf16>
    %cst_131 = arith.constant dense<0.000000e+00> : vector<16x32xf32>
    %297 = tpu.matmul %296, %198, %cst_131 {dimension_numbers = #tpu.dot_dimension_numbers<[1], [0], [0], [1], [0, 0, 1, 1], [], []>} : vector<16x32xbf16>, vector<32x32xbf16>, vector<16x32xf32> -> vector<16x32xf32>
    %298 = vector.broadcast %200 : vector<1x32xf32> to vector<16x32xf32>
    %299 = arith.addf %297, %298 : vector<16x32xf32>
    %300 = arith.addf %192, %299 : vector<16x32xf32>
    %cst_132 = arith.constant dense<0.000000e+00> : vector<16xf32>
    %301 = vector.multi_reduction <add>, %300, %cst_132 [1] : vector<16x32xf32> to vector<16xf32>
    %302 = vector.shape_cast %301 : vector<16xf32> to vector<16x1xf32>
    %cst_133 = arith.constant 3.200000e+01 : f32
    %303 = vector.broadcast %cst_133 : f32 to vector<16x1xf32>
    %304 = arith.divf %302, %303 : vector<16x1xf32>
    %305 = vector.broadcast %304 : vector<16x1xf32> to vector<16x32xf32>
    %306 = arith.subf %300, %305 : vector<16x32xf32>
    %307 = arith.mulf %306, %306 : vector<16x32xf32>
    %cst_134 = arith.constant dense<0.000000e+00> : vector<16xf32>
    %308 = vector.multi_reduction <add>, %307, %cst_134 [1] : vector<16x32xf32> to vector<16xf32>
    %309 = vector.shape_cast %308 : vector<16xf32> to vector<16x1xf32>
    %cst_135 = arith.constant 3.200000e+01 : f32
    %310 = vector.broadcast %cst_135 : f32 to vector<16x1xf32>
    %311 = arith.divf %309, %310 : vector<16x1xf32>
    %312 = vector.broadcast %304 : vector<16x1xf32> to vector<16x32xf32>
    %313 = arith.subf %300, %312 : vector<16x32xf32>
    %cst_136 = arith.constant 9.99999974E-6 : f32
    %314 = vector.broadcast %cst_136 : f32 to vector<16x1xf32>
    %315 = arith.addf %311, %314 : vector<16x1xf32>
    %316 = math.rsqrt %315 : vector<16x1xf32>
    %317 = vector.broadcast %316 : vector<16x1xf32> to vector<16x32xf32>
    %318 = arith.mulf %313, %317 : vector<16x32xf32>
    %319 = vector.broadcast %202 : vector<1x32xf32> to vector<16x32xf32>
    %320 = arith.mulf %318, %319 : vector<16x32xf32>
    %321 = vector.broadcast %204 : vector<1x32xf32> to vector<16x32xf32>
    %322 = arith.addf %320, %321 : vector<16x32xf32>
    %c1_i32_137 = arith.constant 1 : i32
    %323 = tpu.dynamic_rotate %322 by %c1_i32_137 dim 0 : vector<16x32xf32>, i32 -> vector<16x32xf32>
    %324 = tpu.iota {dimensions = array<i32: 0>} : vector<16x32xi32>
    %c0_i32_138 = arith.constant 0 : i32
    %325 = vector.broadcast %c0_i32_138 : i32 to vector<16x32xi32>
    %326 = arith.cmpi eq, %324, %325 : vector<16x32xi32>
    %cst_139 = arith.constant 0.000000e+00 : f32
    %327 = vector.broadcast %cst_139 : f32 to vector<16x32xf32>
    %328 = arith.select %326, %327, %323 : vector<16x32xi1>, vector<16x32xf32>
    %c15_i32_140 = arith.constant 15 : i32
    %329 = tpu.dynamic_rotate %322 by %c15_i32_140 dim 0 : vector<16x32xf32>, i32 -> vector<16x32xf32>
    %330 = tpu.iota {dimensions = array<i32: 0>} : vector<16x32xi32>
    %c15_i32_141 = arith.constant 15 : i32
    %331 = vector.broadcast %c15_i32_141 : i32 to vector<16x32xi32>
    %332 = arith.cmpi eq, %330, %331 : vector<16x32xi32>
    %cst_142 = arith.constant 0.000000e+00 : f32
    %333 = vector.broadcast %cst_142 : f32 to vector<16x32xf32>
    %334 = arith.select %332, %333, %329 : vector<16x32xi1>, vector<16x32xf32>
    %335 = tpu.concatenate %328, %322, %334 in 1 : vector<16x32xf32>, vector<16x32xf32>, vector<16x32xf32> -> vector<16x96xf32>
    %336 = arith.truncf %335 : vector<16x96xf32> to vector<16x96xbf16>
    %cst_143 = arith.constant dense<0.000000e+00> : vector<16x64xf32>
    %337 = tpu.matmul %336, %206, %cst_143 {dimension_numbers = #tpu.dot_dimension_numbers<[1], [0], [0], [1], [0, 0, 1, 1], [], []>} : vector<16x96xbf16>, vector<96x64xbf16>, vector<16x64xf32> -> vector<16x64xf32>
    %338 = vector.broadcast %208 : vector<1x64xf32> to vector<16x64xf32>
    %339 = arith.addf %337, %338 : vector<16x64xf32>
    %cst_144 = arith.constant 0.000000e+00 : f32
    %340 = vector.broadcast %cst_144 : f32 to vector<16x64xf32>
    %341 = arith.maximumf %339, %340 : vector<16x64xf32>
    %c1_i32_145 = arith.constant 1 : i32
    %342 = tpu.dynamic_rotate %341 by %c1_i32_145 dim 0 : vector<16x64xf32>, i32 -> vector<16x64xf32>
    %343 = tpu.iota {dimensions = array<i32: 0>} : vector<16x64xi32>
    %c0_i32_146 = arith.constant 0 : i32
    %344 = vector.broadcast %c0_i32_146 : i32 to vector<16x64xi32>
    %345 = arith.cmpi eq, %343, %344 : vector<16x64xi32>
    %cst_147 = arith.constant 0.000000e+00 : f32
    %346 = vector.broadcast %cst_147 : f32 to vector<16x64xf32>
    %347 = arith.select %345, %346, %342 : vector<16x64xi1>, vector<16x64xf32>
    %c15_i32_148 = arith.constant 15 : i32
    %348 = tpu.dynamic_rotate %341 by %c15_i32_148 dim 0 : vector<16x64xf32>, i32 -> vector<16x64xf32>
    %349 = tpu.iota {dimensions = array<i32: 0>} : vector<16x64xi32>
    %c15_i32_149 = arith.constant 15 : i32
    %350 = vector.broadcast %c15_i32_149 : i32 to vector<16x64xi32>
    %351 = arith.cmpi eq, %349, %350 : vector<16x64xi32>
    %cst_150 = arith.constant 0.000000e+00 : f32
    %352 = vector.broadcast %cst_150 : f32 to vector<16x64xf32>
    %353 = arith.select %351, %352, %348 : vector<16x64xi1>, vector<16x64xf32>
    %354 = tpu.concatenate %347, %341, %353 in 1 : vector<16x64xf32>, vector<16x64xf32>, vector<16x64xf32> -> vector<16x192xf32>
    %355 = arith.truncf %354 : vector<16x192xf32> to vector<16x192xbf16>
    %cst_151 = arith.constant dense<0.000000e+00> : vector<16x32xf32>
    %356 = tpu.matmul %355, %210, %cst_151 {dimension_numbers = #tpu.dot_dimension_numbers<[1], [0], [0], [1], [0, 0, 1, 1], [], []>} : vector<16x192xbf16>, vector<192x32xbf16>, vector<16x32xf32> -> vector<16x32xf32>
    %357 = vector.broadcast %212 : vector<1x32xf32> to vector<16x32xf32>
    %358 = arith.addf %356, %357 : vector<16x32xf32>
    %359 = arith.addf %322, %358 : vector<16x32xf32>
    %cst_152 = arith.constant dense<0.000000e+00> : vector<16xf32>
    %360 = vector.multi_reduction <add>, %359, %cst_152 [1] : vector<16x32xf32> to vector<16xf32>
    %361 = vector.shape_cast %360 : vector<16xf32> to vector<16x1xf32>
    %cst_153 = arith.constant 3.200000e+01 : f32
    %362 = vector.broadcast %cst_153 : f32 to vector<16x1xf32>
    %363 = arith.divf %361, %362 : vector<16x1xf32>
    %364 = vector.broadcast %363 : vector<16x1xf32> to vector<16x32xf32>
    %365 = arith.subf %359, %364 : vector<16x32xf32>
    %366 = arith.mulf %365, %365 : vector<16x32xf32>
    %cst_154 = arith.constant dense<0.000000e+00> : vector<16xf32>
    %367 = vector.multi_reduction <add>, %366, %cst_154 [1] : vector<16x32xf32> to vector<16xf32>
    %368 = vector.shape_cast %367 : vector<16xf32> to vector<16x1xf32>
    %cst_155 = arith.constant 3.200000e+01 : f32
    %369 = vector.broadcast %cst_155 : f32 to vector<16x1xf32>
    %370 = arith.divf %368, %369 : vector<16x1xf32>
    %371 = vector.broadcast %363 : vector<16x1xf32> to vector<16x32xf32>
    %372 = arith.subf %359, %371 : vector<16x32xf32>
    %cst_156 = arith.constant 9.99999974E-6 : f32
    %373 = vector.broadcast %cst_156 : f32 to vector<16x1xf32>
    %374 = arith.addf %370, %373 : vector<16x1xf32>
    %375 = math.rsqrt %374 : vector<16x1xf32>
    %376 = vector.broadcast %375 : vector<16x1xf32> to vector<16x32xf32>
    %377 = arith.mulf %372, %376 : vector<16x32xf32>
    %378 = arith.mulf %377, %3 : vector<16x32xf32>
    %379 = arith.addf %378, %5 : vector<16x32xf32>
    %c0_157 = arith.constant 0 : index
    %c0_158 = arith.constant 0 : index
    %c0_159 = arith.constant 0 : index
    %380 = vector.load %arg14[%c0_157, %c0_158, %c0_159] : memref<1x16x32xf32, #tpu.memory_space<vmem>>, vector<1x16x32xf32>
    %381 = vector.shape_cast %380 : vector<1x16x32xf32> to vector<16x32xf32>
    %382 = vector.shape_cast %379 : vector<16x32xf32> to vector<1x16x32xf32>
    tpu.vector_store %arg14[%c0_157, %c0_158, %c0_159], %382 {strides = array<i32>} : memref<1x16x32xf32, #tpu.memory_space<vmem>>, vector<1x16x32xf32>,
    return
  }
  func.func @transform_0(%arg0: i32) -> (i32, i32, i32) {
    %c0_i32 = arith.constant 0 : i32
    %c0_i32_0 = arith.constant 0 : i32
    %c0_i32_1 = arith.constant 0 : i32
    return %arg0, %c0_i32, %c0_i32_0 : i32, i32, i32
  }
  func.func @transform_1(%arg0: i32) -> (i32, i32, i32) {
    %c0_i32 = arith.constant 0 : i32
    %c0_i32_0 = arith.constant 0 : i32
    %c0_i32_1 = arith.constant 0 : i32
    return %arg0, %c0_i32, %c0_i32_0 : i32, i32, i32
  }
  func.func @transform_2(%arg0: i32) -> (i32, i32, i32) {
    %c0_i32 = arith.constant 0 : i32
    %c0_i32_0 = arith.constant 0 : i32
    %c0_i32_1 = arith.constant 0 : i32
    return %arg0, %c0_i32, %c0_i32_0 : i32, i32, i32
  }
  func.func @transform_3(%arg0: i32) -> (i32, i32, i32) {
    %c0_i32 = arith.constant 0 : i32
    %c0_i32_0 = arith.constant 0 : i32
    %c0_i32_1 = arith.constant 0 : i32
    %c0_i32_2 = arith.constant 0 : i32
    return %c0_i32, %c0_i32_0, %c0_i32_1 : i32, i32, i32
  }
  func.func @transform_4(%arg0: i32) -> (i32, i32, i32) {
    %c0_i32 = arith.constant 0 : i32
    %c0_i32_0 = arith.constant 0 : i32
    %c0_i32_1 = arith.constant 0 : i32
    %c0_i32_2 = arith.constant 0 : i32
    return %c0_i32, %c0_i32_0, %c0_i32_1 : i32, i32, i32
  }
  func.func @transform_5(%arg0: i32) -> (i32, i32, i32) {
    %c0_i32 = arith.constant 0 : i32
    %c0_i32_0 = arith.constant 0 : i32
    %c0_i32_1 = arith.constant 0 : i32
    %c0_i32_2 = arith.constant 0 : i32
    return %c0_i32, %c0_i32_0, %c0_i32_1 : i32, i32, i32
  }
  func.func @transform_6(%arg0: i32) -> (i32, i32, i32) {
    %c0_i32 = arith.constant 0 : i32
    %c0_i32_0 = arith.constant 0 : i32
    %c0_i32_1 = arith.constant 0 : i32
    %c0_i32_2 = arith.constant 0 : i32
    return %c0_i32, %c0_i32_0, %c0_i32_1 : i32, i32, i32
  }
  func.func @transform_7(%arg0: i32) -> (i32, i32, i32) {
    %c0_i32 = arith.constant 0 : i32
    %c0_i32_0 = arith.constant 0 : i32
    %c0_i32_1 = arith.constant 0 : i32
    %c0_i32_2 = arith.constant 0 : i32
    return %c0_i32, %c0_i32_0, %c0_i32_1 : i32, i32, i32
  }
  func.func @transform_8(%arg0: i32) -> (i32, i32, i32) {
    %c0_i32 = arith.constant 0 : i32
    %c0_i32_0 = arith.constant 0 : i32
    %c0_i32_1 = arith.constant 0 : i32
    %c0_i32_2 = arith.constant 0 : i32
    return %c0_i32, %c0_i32_0, %c0_i32_1 : i32, i32, i32
  }
  func.func @transform_9(%arg0: i32) -> (i32, i32, i32) {
    %c0_i32 = arith.constant 0 : i32
    %c0_i32_0 = arith.constant 0 : i32
    %c0_i32_1 = arith.constant 0 : i32
    %c0_i32_2 = arith.constant 0 : i32
    return %c0_i32, %c0_i32_0, %c0_i32_1 : i32, i32, i32
  }
  func.func @transform_10(%arg0: i32) -> (i32, i32, i32) {
    %c0_i32 = arith.constant 0 : i32
    %c0_i32_0 = arith.constant 0 : i32
    %c0_i32_1 = arith.constant 0 : i32
    %c0_i32_2 = arith.constant 0 : i32
    return %c0_i32, %c0_i32_0, %c0_i32_1 : i32, i32, i32
  }
  func.func @transform_11(%arg0: i32) -> (i32, i32, i32) {
    %c0_i32 = arith.constant 0 : i32
    %c0_i32_0 = arith.constant 0 : i32
    %c0_i32_1 = arith.constant 0 : i32
    %c0_i32_2 = arith.constant 0 : i32
    return %c0_i32, %c0_i32_0, %c0_i32_1 : i32, i32, i32
  }
  func.func @transform_12(%arg0: i32) -> (i32, i32, i32) {
    %c0_i32 = arith.constant 0 : i32
    %c0_i32_0 = arith.constant 0 : i32
    %c0_i32_1 = arith.constant 0 : i32
    %c0_i32_2 = arith.constant 0 : i32
    return %c0_i32, %c0_i32_0, %c0_i32_1 : i32, i32, i32
  }
  func.func @transform_13(%arg0: i32) -> (i32, i32, i32) {
    %c0_i32 = arith.constant 0 : i32
    %c0_i32_0 = arith.constant 0 : i32
    %c0_i32_1 = arith.constant 0 : i32
    return %arg0, %c0_i32, %c0_i32_0 : i32, i32, i32
  }
}

</mosaic_0001>

<llo_original>
// kernel: tpu_custom_call.1
$region0: #{tpu_custom_call.1}
  #allocation0 [shape = 'u32[]', space=smem, size = 0x4, offset = 0x4, fixed_abs, tag = 'smem constant byte address 0x4 - core index']
  #allocation1 [shape = 'u32[144,128]{1,0:T(1,128)}', space=vmem, size = 0x12000, scoped, tag = 'internal scratch']
  %s0 = inlined_call_operand.vmem [shape: f32[2,16,32], index: 0, kind: input, shape index: {}]
  %s1 = inlined_call_operand.vmem [shape: f32[2,16,32], index: 1, kind: input, shape index: {}]
  %s2 = inlined_call_operand.vmem [shape: f32[2,16,32], index: 2, kind: input, shape index: {}]
  %s3 = inlined_call_operand.vmem [shape: bf16[2,32,96], index: 3, kind: input, shape index: {}]
  %s4 = inlined_call_operand.vmem [shape: f32[2,1,96], index: 4, kind: input, shape index: {}]
  %s5 = inlined_call_operand.vmem [shape: bf16[2,32,32], index: 5, kind: input, shape index: {}]
  %s6 = inlined_call_operand.vmem [shape: f32[2,1,32], index: 6, kind: input, shape index: {}]
  %s7 = inlined_call_operand.vmem [shape: f32[2,1,32], index: 7, kind: input, shape index: {}]
  %s8 = inlined_call_operand.vmem [shape: f32[2,1,32], index: 8, kind: input, shape index: {}]
  %s9 = inlined_call_operand.vmem [shape: bf16[2,96,64], index: 9, kind: input, shape index: {}]
  %s10 = inlined_call_operand.vmem [shape: f32[2,1,64], index: 10, kind: input, shape index: {}]
  %s11 = inlined_call_operand.vmem [shape: bf16[2,192,32], index: 11, kind: input, shape index: {}]
  %s12 = inlined_call_operand.vmem [shape: f32[2,1,32], index: 12, kind: input, shape index: {}]
  %s13 = inlined_call_operand.hbm [shape: f32[2,16,32], index: 13, kind: output, shape index: {}]
  %s14 = sld [smem:[#allocation0]]
  $region85: #{tpu_custom_call.1} parent=0
    _
  %s16 = ssub.s32 1, %s14
  %s17 = scalar_select 0, %s16, %s14
  $region1: #{tpu_custom_call.1} parent=0
    #allocation2 [shape = 'u8[16384]{0}', space=vmem, size = 0x4000, scoped, tag = 'output window, operand 0']
    #allocation3 [shape = 's32[2]{0}', space=sflag, size = 0x8, scoped, tag = 'scoped memory for tpu_custom_call.1']
    %18 = vsyncpa [#allocation3], 0
    %s19 = scalar_lea.sflag [#allocation3], 1
    %20 = vsyncpa %s19, 0
    loop: start=0, step=1, limit=4
    $region2: #{tpu_custom_call.1} parent=1 // loop_pre_header
      _
    $region3: #{tpu_custom_call.1} parent=1 // loop_header
      %s22 = sphi 0, %s26
      %p23 = scmp.ge.s32.totalorder %s22, 4
      %s32 = sphi 0, %s34
      %s35 = sphi 0, %s32
      %s36 = sphi 0, %s35
      %s52 = sphi 0, %s36
      %s58 = sphi 0, %s60
      %s61 = sphi 0, %s58
      %s62 = sphi 0, %s61
      %s78 = sphi 0, %s62
      %s84 = sphi 0, %s86
      %s87 = sphi 0, %s84
      %s88 = sphi 0, %s87
      %s104 = sphi 0, %s88
      %s108 = sphi 0, %s108
      %s110 = sphi 0, %s108
      %s111 = sphi 0, %s110
      %s125 = sphi 0, %s111
      %s129 = sphi 0, %s129
      %s131 = sphi 0, %s129
      %s132 = sphi 0, %s131
      %s146 = sphi 0, %s132
      %s150 = sphi 0, %s150
      %s152 = sphi 0, %s150
      %s153 = sphi 0, %s152
      %s167 = sphi 0, %s153
      %s171 = sphi 0, %s171
      %s173 = sphi 0, %s171
      %s174 = sphi 0, %s173
      %s188 = sphi 0, %s174
      %s192 = sphi 0, %s192
      %s194 = sphi 0, %s192
      %s195 = sphi 0, %s194
      %s209 = sphi 0, %s195
      %s213 = sphi 0, %s213
      %s215 = sphi 0, %s213
      %s216 = sphi 0, %s215
      %s230 = sphi 0, %s216
      %s234 = sphi 0, %s234
      %s236 = sphi 0, %s234
      %s237 = sphi 0, %s236
      %s251 = sphi 0, %s237
      %s255 = sphi 0, %s255
      %s257 = sphi 0, %s255
      %s258 = sphi 0, %s257
      %s272 = sphi 0, %s258
      %s276 = sphi 0, %s276
      %s278 = sphi 0, %s276
      %s279 = sphi 0, %s278
      %s293 = sphi 0, %s279
      %s297 = sphi 0, %s297
      %s299 = sphi 0, %s297
      %s300 = sphi 0, %s299
      %s314 = sphi 0, %s300
      %s320 = sphi 0, %s322
      %s323 = sphi 0, %s320
      %s324 = sphi 0, %s323
      %s340 = sphi 0, %s324
    $region4: #{tpu_custom_call.1} parent=1 // loop_header_branch
      %25 = sbr.rel (%p23) target = $region8
    $region5: #{tpu_custom_call.1} parent=1 // loop_body
      %s27 = ssub.s32 %s22, 1
      %s28 = ssub.s32 %s22, 2
      %s29 = sadd.s32 %s22, 1
      %s30 = ssub.s32 %s22, %s29
      %p31 = scmp.eq.s32.totalorder %s30, 0
      %s33 = sadd.s32 %s32, 1
      %s34 = scalar_select %p31, %s32, %s33
      %p37 = pneg %p31
      %p38 = scmp.eq.s32.totalorder %s22, 1
      %p39 = por %p37, %p38
      %p40 = scmp.ne.s32.totalorder %s32, %s35
      %p41 = scmp.eq.s32.totalorder %s22, 0
      %p42 = por %p40, %p41
      %p43 = scmp.ne.s32.totalorder %s32, %s35
      %p44 = scmp.eq.s32.totalorder %s27, 1
      %p45 = por %p43, %p44
      %p46 = scmp.ne.s32.totalorder %s35, %s36
      %p47 = scmp.eq.s32.totalorder %s27, 0
      %p48 = por %p46, %p47
      %p49 = scmp.ne.s32.totalorder %s35, %s36
      %p50 = scmp.eq.s32.totalorder %s28, 1
      %p51 = por %p49, %p50
      %p53 = scmp.ne.s32.totalorder %s36, %s52
      %p54 = scmp.eq.s32.totalorder %s28, 0
      %p55 = por %p53, %p54
      %s56 = ssub.s32 %s22, %s29
      %p57 = scmp.eq.s32.totalorder %s56, 0
      %s59 = sadd.s32 %s58, 1
      %s60 = scalar_select %p57, %s58, %s59
      %p63 = pneg %p57
      %p64 = scmp.eq.s32.totalorder %s22, 1
      %p65 = por %p63, %p64
      %p66 = scmp.ne.s32.totalorder %s58, %s61
      %p67 = scmp.eq.s32.totalorder %s22, 0
      %p68 = por %p66, %p67
      %p69 = scmp.ne.s32.totalorder %s58, %s61
      %p70 = scmp.eq.s32.totalorder %s27, 1
      %p71 = por %p69, %p70
      %p72 = scmp.ne.s32.totalorder %s61, %s62
      %p73 = scmp.eq.s32.totalorder %s27, 0
      %p74 = por %p72, %p73
      %p75 = scmp.ne.s32.totalorder %s61, %s62
      %p76 = scmp.eq.s32.totalorder %s28, 1
      %p77 = por %p75, %p76
      %p79 = scmp.ne.s32.totalorder %s62, %s78
      %p80 = scmp.eq.s32.totalorder %s28, 0
      %p81 = por %p79, %p80
      %s82 = ssub.s32 %s22, %s29
      %p83 = scmp.eq.s32.totalorder %s82, 0
      %s85 = sadd.s32 %s84, 1
      %s86 = scalar_select %p83, %s84, %s85
      %p89 = pneg %p83
      %p90 = scmp.eq.s32.totalorder %s22, 1
      %p91 = por %p89, %p90
      %p92 = scmp.ne.s32.totalorder %s84, %s87
      %p93 = scmp.eq.s32.totalorder %s22, 0
      %p94 = por %p92, %p93
      %p95 = scmp.ne.s32.totalorder %s84, %s87
      %p96 = scmp.eq.s32.totalorder %s27, 1
      %p97 = por %p95, %p96
      %p98 = scmp.ne.s32.totalorder %s87, %s88
      %p99 = scmp.eq.s32.totalorder %s27, 0
      %p100 = por %p98, %p99
      %p101 = scmp.ne.s32.totalorder %s87, %s88
      %p102 = scmp.eq.s32.totalorder %s28, 1
      %p103 = por %p101, %p102
      %p105 = scmp.ne.s32.totalorder %s88, %s104
      %p106 = scmp.eq.s32.totalorder %s28, 0
      %p107 = por %p105, %p106
      %s109 = sadd.s32 %s108, 1
      %p112 = scmp.eq.s32.totalorder %s22, 1
      %p113 = scmp.ne.s32.totalorder %s108, %s110
      %p114 = scmp.eq.s32.totalorder %s22, 0
      %p115 = por %p113, %p114
      %p116 = scmp.ne.s32.totalorder %s108, %s110
      %p117 = scmp.eq.s32.totalorder %s27, 1
      %p118 = por %p116, %p117
      %p119 = scmp.ne.s32.totalorder %s110, %s111
      %p120 = scmp.eq.s32.totalorder %s27, 0
      %p121 = por %p119, %p120
      %p122 = scmp.ne.s32.totalorder %s110, %s111
      %p123 = scmp.eq.s32.totalorder %s28, 1
      %p124 = por %p122, %p123
      %p126 = scmp.ne.s32.totalorder %s111, %s125
      %p127 = scmp.eq.s32.totalorder %s28, 0
      %p128 = por %p126, %p127
      %s130 = sadd.s32 %s129, 1
      %p133 = scmp.eq.s32.totalorder %s22, 1
      %p134 = scmp.ne.s32.totalorder %s129, %s131
      %p135 = scmp.eq.s32.totalorder %s22, 0
      %p136 = por %p134, %p135
      %p137 = scmp.ne.s32.totalorder %s129, %s131
      %p138 = scmp.eq.s32.totalorder %s27, 1
      %p139 = por %p137, %p138
      %p140 = scmp.ne.s32.totalorder %s131, %s132
      %p141 = scmp.eq.s32.totalorder %s27, 0
      %p142 = por %p140, %p141
      %p143 = scmp.ne.s32.totalorder %s131, %s132
      %p144 = scmp.eq.s32.totalorder %s28, 1
      %p145 = por %p143, %p144
      %p147 = scmp.ne.s32.totalorder %s132, %s146
      %p148 = scmp.eq.s32.totalorder %s28, 0
      %p149 = por %p147, %p148
      %s151 = sadd.s32 %s150, 1
      %p154 = scmp.eq.s32.totalorder %s22, 1
      %p155 = scmp.ne.s32.totalorder %s150, %s152
      %p156 = scmp.eq.s32.totalorder %s22, 0
      %p157 = por %p155, %p156
      %p158 = scmp.ne.s32.totalorder %s150, %s152
      %p159 = scmp.eq.s32.totalorder %s27, 1
      %p160 = por %p158, %p159
      %p161 = scmp.ne.s32.totalorder %s152, %s153
      %p162 = scmp.eq.s32.totalorder %s27, 0
      %p163 = por %p161, %p162
      %p164 = scmp.ne.s32.totalorder %s152, %s153
      %p165 = scmp.eq.s32.totalorder %s28, 1
      %p166 = por %p164, %p165
      %p168 = scmp.ne.s32.totalorder %s153, %s167
      %p169 = scmp.eq.s32.totalorder %s28, 0
      %p170 = por %p168, %p169
      %s172 = sadd.s32 %s171, 1
      %p175 = scmp.eq.s32.totalorder %s22, 1
      %p176 = scmp.ne.s32.totalorder %s171, %s173
      %p177 = scmp.eq.s32.totalorder %s22, 0
      %p178 = por %p176, %p177
      %p179 = scmp.ne.s32.totalorder %s171, %s173
      %p180 = scmp.eq.s32.totalorder %s27, 1
      %p181 = por %p179, %p180
      %p182 = scmp.ne.s32.totalorder %s173, %s174
      %p183 = scmp.eq.s32.totalorder %s27, 0
      %p184 = por %p182, %p183
      %p185 = scmp.ne.s32.totalorder %s173, %s174
      %p186 = scmp.eq.s32.totalorder %s28, 1
      %p187 = por %p185, %p186
      %p189 = scmp.ne.s32.totalorder %s174, %s188
      %p190 = scmp.eq.s32.totalorder %s28, 0
      %p191 = por %p189, %p190
      %s193 = sadd.s32 %s192, 1
      %p196 = scmp.eq.s32.totalorder %s22, 1
      %p197 = scmp.ne.s32.totalorder %s192, %s194
      %p198 = scmp.eq.s32.totalorder %s22, 0
      %p199 = por %p197, %p198
      %p200 = scmp.ne.s32.totalorder %s192, %s194
      %p201 = scmp.eq.s32.totalorder %s27, 1
      %p202 = por %p200, %p201
      %p203 = scmp.ne.s32.totalorder %s194, %s195
      %p204 = scmp.eq.s32.totalorder %s27, 0
      %p205 = por %p203, %p204
      %p206 = scmp.ne.s32.totalorder %s194, %s195
      %p207 = scmp.eq.s32.totalorder %s28, 1
      %p208 = por %p206, %p207
      %p210 = scmp.ne.s32.totalorder %s195, %s209
      %p211 = scmp.eq.s32.totalorder %s28, 0
      %p212 = por %p210, %p211
      %s214 = sadd.s32 %s213, 1
      %p217 = scmp.eq.s32.totalorder %s22, 1
      %p218 = scmp.ne.s32.totalorder %s213, %s215
      %p219 = scmp.eq.s32.totalorder %s22, 0
      %p220 = por %p218, %p219
      %p221 = scmp.ne.s32.totalorder %s213, %s215
      %p222 = scmp.eq.s32.totalorder %s27, 1
      %p223 = por %p221, %p222
      %p224 = scmp.ne.s32.totalorder %s215, %s216
      %p225 = scmp.eq.s32.totalorder %s27, 0
      %p226 = por %p224, %p225
      %p227 = scmp.ne.s32.totalorder %s215, %s216
      %p228 = scmp.eq.s32.totalorder %s28, 1
      %p229 = por %p227, %p228
      %p231 = scmp.ne.s32.totalorder %s216, %s230
      %p232 = scmp.eq.s32.totalorder %s28, 0
      %p233 = por %p231, %p232
      %s235 = sadd.s32 %s234, 1
      %p238 = scmp.eq.s32.totalorder %s22, 1
      %p239 = scmp.ne.s32.totalorder %s234, %s236
      %p240 = scmp.eq.s32.totalorder %s22, 0
      %p241 = por %p239, %p240
      %p242 = scmp.ne.s32.totalorder %s234, %s236
      %p243 = scmp.eq.s32.totalorder %s27, 1
      %p244 = por %p242, %p243
      %p245 = scmp.ne.s32.totalorder %s236, %s237
      %p246 = scmp.eq.s32.totalorder %s27, 0
      %p247 = por %p245, %p246
      %p248 = scmp.ne.s32.totalorder %s236, %s237
      %p249 = scmp.eq.s32.totalorder %s28, 1
      %p250 = por %p248, %p249
      %p252 = scmp.ne.s32.totalorder %s237, %s251
      %p253 = scmp.eq.s32.totalorder %s28, 0
      %p254 = por %p252, %p253
      %s256 = sadd.s32 %s255, 1
      %p259 = scmp.eq.s32.totalorder %s22, 1
      %p260 = scmp.ne.s32.totalorder %s255, %s257
      %p261 = scmp.eq.s32.totalorder %s22, 0
      %p262 = por %p260, %p261
      %p263 = scmp.ne.s32.totalorder %s255, %s257
      %p264 = scmp.eq.s32.totalorder %s27, 1
      %p265 = por %p263, %p264
      %p266 = scmp.ne.s32.totalorder %s257, %s258
      %p267 = scmp.eq.s32.totalorder %s27, 0
      %p268 = por %p266, %p267
      %p269 = scmp.ne.s32.totalorder %s257, %s258
      %p270 = scmp.eq.s32.totalorder %s28, 1
      %p271 = por %p269, %p270
      %p273 = scmp.ne.s32.totalorder %s258, %s272
      %p274 = scmp.eq.s32.totalorder %s28, 0
      %p275 = por %p273, %p274
      %s277 = sadd.s32 %s276, 1
      %p280 = scmp.eq.s32.totalorder %s22, 1
      %p281 = scmp.ne.s32.totalorder %s276, %s278
      %p282 = scmp.eq.s32.totalorder %s22, 0
      %p283 = por %p281, %p282
      %p284 = scmp.ne.s32.totalorder %s276, %s278
      %p285 = scmp.eq.s32.totalorder %s27, 1
      %p286 = por %p284, %p285
      %p287 = scmp.ne.s32.totalorder %s278, %s279
      %p288 = scmp.eq.s32.totalorder %s27, 0
      %p289 = por %p287, %p288
      %p290 = scmp.ne.s32.totalorder %s278, %s279
      %p291 = scmp.eq.s32.totalorder %s28, 1
      %p292 = por %p290, %p291
      %p294 = scmp.ne.s32.totalorder %s279, %s293
      %p295 = scmp.eq.s32.totalorder %s28, 0
      %p296 = por %p294, %p295
      %s298 = sadd.s32 %s297, 1
      %p301 = scmp.eq.s32.totalorder %s22, 1
      %p302 = scmp.ne.s32.totalorder %s297, %s299
      %p303 = scmp.eq.s32.totalorder %s22, 0
      %p304 = por %p302, %p303
      %p305 = scmp.ne.s32.totalorder %s297, %s299
      %p306 = scmp.eq.s32.totalorder %s27, 1
      %p307 = por %p305, %p306
      %p308 = scmp.ne.s32.totalorder %s299, %s300
      %p309 = scmp.eq.s32.totalorder %s27, 0
      %p310 = por %p308, %p309
      %p311 = scmp.ne.s32.totalorder %s299, %s300
      %p312 = scmp.eq.s32.totalorder %s28, 1
      %p313 = por %p311, %p312
      %p315 = scmp.ne.s32.totalorder %s300, %s314
      %p316 = scmp.eq.s32.totalorder %s28, 0
      %p317 = por %p315, %p316
      %s318 = ssub.s32 %s22, %s29
      %p319 = scmp.eq.s32.totalorder %s318, 0
      %s321 = sadd.s32 %s320, 1
      %s322 = scalar_select %p319, %s320, %s321
      %p325 = pneg %p319
      %p326 = scmp.eq.s32.totalorder %s22, 1
      %p327 = por %p325, %p326
      %p328 = scmp.ne.s32.totalorder %s320, %s323
      %p329 = scmp.eq.s32.totalorder %s22, 0
      %p330 = por %p328, %p329
      %p331 = scmp.ne.s32.totalorder %s320, %s323
      %p332 = scmp.eq.s32.totalorder %s27, 1
      %p333 = por %p331, %p332
      %p334 = scmp.ne.s32.totalorder %s323, %s324
      %p335 = scmp.eq.s32.totalorder %s27, 0
      %p336 = por %p334, %p335
      %p337 = scmp.ne.s32.totalorder %s323, %s324
      %p338 = scmp.eq.s32.totalorder %s28, 1
      %p339 = por %p337, %p338
      %p341 = scmp.ne.s32.totalorder %s324, %s340
      %p342 = scmp.eq.s32.totalorder %s28, 0
      %p343 = por %p341, %p342
      %p344 = scmp.le.s32.totalorder 1, %s22
      %p345 = scmp.lt.s32.totalorder %s22, 3
      %p346 = pnand %p344, %p345
      %p347 = pneg %p346
      // Predicated region
      $region9: #{tpu_custom_call.1} parent=5 // pred_check
        _
      $region10: #{tpu_custom_call.1} parent=5 // pred_check_branch
        %349 = sbr.rel (%p346) target = $region12
      $region11: #{tpu_custom_call.1} parent=5 // pred_region
        %s350 = ssub.s32 %s22, 1
        // Predicated region
        $region13: #{tpu_custom_call.1} parent=11 // pred_check
          %p351 = pneg %p121
        $region14: #{tpu_custom_call.1} parent=11 // pred_check_branch
          %353 = sbr.rel (%p351) target = $region16
        $region15: #{tpu_custom_call.1} parent=11 // pred_region
          _
        $region16: #{tpu_custom_call.1} parent=11 // pred_fallthru
          _
        // Predicated region
        $region17: #{tpu_custom_call.1} parent=11 // pred_check
          %p354 = pneg %p142
        $region18: #{tpu_custom_call.1} parent=11 // pred_check_branch
          %356 = sbr.rel (%p354) target = $region20
        $region19: #{tpu_custom_call.1} parent=11 // pred_region
          _
        $region20: #{tpu_custom_call.1} parent=11 // pred_fallthru
          _
        // Predicated region
        $region21: #{tpu_custom_call.1} parent=11 // pred_check
          %p357 = pneg %p163
        $region22: #{tpu_custom_call.1} parent=11 // pred_check_branch
          %359 = sbr.rel (%p357) target = $region24
        $region23: #{tpu_custom_call.1} parent=11 // pred_region
          _
        $region24: #{tpu_custom_call.1} parent=11 // pred_fallthru
          _
        // Predicated region
        $region25: #{tpu_custom_call.1} parent=11 // pred_check
          %p360 = pneg %p184
        $region26: #{tpu_custom_call.1} parent=11 // pred_check_branch
          %362 = sbr.rel (%p360) target = $region28
        $region27: #{tpu_custom_call.1} parent=11 // pred_region
          _
        $region28: #{tpu_custom_call.1} parent=11 // pred_fallthru
          _
        // Predicated region
        $region29: #{tpu_custom_call.1} parent=11 // pred_check
          %p363 = pneg %p205
        $region30: #{tpu_custom_call.1} parent=11 // pred_check_branch
          %365 = sbr.rel (%p363) target = $region32
        $region31: #{tpu_custom_call.1} parent=11 // pred_region
          _
        $region32: #{tpu_custom_call.1} parent=11 // pred_fallthru
          _
        // Predicated region
        $region33: #{tpu_custom_call.1} parent=11 // pred_check
          %p366 = pneg %p226
        $region34: #{tpu_custom_call.1} parent=11 // pred_check_branch
          %368 = sbr.rel (%p366) target = $region36
        $region35: #{tpu_custom_call.1} parent=11 // pred_region
          _
        $region36: #{tpu_custom_call.1} parent=11 // pred_fallthru
          _
        // Predicated region
        $region37: #{tpu_custom_call.1} parent=11 // pred_check
          %p369 = pneg %p247
        $region38: #{tpu_custom_call.1} parent=11 // pred_check_branch
          %371 = sbr.rel (%p369) target = $region40
        $region39: #{tpu_custom_call.1} parent=11 // pred_region
          _
        $region40: #{tpu_custom_call.1} parent=11 // pred_fallthru
          _
        // Predicated region
        $region41: #{tpu_custom_call.1} parent=11 // pred_check
          %p372 = pneg %p268
        $region42: #{tpu_custom_call.1} parent=11 // pred_check_branch
          %374 = sbr.rel (%p372) target = $region44
        $region43: #{tpu_custom_call.1} parent=11 // pred_region
          _
        $region44: #{tpu_custom_call.1} parent=11 // pred_fallthru
          _
        // Predicated region
        $region45: #{tpu_custom_call.1} parent=11 // pred_check
          %p375 = pneg %p289
        $region46: #{tpu_custom_call.1} parent=11 // pred_check_branch
          %377 = sbr.rel (%p375) target = $region48
        $region47: #{tpu_custom_call.1} parent=11 // pred_region
          _
        $region48: #{tpu_custom_call.1} parent=11 // pred_fallthru
          _
        // Predicated region
        $region49: #{tpu_custom_call.1} parent=11 // pred_check
          %p378 = pneg %p310
        $region50: #{tpu_custom_call.1} parent=11 // pred_check_branch
          %380 = sbr.rel (%p378) target = $region52
        $region51: #{tpu_custom_call.1} parent=11 // pred_region
          _
        $region52: #{tpu_custom_call.1} parent=11 // pred_fallthru
          _
      $region12: #{tpu_custom_call.1} parent=5 // pred_fallthru
        _
      %p381 = scmp.lt.s32.totalorder %s22, 2
      // Predicated region
      $region53: #{tpu_custom_call.1} parent=5 // pred_check
        %p382 = pneg %p381
      $region54: #{tpu_custom_call.1} parent=5 // pred_check_branch
        %384 = sbr.rel (%p382) target = $region56
      $region55: #{tpu_custom_call.1} parent=5 // pred_region
        // Predicated region
        $region57: #{tpu_custom_call.1} parent=55 // pred_check
          %p385 = pneg %p42
        $region58: #{tpu_custom_call.1} parent=55 // pred_check_branch
          %387 = sbr.rel (%p385) target = $region60
        $region59: #{tpu_custom_call.1} parent=55 // pred_region
          %p388 = scmp.lt.s32.totalorder %s22, 1
          %s389 = scalar_select %p388, %s22, 1
          %s390 = smul.addr %s389, 2
          %s391 = smul.addr %s390, 8
          %s392 = scalar_lea.vmem %s0, %s391
        $region60: #{tpu_custom_call.1} parent=55 // pred_fallthru
          _
        // Predicated region
        $region61: #{tpu_custom_call.1} parent=55 // pred_check
          %p393 = pneg %p68
        $region62: #{tpu_custom_call.1} parent=55 // pred_check_branch
          %395 = sbr.rel (%p393) target = $region64
        $region63: #{tpu_custom_call.1} parent=55 // pred_region
          %p396 = scmp.lt.s32.totalorder %s22, 1
          %s397 = scalar_select %p396, %s22, 1
          %s398 = smul.addr %s397, 2
          %s399 = smul.addr %s398, 8
          %s400 = scalar_lea.vmem %s1, %s399
        $region64: #{tpu_custom_call.1} parent=55 // pred_fallthru
          _
        // Predicated region
        $region65: #{tpu_custom_call.1} parent=55 // pred_check
          %p401 = pneg %p94
        $region66: #{tpu_custom_call.1} parent=55 // pred_check_branch
          %403 = sbr.rel (%p401) target = $region68
        $region67: #{tpu_custom_call.1} parent=55 // pred_region
          %p404 = scmp.lt.s32.totalorder %s22, 1
          %s405 = scalar_select %p404, %s22, 1
          %s406 = smul.addr %s405, 2
          %s407 = smul.addr %s406, 8
          %s408 = scalar_lea.vmem %s2, %s407
        $region68: #{tpu_custom_call.1} parent=55 // pred_fallthru
          _
      $region56: #{tpu_custom_call.1} parent=5 // pred_fallthru
        _
      %p409 = scmp.le.s32.totalorder 1, %s22
      %p410 = scmp.lt.s32.totalorder %s22, 3
      %p411 = pnand %p409, %p410
      %p412 = pneg %p411
      // Predicated region
      $region69: #{tpu_custom_call.1} parent=5 // pred_check
        _
      $region70: #{tpu_custom_call.1} parent=5 // pred_check_branch
        %414 = sbr.rel (%p411) target = $region72
      $region71: #{tpu_custom_call.1} parent=5 // pred_region
        %s415 = ssub.s32 %s22, 1
        %p416 = scmp.lt.s32.totalorder %s27, 1
        %s417 = scalar_select %p416, %s27, 1
        %s418 = smul.addr %s417, 2
        %s419 = smul.addr %s418, 8
        %s420 = scalar_lea.vmem %s0, %s419
        %p421 = pneg %p48
        %p422 = pneg %p45
        %p423 = scmp.lt.s32.totalorder %s27, 1
        %s424 = scalar_select %p423, %s27, 1
        %s425 = smul.addr %s424, 2
        %s426 = smul.addr %s425, 8
        %s427 = scalar_lea.vmem %s1, %s426
        %p428 = pneg %p74
        %p429 = pneg %p71
        %p430 = scmp.lt.s32.totalorder %s27, 1
        %s431 = scalar_select %p430, %s27, 1
        %s432 = smul.addr %s431, 2
        %s433 = smul.addr %s432, 8
        %s434 = scalar_lea.vmem %s2, %s433
        %p435 = pneg %p100
        %p436 = pneg %p97
        %p437 = pneg %p121
        %p438 = pneg %p118
        %p439 = pneg %p142
        %p440 = pneg %p139
        %p441 = pneg %p163
        %p442 = pneg %p160
        %p443 = pneg %p184
        %p444 = pneg %p181
        %p445 = pneg %p205
        %p446 = pneg %p202
        %p447 = pneg %p226
        %p448 = pneg %p223
        %p449 = pneg %p247
        %p450 = pneg %p244
        %p451 = pneg %p268
        %p452 = pneg %p265
        %p453 = pneg %p289
        %p454 = pneg %p286
        %p455 = pneg %p310
        %p456 = pneg %p307
        %p457 = pneg %p336
        %p458 = pneg %p333
        %s459 = sand.u32 %s323, 1
        %s460 = scalar_lea.sflag [#allocation3], %s459
        %s461 = sand.u32 %s323, 1
        %s462 = smul.addr %s461, 16
        %s463 = scalar_lea.vmem [#allocation2], %s462
        %p464 = scmp.lt.s32.totalorder %s27, 1
        %s465 = scalar_select %p464, %s27, 1
        %s466 = smul.addr %s465, 2
        %s467 = smul.addr %s466, 8
        %s468 = scalar_lea.vmem %s0, %s467
        %p469 = scmp.lt.s32.totalorder %s27, 1
        %s470 = scalar_select %p469, %s27, 1
        %s471 = smul.addr %s470, 2
        %s472 = smul.addr %s471, 8
        %s473 = scalar_lea.vmem %s1, %s472
        %p474 = scmp.lt.s32.totalorder %s27, 1
        %s475 = scalar_select %p474, %s27, 1
        %s476 = smul.addr %s475, 2
        %s477 = smul.addr %s476, 8
        %s478 = scalar_lea.vmem %s2, %s477
        %v480 = vld [vmem:[%s468] sm:$0xff]
        %v481 = vld [vmem:[%s468 + $0x8] sm:$0xff]
        %v482 = vld [vmem:[%s473] sm:$0xff]
        %v483 = vld [vmem:[%s473 + $0x8] sm:$0xff]
        %v484 = vld [vmem:[%s478] sm:$0xff]
        %v485 = vld [vmem:[%s478 + $0x8] sm:$0xff]
        %v486 = vld [vmem:[%s3] sm:$0xf]
        %v487 = vld [vmem:[%s3 + $0x4] sm:$0xf]
        %v488 = vld [vmem:[%s3 + $0x8] sm:$0xf]
        %v489 = vld [vmem:[%s3 + $0xc] sm:$0xf]
        %v490 = vld [vmem:[%s4] sm:$0x1]
        %v491 = vld [vmem:[%s5] sm:$0xf]
        %v492 = vld [vmem:[%s5 + $0x4] sm:$0xf]
        %v493 = vld [vmem:[%s5 + $0x8] sm:$0xf]
        %v494 = vld [vmem:[%s5 + $0xc] sm:$0xf]
        %v495 = vld [vmem:[%s6] sm:$0x1]
        %v496 = vld [vmem:[%s7] sm:$0x1]
        %v497 = vld [vmem:[%s8] sm:$0x1]
        %v498 = vld [vmem:[%s9] sm:$0xf]
        %v499 = vld [vmem:[%s9 + $0x4] sm:$0xf]
        %v500 = vld [vmem:[%s9 + $0x8] sm:$0xf]
        %v501 = vld [vmem:[%s9 + $0xc] sm:$0xf]
        %v502 = vld [vmem:[%s9 + $0x10] sm:$0xf]
        %v503 = vld [vmem:[%s9 + $0x14] sm:$0xf]
        %v504 = vld [vmem:[%s9 + $0x18] sm:$0xf]
        %v505 = vld [vmem:[%s9 + $0x1c] sm:$0xf]
        %v506 = vld [vmem:[%s9 + $0x20] sm:$0xf]
        %v507 = vld [vmem:[%s9 + $0x24] sm:$0xf]
        %v508 = vld [vmem:[%s9 + $0x28] sm:$0xf]
        %v509 = vld [vmem:[%s9 + $0x2c] sm:$0xf]
        %v510 = vld [vmem:[%s10] sm:$0x1]
        %v511 = vld [vmem:[%s11] sm:$0xf]
        %v512 = vld [vmem:[%s11 + $0x4] sm:$0xf]
        %v513 = vld [vmem:[%s11 + $0x8] sm:$0xf]
        %v514 = vld [vmem:[%s11 + $0xc] sm:$0xf]
        %v515 = vld [vmem:[%s11 + $0x10] sm:$0xf]
        %v516 = vld [vmem:[%s11 + $0x14] sm:$0xf]
        %v517 = vld [vmem:[%s11 + $0x18] sm:$0xf]
        %v518 = vld [vmem:[%s11 + $0x1c] sm:$0xf]
        %v519 = vld [vmem:[%s11 + $0x20] sm:$0xf]
        %v520 = vld [vmem:[%s11 + $0x24] sm:$0xf]
        %v521 = vld [vmem:[%s11 + $0x28] sm:$0xf]
        %v522 = vld [vmem:[%s11 + $0x2c] sm:$0xf]
        %v523 = vld [vmem:[%s11 + $0x30] sm:$0xf]
        %v524 = vld [vmem:[%s11 + $0x34] sm:$0xf]
        %v525 = vld [vmem:[%s11 + $0x38] sm:$0xf]
        %v526 = vld [vmem:[%s11 + $0x3c] sm:$0xf]
        %v527 = vld [vmem:[%s11 + $0x40] sm:$0xf]
        %v528 = vld [vmem:[%s11 + $0x44] sm:$0xf]
        %v529 = vld [vmem:[%s11 + $0x48] sm:$0xf]
        %v530 = vld [vmem:[%s11 + $0x4c] sm:$0xf]
        %v531 = vld [vmem:[%s11 + $0x50] sm:$0xf]
        %v532 = vld [vmem:[%s11 + $0x54] sm:$0xf]
        %v533 = vld [vmem:[%s11 + $0x58] sm:$0xf]
        %v534 = vld [vmem:[%s11 + $0x5c] sm:$0xf]
        %v535 = vld [vmem:[%s12] sm:$0x1]
        %v536 = vpack.c.bf16 %v481, %v480
        %v538 = vlaneseq
        %v539 = vshrl.u32 %v538, 7
        %v540 = vsub.s32 0, %v539
        %v541 = vrot.slane %v490, %v540
        %v547 = vunpack.c.l.b16 %v486
        %v548 = vunpack.c.l.b16 %v487
        %v549 = vunpack.c.l.b16 %v488
        %v550 = vunpack.c.l.b16 %v489
        %v551 = vpack.c.b16 %v548, %v547
        %v552 = vpack.c.b16 %v550, %v549
        %vm555 = vcmask 261120
        %v557 = vsel %vm555, %v536, 0
        %559 = vmatprep.subr.bf16.mxu0 0
        %560 = vmatpush1.bf16.msra.mxu0 %v551
        %561 = vmatprep.subr.bf16.mxu0 0
        %562 = vmatpush1.bf16.msra.mxu0 %v552
        %563 = vmatprep.subr.bf16.mxu0 0
        %564 = vmatpush1.bf16.msra.mxu0 0
        %565 = vmatprep.subr.bf16.mxu0 0
        %566 = vmatpush1.bf16.msra.mxu0 0
        %567 = vmatprep.subr.bf16.mxu0 0
        %568 = vmatpush1.bf16.msra.mxu0 0
        %569 = vmatprep.subr.bf16.mxu0 0
        %570 = vmatpush1.bf16.msra.mxu0 0
        %571 = vmatprep.subr.bf16.mxu0 0
        %572 = vmatpush1.bf16.msra.mxu0 0
        %573 = vmatprep.subr.bf16.mxu0 0
        %574 = vmatpush1.bf16.msra.mxu0 0
        %575 = vmatprep.subr.bf16.mxu0 0
        %576 = vmatpush1.bf16.msra.mxu0 0
        %577 = vmatprep.subr.bf16.mxu0 0
        %578 = vmatpush1.bf16.msra.mxu0 0
        %579 = vmatprep.subr.bf16.mxu0 0
        %580 = vmatpush1.bf16.msra.mxu0 0
        %581 = vmatprep.subr.bf16.mxu0 0
        %582 = vmatpush1.bf16.msra.mxu0 0
        %583 = vmatprep.subr.bf16.mxu0 0
        %584 = vmatpush1.bf16.msra.mxu0 0
        %585 = vmatprep.subr.bf16.mxu0 0
        %586 = vmatpush1.bf16.msra.mxu0 0
        %587 = vmatprep.subr.bf16.mxu0 0
        %588 = vmatpush1.bf16.msra.mxu0 0
        %589 = vmatprep.subr.bf16.mxu0 0
        %590 = vmatpush1.bf16.msra.mxu0 0
        %591 = vmatprep.mubr.bf16.mxu0 0
        %592 = vmatmul.mubr.bf16.gmra.mrb[0].mxu0 %v557
        %v593 = vpop.f32.mrb[0].mxu0
        %v594 = vadd.f32 %v541, %v593
        %v595 = vpop.f32.mrb[0].mxu0
        %v596 = vpop.f32.mrb[0].mxu0
        %v597 = vadd.f32 %v541, %v596
        %v598 = vpop.f32.mrb[0].mxu0
        %599 = vdwg.mxu0
        %v600 = vpack.c.bf16 %v597, %v594
        %602 = vrot.lane.b32.xlu0 %v600, 96
        %v603 = vpop.permute.xlu0 %602
        %vm604 = vcmask 64512
        %v606 = vsel %vm604, %v600, 0
        %v609 = vsel %vm604, %v603, 0
        %611 = vmatprep.subr.bf16.mxu0 0
        %612 = vmatpush1.bf16.xpose.msra.mxu0 %v609
        %613 = vmatprep.subr.bf16.mxu0 0
        %614 = vmatpush1.bf16.xpose.msra.mxu0 0
        %615 = vmatprep.subr.bf16.mxu0 0
        %616 = vmatpush1.bf16.xpose.msra.mxu0 0
        %617 = vmatprep.subr.bf16.mxu0 0
        %618 = vmatpush1.bf16.xpose.msra.mxu0 0
        %619 = vmatprep.subr.bf16.mxu0 0
        %620 = vmatpush1.bf16.xpose.msra.mxu0 0
        %621 = vmatprep.subr.bf16.mxu0 0
        %622 = vmatpush1.bf16.xpose.msra.mxu0 0
        %623 = vmatprep.subr.bf16.mxu0 0
        %624 = vmatpush1.bf16.xpose.msra.mxu0 0
        %625 = vmatprep.subr.bf16.mxu0 0
        %626 = vmatpush1.bf16.xpose.msra.mxu0 0
        %627 = vmatprep.subr.bf16.mxu0 0
        %628 = vmatpush1.bf16.xpose.msra.mxu0 0
        %629 = vmatprep.subr.bf16.mxu0 0
        %630 = vmatpush1.bf16.xpose.msra.mxu0 0
        %631 = vmatprep.subr.bf16.mxu0 0
        %632 = vmatpush1.bf16.xpose.msra.mxu0 0
        %633 = vmatprep.subr.bf16.mxu0 0
        %634 = vmatpush1.bf16.xpose.msra.mxu0 0
        %635 = vmatprep.subr.bf16.mxu0 0
        %636 = vmatpush1.bf16.xpose.msra.mxu0 0
        %637 = vmatprep.subr.bf16.mxu0 0
        %638 = vmatpush1.bf16.xpose.msra.mxu0 0
        %639 = vmatprep.subr.bf16.mxu0 0
        %640 = vmatpush1.bf16.xpose.msra.mxu0 0
        %641 = vmatprep.subr.bf16.mxu0 0
        %642 = vmatpush1.bf16.xpose.msra.mxu0 0
        %643 = vmatprep.mubr.bf16.mxu0 0
        %644 = vmatmul.mubr.bf16.gmra.mrb[0].mxu0 %v606
        %v645 = vpop.f32.mrb[0].mxu0
        %v646 = vadd.f32 0.0, %v645
        %v647 = vpop.f32.mrb[0].mxu0
        %v648 = vpop.f32.mrb[0].mxu0
        %v649 = vadd.f32 0.0, %v648
        %v650 = vpop.f32.mrb[0].mxu0
        %651 = vdwg.mxu0
        %v652 = vmul.f32 %v646, 0.35355338
        %v653 = vmul.f32 %v649, 0.35355338
        %vm654 = vcmask 130048
        %v655 = vsel %vm654, %v652, -inf
        %656 = vmax.xlane.f32.xlu0 %v655
        %v657 = vpop.xlane.xlu0 %656
        %v658 = vsel %vm654, %v653, -inf
        %659 = vmax.xlane.f32.xlu0 %v658
        %v660 = vpop.xlane.xlu0 %659
        %v661 = vsub.f32 %v652, %v657
        %v662 = vsub.f32 %v653, %v660
        %v663 = vmul.f32 %v661, 1.442695
        %v664 = vpow.pop %v663
        %v665 = vmul.f32 %v662, 1.442695
        %v666 = vpow.pop %v665
        %v667 = vsel %vm654, %v664, 0.0
        %668 = vadd.xlane.f32.xlu0 %v667
        %v669 = vpop.xlane.xlu0 %668
        %v670 = vsel %vm654, %v666, 0.0
        %671 = vadd.xlane.f32.xlu0 %v670
        %v672 = vpop.xlane.xlu0 %671
        %v673 = vrcp.pop %v669
        %v674 = vrcp.pop %v672
        %v675 = vmul.f32 %v664, %v673
        %v676 = vmul.f32 %v666, %v674
        %v677 = vpack.c.bf16 %v676, %v675
        %678 = vrot.lane.b32.xlu0 %v600, 64
        %v679 = vpop.permute.xlu0 %678
        %v682 = vsel %vm654, %v677, 0
        %684 = vmatprep.subr.bf16.mxu0 0
        %685 = vmatpush1.bf16.msra.mxu0 %v679
        %686 = vmatprep.subr.bf16.mxu0 0
        %687 = vmatpush1.bf16.msra.mxu0 0
        %688 = vmatprep.subr.bf16.mxu0 0
        %689 = vmatpush1.bf16.msra.mxu0 0
        %690 = vmatprep.subr.bf16.mxu0 0
        %691 = vmatpush1.bf16.msra.mxu0 0
        %692 = vmatprep.subr.bf16.mxu0 0
        %693 = vmatpush1.bf16.msra.mxu0 0
        %694 = vmatprep.subr.bf16.mxu0 0
        %695 = vmatpush1.bf16.msra.mxu0 0
        %696 = vmatprep.subr.bf16.mxu0 0
        %697 = vmatpush1.bf16.msra.mxu0 0
        %698 = vmatprep.subr.bf16.mxu0 0
        %699 = vmatpush1.bf16.msra.mxu0 0
        %700 = vmatprep.subr.bf16.mxu0 0
        %701 = vmatpush1.bf16.msra.mxu0 0
        %702 = vmatprep.subr.bf16.mxu0 0
        %703 = vmatpush1.bf16.msra.mxu0 0
        %704 = vmatprep.subr.bf16.mxu0 0
        %705 = vmatpush1.bf16.msra.mxu0 0
        %706 = vmatprep.subr.bf16.mxu0 0
        %707 = vmatpush1.bf16.msra.mxu0 0
        %708 = vmatprep.subr.bf16.mxu0 0
        %709 = vmatpush1.bf16.msra.mxu0 0
        %710 = vmatprep.subr.bf16.mxu0 0
        %711 = vmatpush1.bf16.msra.mxu0 0
        %712 = vmatprep.subr.bf16.mxu0 0
        %713 = vmatpush1.bf16.msra.mxu0 0
        %714 = vmatprep.subr.bf16.mxu0 0
        %715 = vmatpush1.bf16.msra.mxu0 0
        %716 = vmatprep.mubr.bf16.mxu0 0
        %717 = vmatmul.mubr.bf16.gmra.mrb[0].mxu0 %v682
        %v718 = vpop.f32.mrb[0].mxu0
        %v719 = vadd.f32 0.0, %v718
        %v720 = vpop.f32.mrb[0].mxu0
        %v721 = vpop.f32.mrb[0].mxu0
        %v722 = vadd.f32 0.0, %v721
        %v723 = vpop.f32.mrb[0].mxu0
        %724 = vdwg.mxu0
        %725 = vrot.lane.b32.xlu0 %v600, 120
        %v726 = vpop.permute.xlu0 %725
        %727 = vrot.lane.b32.xlu0 %v600, 88
        %v728 = vpop.permute.xlu0 %727
        %v730 = vsel %vm604, %v726, 0
        %v733 = vsel %vm604, %v728, 0
        %735 = vmatprep.subr.bf16.mxu0 0
        %736 = vmatpush1.bf16.xpose.msra.mxu0 %v733
        %737 = vmatprep.subr.bf16.mxu0 0
        %738 = vmatpush1.bf16.xpose.msra.mxu0 0
        %739 = vmatprep.subr.bf16.mxu0 0
        %740 = vmatpush1.bf16.xpose.msra.mxu0 0
        %741 = vmatprep.subr.bf16.mxu0 0
        %742 = vmatpush1.bf16.xpose.msra.mxu0 0
        %743 = vmatprep.subr.bf16.mxu0 0
        %744 = vmatpush1.bf16.xpose.msra.mxu0 0
        %745 = vmatprep.subr.bf16.mxu0 0
        %746 = vmatpush1.bf16.xpose.msra.mxu0 0
        %747 = vmatprep.subr.bf16.mxu0 0
        %748 = vmatpush1.bf16.xpose.msra.mxu0 0
        %749 = vmatprep.subr.bf16.mxu0 0
        %750 = vmatpush1.bf16.xpose.msra.mxu0 0
        %751 = vmatprep.subr.bf16.mxu0 0
        %752 = vmatpush1.bf16.xpose.msra.mxu0 0
        %753 = vmatprep.subr.bf16.mxu0 0
        %754 = vmatpush1.bf16.xpose.msra.mxu0 0
        %755 = vmatprep.subr.bf16.mxu0 0
        %756 = vmatpush1.bf16.xpose.msra.mxu0 0
        %757 = vmatprep.subr.bf16.mxu0 0
        %758 = vmatpush1.bf16.xpose.msra.mxu0 0
        %759 = vmatprep.subr.bf16.mxu0 0
        %760 = vmatpush1.bf16.xpose.msra.mxu0 0
        %761 = vmatprep.subr.bf16.mxu0 0
        %762 = vmatpush1.bf16.xpose.msra.mxu0 0
        %763 = vmatprep.subr.bf16.mxu0 0
        %764 = vmatpush1.bf16.xpose.msra.mxu0 0
        %765 = vmatprep.subr.bf16.mxu0 0
        %766 = vmatpush1.bf16.xpose.msra.mxu0 0
        %767 = vmatprep.mubr.bf16.mxu0 0
        %768 = vmatmul.mubr.bf16.gmra.mrb[0].mxu0 %v730
        %v769 = vpop.f32.mrb[0].mxu0
        %v770 = vadd.f32 0.0, %v769
        %v771 = vpop.f32.mrb[0].mxu0
        %v772 = vpop.f32.mrb[0].mxu0
        %v773 = vadd.f32 0.0, %v772
        %v774 = vpop.f32.mrb[0].mxu0
        %775 = vdwg.mxu0
        %v776 = vmul.f32 %v770, 0.35355338
        %v777 = vmul.f32 %v773, 0.35355338
        %v778 = vsel %vm654, %v776, -inf
        %779 = vmax.xlane.f32.xlu0 %v778
        %v780 = vpop.xlane.xlu0 %779
        %v781 = vsel %vm654, %v777, -inf
        %782 = vmax.xlane.f32.xlu0 %v781
        %v783 = vpop.xlane.xlu0 %782
        %v784 = vsub.f32 %v776, %v780
        %v785 = vsub.f32 %v777, %v783
        %v786 = vmul.f32 %v784, 1.442695
        %v787 = vpow.pop %v786
        %v788 = vmul.f32 %v785, 1.442695
        %v789 = vpow.pop %v788
        %v790 = vsel %vm654, %v787, 0.0
        %791 = vadd.xlane.f32.xlu0 %v790
        %v792 = vpop.xlane.xlu0 %791
        %v793 = vsel %vm654, %v789, 0.0
        %794 = vadd.xlane.f32.xlu0 %v793
        %v795 = vpop.xlane.xlu0 %794
        %v796 = vrcp.pop %v792
        %v797 = vrcp.pop %v795
        %v798 = vmul.f32 %v787, %v796
        %v799 = vmul.f32 %v789, %v797
        %v800 = vpack.c.bf16 %v799, %v798
        %801 = vrot.lane.b32.xlu0 %v600, 56
        %v802 = vpop.permute.xlu0 %801
        %v805 = vsel %vm654, %v800, 0
        %807 = vmatprep.subr.bf16.mxu0 0
        %808 = vmatpush1.bf16.msra.mxu0 %v802
        %809 = vmatprep.subr.bf16.mxu0 0
        %810 = vmatpush1.bf16.msra.mxu0 0
        %811 = vmatprep.subr.bf16.mxu0 0
        %812 = vmatpush1.bf16.msra.mxu0 0
        %813 = vmatprep.subr.bf16.mxu0 0
        %814 = vmatpush1.bf16.msra.mxu0 0
        %815 = vmatprep.subr.bf16.mxu0 0
        %816 = vmatpush1.bf16.msra.mxu0 0
        %817 = vmatprep.subr.bf16.mxu0 0
        %818 = vmatpush1.bf16.msra.mxu0 0
        %819 = vmatprep.subr.bf16.mxu0 0
        %820 = vmatpush1.bf16.msra.mxu0 0
        %821 = vmatprep.subr.bf16.mxu0 0
        %822 = vmatpush1.bf16.msra.mxu0 0
        %823 = vmatprep.subr.bf16.mxu0 0
        %824 = vmatpush1.bf16.msra.mxu0 0
        %825 = vmatprep.subr.bf16.mxu0 0
        %826 = vmatpush1.bf16.msra.mxu0 0
        %827 = vmatprep.subr.bf16.mxu0 0
        %828 = vmatpush1.bf16.msra.mxu0 0
        %829 = vmatprep.subr.bf16.mxu0 0
        %830 = vmatpush1.bf16.msra.mxu0 0
        %831 = vmatprep.subr.bf16.mxu0 0
        %832 = vmatpush1.bf16.msra.mxu0 0
        %833 = vmatprep.subr.bf16.mxu0 0
        %834 = vmatpush1.bf16.msra.mxu0 0
        %835 = vmatprep.subr.bf16.mxu0 0
        %836 = vmatpush1.bf16.msra.mxu0 0
        %837 = vmatprep.subr.bf16.mxu0 0
        %838 = vmatpush1.bf16.msra.mxu0 0
        %839 = vmatprep.mubr.bf16.mxu0 0
        %840 = vmatmul.mubr.bf16.gmra.mrb[0].mxu0 %v805
        %v841 = vpop.f32.mrb[0].mxu0
        %v842 = vadd.f32 0.0, %v841
        %v843 = vpop.f32.mrb[0].mxu0
        %v844 = vpop.f32.mrb[0].mxu0
        %v845 = vadd.f32 0.0, %v844
        %v846 = vpop.f32.mrb[0].mxu0
        %847 = vdwg.mxu0
        %848 = vrot.lane.b32.xlu0 %v600, 112
        %v849 = vpop.permute.xlu0 %848
        %850 = vrot.lane.b32.xlu0 %v600, 80
        %v851 = vpop.permute.xlu0 %850
        %v853 = vsel %vm604, %v849, 0
        %v856 = vsel %vm604, %v851, 0
        %858 = vmatprep.subr.bf16.mxu0 0
        %859 = vmatpush1.bf16.xpose.msra.mxu0 %v856
        %860 = vmatprep.subr.bf16.mxu0 0
        %861 = vmatpush1.bf16.xpose.msra.mxu0 0
        %862 = vmatprep.subr.bf16.mxu0 0
        %863 = vmatpush1.bf16.xpose.msra.mxu0 0
        %864 = vmatprep.subr.bf16.mxu0 0
        %865 = vmatpush1.bf16.xpose.msra.mxu0 0
        %866 = vmatprep.subr.bf16.mxu0 0
        %867 = vmatpush1.bf16.xpose.msra.mxu0 0
        %868 = vmatprep.subr.bf16.mxu0 0
        %869 = vmatpush1.bf16.xpose.msra.mxu0 0
        %870 = vmatprep.subr.bf16.mxu0 0
        %871 = vmatpush1.bf16.xpose.msra.mxu0 0
        %872 = vmatprep.subr.bf16.mxu0 0
        %873 = vmatpush1.bf16.xpose.msra.mxu0 0
        %874 = vmatprep.subr.bf16.mxu0 0
        %875 = vmatpush1.bf16.xpose.msra.mxu0 0
        %876 = vmatprep.subr.bf16.mxu0 0
        %877 = vmatpush1.bf16.xpose.msra.mxu0 0
        %878 = vmatprep.subr.bf16.mxu0 0
        %879 = vmatpush1.bf16.xpose.msra.mxu0 0
        %880 = vmatprep.subr.bf16.mxu0 0
        %881 = vmatpush1.bf16.xpose.msra.mxu0 0
        %882 = vmatprep.subr.bf16.mxu0 0
        %883 = vmatpush1.bf16.xpose.msra.mxu0 0
        %884 = vmatprep.subr.bf16.mxu0 0
        %885 = vmatpush1.bf16.xpose.msra.mxu0 0
        %886 = vmatprep.subr.bf16.mxu0 0
        %887 = vmatpush1.bf16.xpose.msra.mxu0 0
        %888 = vmatprep.subr.bf16.mxu0 0
        %889 = vmatpush1.bf16.xpose.msra.mxu0 0
        %890 = vmatprep.mubr.bf16.mxu0 0
        %891 = vmatmul.mubr.bf16.gmra.mrb[0].mxu0 %v853
        %v892 = vpop.f32.mrb[0].mxu0
        %v893 = vadd.f32 0.0, %v892
        %v894 = vpop.f32.mrb[0].mxu0
        %v895 = vpop.f32.mrb[0].mxu0
        %v896 = vadd.f32 0.0, %v895
        %v897 = vpop.f32.mrb[0].mxu0
        %898 = vdwg.mxu0
        %v899 = vmul.f32 %v893, 0.35355338
        %v900 = vmul.f32 %v896, 0.35355338
        %v901 = vsel %vm654, %v899, -inf
        %902 = vmax.xlane.f32.xlu0 %v901
        %v903 = vpop.xlane.xlu0 %902
        %v904 = vsel %vm654, %v900, -inf
        %905 = vmax.xlane.f32.xlu0 %v904
        %v906 = vpop.xlane.xlu0 %905
        %v907 = vsub.f32 %v899, %v903
        %v908 = vsub.f32 %v900, %v906
        %v909 = vmul.f32 %v907, 1.442695
        %v910 = vpow.pop %v909
        %v911 = vmul.f32 %v908, 1.442695
        %v912 = vpow.pop %v911
        %v913 = vsel %vm654, %v910, 0.0
        %914 = vadd.xlane.f32.xlu0 %v913
        %v915 = vpop.xlane.xlu0 %914
        %v916 = vsel %vm654, %v912, 0.0
        %917 = vadd.xlane.f32.xlu0 %v916
        %v918 = vpop.xlane.xlu0 %917
        %v919 = vrcp.pop %v915
        %v920 = vrcp.pop %v918
        %v921 = vmul.f32 %v910, %v919
        %v922 = vmul.f32 %v912, %v920
        %v923 = vpack.c.bf16 %v922, %v921
        %924 = vrot.lane.b32.xlu0 %v600, 48
        %v925 = vpop.permute.xlu0 %924
        %v928 = vsel %vm654, %v923, 0
        %930 = vmatprep.subr.bf16.mxu0 0
        %931 = vmatpush1.bf16.msra.mxu0 %v925
        %932 = vmatprep.subr.bf16.mxu0 0
        %933 = vmatpush1.bf16.msra.mxu0 0
        %934 = vmatprep.subr.bf16.mxu0 0
        %935 = vmatpush1.bf16.msra.mxu0 0
        %936 = vmatprep.subr.bf16.mxu0 0
        %937 = vmatpush1.bf16.msra.mxu0 0
        %938 = vmatprep.subr.bf16.mxu0 0
        %939 = vmatpush1.bf16.msra.mxu0 0
        %940 = vmatprep.subr.bf16.mxu0 0
        %941 = vmatpush1.bf16.msra.mxu0 0
        %942 = vmatprep.subr.bf16.mxu0 0
        %943 = vmatpush1.bf16.msra.mxu0 0
        %944 = vmatprep.subr.bf16.mxu0 0
        %945 = vmatpush1.bf16.msra.mxu0 0
        %946 = vmatprep.subr.bf16.mxu0 0
        %947 = vmatpush1.bf16.msra.mxu0 0
        %948 = vmatprep.subr.bf16.mxu0 0
        %949 = vmatpush1.bf16.msra.mxu0 0
        %950 = vmatprep.subr.bf16.mxu0 0
        %951 = vmatpush1.bf16.msra.mxu0 0
        %952 = vmatprep.subr.bf16.mxu0 0
        %953 = vmatpush1.bf16.msra.mxu0 0
        %954 = vmatprep.subr.bf16.mxu0 0
        %955 = vmatpush1.bf16.msra.mxu0 0
        %956 = vmatprep.subr.bf16.mxu0 0
        %957 = vmatpush1.bf16.msra.mxu0 0
        %958 = vmatprep.subr.bf16.mxu0 0
        %959 = vmatpush1.bf16.msra.mxu0 0
        %960 = vmatprep.subr.bf16.mxu0 0
        %961 = vmatpush1.bf16.msra.mxu0 0
        %962 = vmatprep.mubr.bf16.mxu0 0
        %963 = vmatmul.mubr.bf16.gmra.mrb[0].mxu0 %v928
        %v964 = vpop.f32.mrb[0].mxu0
        %v965 = vadd.f32 0.0, %v964
        %v966 = vpop.f32.mrb[0].mxu0
        %v967 = vpop.f32.mrb[0].mxu0
        %v968 = vadd.f32 0.0, %v967
        %v969 = vpop.f32.mrb[0].mxu0
        %970 = vdwg.mxu0
        %971 = vrot.lane.b32.xlu0 %v600, 104
        %v972 = vpop.permute.xlu0 %971
        %973 = vrot.lane.b32.xlu0 %v600, 72
        %v974 = vpop.permute.xlu0 %973
        %v976 = vsel %vm604, %v972, 0
        %v979 = vsel %vm604, %v974, 0
        %981 = vmatprep.subr.bf16.mxu0 0
        %982 = vmatpush1.bf16.xpose.msra.mxu0 %v979
        %983 = vmatprep.subr.bf16.mxu0 0
        %984 = vmatpush1.bf16.xpose.msra.mxu0 0
        %985 = vmatprep.subr.bf16.mxu0 0
        %986 = vmatpush1.bf16.xpose.msra.mxu0 0
        %987 = vmatprep.subr.bf16.mxu0 0
        %988 = vmatpush1.bf16.xpose.msra.mxu0 0
        %989 = vmatprep.subr.bf16.mxu0 0
        %990 = vmatpush1.bf16.xpose.msra.mxu0 0
        %991 = vmatprep.subr.bf16.mxu0 0
        %992 = vmatpush1.bf16.xpose.msra.mxu0 0
        %993 = vmatprep.subr.bf16.mxu0 0
        %994 = vmatpush1.bf16.xpose.msra.mxu0 0
        %995 = vmatprep.subr.bf16.mxu0 0
        %996 = vmatpush1.bf16.xpose.msra.mxu0 0
        %997 = vmatprep.subr.bf16.mxu0 0
        %998 = vmatpush1.bf16.xpose.msra.mxu0 0
        %999 = vmatprep.subr.bf16.mxu0 0
        %1000 = vmatpush1.bf16.xpose.msra.mxu0 0
        %1001 = vmatprep.subr.bf16.mxu0 0
        %1002 = vmatpush1.bf16.xpose.msra.mxu0 0
        %1003 = vmatprep.subr.bf16.mxu0 0
        %1004 = vmatpush1.bf16.xpose.msra.mxu0 0
        %1005 = vmatprep.subr.bf16.mxu0 0
        %1006 = vmatpush1.bf16.xpose.msra.mxu0 0
        %1007 = vmatprep.subr.bf16.mxu0 0
        %1008 = vmatpush1.bf16.xpose.msra.mxu0 0
        %1009 = vmatprep.subr.bf16.mxu0 0
        %1010 = vmatpush1.bf16.xpose.msra.mxu0 0
        %1011 = vmatprep.subr.bf16.mxu0 0
        %1012 = vmatpush1.bf16.xpose.msra.mxu0 0
        %1013 = vmatprep.mubr.bf16.mxu0 0
        %1014 = vmatmul.mubr.bf16.gmra.mrb[0].mxu0 %v976
        %v1015 = vpop.f32.mrb[0].mxu0
        %v1016 = vadd.f32 0.0, %v1015
        %v1017 = vpop.f32.mrb[0].mxu0
        %v1018 = vpop.f32.mrb[0].mxu0
        %v1019 = vadd.f32 0.0, %v1018
        %v1020 = vpop.f32.mrb[0].mxu0
        %1021 = vdwg.mxu0
        %v1022 = vmul.f32 %v1016, 0.35355338
        %v1023 = vmul.f32 %v1019, 0.35355338
        %v1024 = vsel %vm654, %v1022, -inf
        %1025 = vmax.xlane.f32.xlu0 %v1024
        %v1026 = vpop.xlane.xlu0 %1025
        %v1027 = vsel %vm654, %v1023, -inf
        %1028 = vmax.xlane.f32.xlu0 %v1027
        %v1029 = vpop.xlane.xlu0 %1028
        %v1030 = vsub.f32 %v1022, %v1026
        %v1031 = vsub.f32 %v1023, %v1029
        %v1032 = vmul.f32 %v1030, 1.442695
        %v1033 = vpow.pop %v1032
        %v1034 = vmul.f32 %v1031, 1.442695
        %v1035 = vpow.pop %v1034
        %v1036 = vsel %vm654, %v1033, 0.0
        %1037 = vadd.xlane.f32.xlu0 %v1036
        %v1038 = vpop.xlane.xlu0 %1037
        %v1039 = vsel %vm654, %v1035, 0.0
        %1040 = vadd.xlane.f32.xlu0 %v1039
        %v1041 = vpop.xlane.xlu0 %1040
        %v1042 = vrcp.pop %v1038
        %v1043 = vrcp.pop %v1041
        %v1044 = vmul.f32 %v1033, %v1042
        %v1045 = vmul.f32 %v1035, %v1043
        %v1046 = vpack.c.bf16 %v1045, %v1044
        %1047 = vrot.lane.b32.xlu0 %v600, 40
        %v1048 = vpop.permute.xlu0 %1047
        %v1051 = vsel %vm654, %v1046, 0
        %1053 = vmatprep.subr.bf16.mxu0 0
        %1054 = vmatpush1.bf16.msra.mxu0 %v1048
        %1055 = vmatprep.subr.bf16.mxu0 0
        %1056 = vmatpush1.bf16.msra.mxu0 0
        %1057 = vmatprep.subr.bf16.mxu0 0
        %1058 = vmatpush1.bf16.msra.mxu0 0
        %1059 = vmatprep.subr.bf16.mxu0 0
        %1060 = vmatpush1.bf16.msra.mxu0 0
        %1061 = vmatprep.subr.bf16.mxu0 0
        %1062 = vmatpush1.bf16.msra.mxu0 0
        %1063 = vmatprep.subr.bf16.mxu0 0
        %1064 = vmatpush1.bf16.msra.mxu0 0
        %1065 = vmatprep.subr.bf16.mxu0 0
        %1066 = vmatpush1.bf16.msra.mxu0 0
        %1067 = vmatprep.subr.bf16.mxu0 0
        %1068 = vmatpush1.bf16.msra.mxu0 0
        %1069 = vmatprep.subr.bf16.mxu0 0
        %1070 = vmatpush1.bf16.msra.mxu0 0
        %1071 = vmatprep.subr.bf16.mxu0 0
        %1072 = vmatpush1.bf16.msra.mxu0 0
        %1073 = vmatprep.subr.bf16.mxu0 0
        %1074 = vmatpush1.bf16.msra.mxu0 0
        %1075 = vmatprep.subr.bf16.mxu0 0
        %1076 = vmatpush1.bf16.msra.mxu0 0
        %1077 = vmatprep.subr.bf16.mxu0 0
        %1078 = vmatpush1.bf16.msra.mxu0 0
        %1079 = vmatprep.subr.bf16.mxu0 0
        %1080 = vmatpush1.bf16.msra.mxu0 0
        %1081 = vmatprep.subr.bf16.mxu0 0
        %1082 = vmatpush1.bf16.msra.mxu0 0
        %1083 = vmatprep.subr.bf16.mxu0 0
        %1084 = vmatpush1.bf16.msra.mxu0 0
        %1085 = vmatprep.mubr.bf16.mxu0 0
        %1086 = vmatmul.mubr.bf16.gmra.mrb[0].mxu0 %v1051
        %v1087 = vpop.f32.mrb[0].mxu0
        %v1088 = vadd.f32 0.0, %v1087
        %v1089 = vpop.f32.mrb[0].mxu0
        %v1090 = vpop.f32.mrb[0].mxu0
        %v1091 = vadd.f32 0.0, %v1090
        %v1092 = vpop.f32.mrb[0].mxu0
        %1093 = vdwg.mxu0
        %1096 = vrot.lane.b32.xlu0 %v842, 8
        %v1097 = vpop.permute.xlu0 %1096
        %1098 = vrot.lane.b32.xlu0 %v845, 8
        %v1099 = vpop.permute.xlu0 %1098
        %1104 = vrot.lane.b32.xlu0 %v965, 16
        %v1105 = vpop.permute.xlu0 %1104
        %1106 = vrot.lane.b32.xlu0 %v968, 16
        %v1107 = vpop.permute.xlu0 %1106
        %1112 = vrot.lane.b32.xlu0 %v1088, 24
        %v1113 = vpop.permute.xlu0 %1112
        %1114 = vrot.lane.b32.xlu0 %v1091, 24
        %v1115 = vpop.permute.xlu0 %1114
        %v1118 = vsel %vm604, %v719, %v1097
        %v1119 = vsel %vm604, %v722, %v1099
        %v1120 = vsel %vm654, %v1118, %v1105
        %v1121 = vsel %vm654, %v1119, %v1107
        %vm1122 = vcmask 195584
        %v1123 = vsel %vm1122, %v1120, %v1113
        %v1124 = vsel %vm1122, %v1121, %v1115
        %v1125 = vpack.c.bf16 %v1124, %v1123
        %v1127 = vlaneseq
        %v1128 = vshrl.u32 %v1127, 7
        %v1129 = vsub.s32 0, %v1128
        %v1130 = vrot.slane %v495, %v1129
        %v1136 = vunpack.c.l.b16 %v491
        %v1137 = vunpack.c.l.b16 %v492
        %v1138 = vunpack.c.l.b16 %v493
        %v1139 = vunpack.c.l.b16 %v494
        %v1140 = vpack.c.b16 %v1137, %v1136
        %v1141 = vpack.c.b16 %v1139, %v1138
        %v1145 = vsel %vm555, %v1125, 0
        %1147 = vmatprep.subr.bf16.mxu0 0
        %1148 = vmatpush1.bf16.msra.mxu0 %v1140
        %1149 = vmatprep.subr.bf16.mxu0 0
        %1150 = vmatpush1.bf16.msra.mxu0 %v1141
        %1151 = vmatprep.subr.bf16.mxu0 0
        %1152 = vmatpush1.bf16.msra.mxu0 0
        %1153 = vmatprep.subr.bf16.mxu0 0
        %1154 = vmatpush1.bf16.msra.mxu0 0
        %1155 = vmatprep.subr.bf16.mxu0 0
        %1156 = vmatpush1.bf16.msra.mxu0 0
        %1157 = vmatprep.subr.bf16.mxu0 0
        %1158 = vmatpush1.bf16.msra.mxu0 0
        %1159 = vmatprep.subr.bf16.mxu0 0
        %1160 = vmatpush1.bf16.msra.mxu0 0
        %1161 = vmatprep.subr.bf16.mxu0 0
        %1162 = vmatpush1.bf16.msra.mxu0 0
        %1163 = vmatprep.subr.bf16.mxu0 0
        %1164 = vmatpush1.bf16.msra.mxu0 0
        %1165 = vmatprep.subr.bf16.mxu0 0
        %1166 = vmatpush1.bf16.msra.mxu0 0
        %1167 = vmatprep.subr.bf16.mxu0 0
        %1168 = vmatpush1.bf16.msra.mxu0 0
        %1169 = vmatprep.subr.bf16.mxu0 0
        %1170 = vmatpush1.bf16.msra.mxu0 0
        %1171 = vmatprep.subr.bf16.mxu0 0
        %1172 = vmatpush1.bf16.msra.mxu0 0
        %1173 = vmatprep.subr.bf16.mxu0 0
        %1174 = vmatpush1.bf16.msra.mxu0 0
        %1175 = vmatprep.subr.bf16.mxu0 0
        %1176 = vmatpush1.bf16.msra.mxu0 0
        %1177 = vmatprep.subr.bf16.mxu0 0
        %1178 = vmatpush1.bf16.msra.mxu0 0
        %1179 = vmatprep.mubr.bf16.mxu0 0
        %1180 = vmatmul.mubr.bf16.gmra.mrb[0].mxu0 %v1145
        %v1181 = vpop.f32.mrb[0].mxu0
        %v1182 = vadd.f32 %v1130, %v1181
        %v1183 = vpop.f32.mrb[0].mxu0
        %v1184 = vpop.f32.mrb[0].mxu0
        %v1185 = vadd.f32 %v1130, %v1184
        %v1186 = vpop.f32.mrb[0].mxu0
        %1187 = vdwg.mxu0
        %v1188 = vadd.f32 %v480, %v1182
        %v1189 = vadd.f32 %v481, %v1185
        %v1190 = vsel %vm555, %v1188, 0.0
        %1191 = vadd.xlane.f32.xlu0 %v1190
        %v1192 = vpop.xlane.xlu0 %1191
        %v1193 = vsel %vm555, %v1189, 0.0
        %1194 = vadd.xlane.f32.xlu0 %v1193
        %v1195 = vpop.xlane.xlu0 %1194
        %v1196 = vrcp.pop 32.0
        %v1197 = vmul.f32 %v1192, %v1196
        %v1198 = vmul.f32 %v1195, %v1196
        %v1199 = vsub.f32 %v1188, %v1197
        %v1200 = vsub.f32 %v1189, %v1198
        %v1201 = vmul.f32 %v1199, %v1199
        %v1202 = vmul.f32 %v1200, %v1200
        %v1203 = vsel %vm555, %v1201, 0.0
        %1204 = vadd.xlane.f32.xlu0 %v1203
        %v1205 = vpop.xlane.xlu0 %1204
        %v1206 = vsel %vm555, %v1202, 0.0
        %1207 = vadd.xlane.f32.xlu0 %v1206
        %v1208 = vpop.xlane.xlu0 %1207
        %v1209 = vmul.f32 %v1205, %v1196
        %v1210 = vmul.f32 %v1208, %v1196
        %v1211 = vadd.f32 %v1209, 1e-05
        %v1212 = vadd.f32 %v1210, 1e-05
        %v1213 = vrsqrt.pop %v1211
        %v1214 = vrsqrt.pop %v1212
        %v1215 = vmul.f32 %v1199, %v1213
        %v1216 = vmul.f32 %v1200, %v1214
        %v1218 = vlaneseq
        %v1219 = vshrl.u32 %v1218, 7
        %v1220 = vsub.s32 0, %v1219
        %v1221 = vrot.slane %v496, %v1220
        %v1223 = vmul.f32 %v1215, %v1221
        %v1224 = vmul.f32 %v1216, %v1221
        %v1226 = vlaneseq
        %v1227 = vshrl.u32 %v1226, 7
        %v1228 = vsub.s32 0, %v1227
        %v1229 = vrot.slane %v497, %v1228
        %v1231 = vadd.f32 %v1223, %v1229
        %v1232 = vadd.f32 %v1224, %v1229
        %v1233 = vrot.slane %v1231, 7
        %v1234 = vrot.slane %v1232, 7
        %v1235 = vlaneseq
        %v1236 = vshrl.u32 %v1235, 7
        %vm1237 = vcmp.lt.s32.totalorder %v1236, 1
        %v1238 = vsel %vm1237, %v1233, %v1234
        %v1239 = vsel %vm1237, %v1234, %v1233
        %v1240 = vadd.s32 %v1236, 8
        %vm1241 = vcmp.eq.s32.totalorder %v1236, 0
        %vm1242 = vcmp.eq.s32.totalorder %v1240, 0
        %v1243 = vsel %vm1241, 0.0, %v1239
        %v1244 = vsel %vm1242, 0.0, %v1238
        %v1245 = vrot.slane %v1231, 1
        %v1246 = vrot.slane %v1232, 1
        %vm1247 = vcmp.lt.s32.totalorder %v1236, 7
        %v1248 = vsel %vm1247, %v1245, %v1246
        %v1249 = vsel %vm1247, %v1246, %v1245
        %vm1250 = vcmp.eq.s32.totalorder %v1236, 15
        %vm1251 = vcmp.eq.s32.totalorder %v1240, 15
        %v1252 = vsel %vm1250, 0.0, %v1248
        %v1253 = vsel %vm1251, 0.0, %v1249
        %1256 = vrot.lane.b32.xlu0 %v1231, 32
        %v1257 = vpop.permute.xlu0 %1256
        %1258 = vrot.lane.b32.xlu0 %v1232, 32
        %v1259 = vpop.permute.xlu0 %1258
        %1264 = vrot.lane.b32.xlu0 %v1252, 64
        %v1265 = vpop.permute.xlu0 %1264
        %1266 = vrot.lane.b32.xlu0 %v1253, 64
        %v1267 = vpop.permute.xlu0 %1266
        %v1270 = vsel %vm555, %v1243, %v1257
        %v1271 = vsel %vm555, %v1244, %v1259
        %vm1272 = vcmask 523264
        %v1273 = vsel %vm1272, %v1270, %v1265
        %v1274 = vsel %vm1272, %v1271, %v1267
        %v1275 = vpack.c.bf16 %v1274, %v1273
        %v1277 = vlaneseq
        %v1278 = vshrl.u32 %v1277, 7
        %v1279 = vsub.s32 0, %v1278
        %v1280 = vrot.slane %v510, %v1279
        %v1294 = vunpack.c.l.b16 %v498
        %v1295 = vunpack.c.l.b16 %v499
        %v1296 = vunpack.c.l.b16 %v500
        %v1297 = vunpack.c.l.b16 %v501
        %v1298 = vunpack.c.l.b16 %v502
        %v1299 = vunpack.c.l.b16 %v503
        %v1300 = vunpack.c.l.b16 %v504
        %v1301 = vunpack.c.l.b16 %v505
        %v1302 = vunpack.c.l.b16 %v506
        %v1303 = vunpack.c.l.b16 %v507
        %v1304 = vunpack.c.l.b16 %v508
        %v1305 = vunpack.c.l.b16 %v509
        %v1306 = vpack.c.b16 %v1295, %v1294
        %v1307 = vpack.c.b16 %v1297, %v1296
        %v1308 = vpack.c.b16 %v1299, %v1298
        %v1309 = vpack.c.b16 %v1301, %v1300
        %v1310 = vpack.c.b16 %v1303, %v1302
        %v1311 = vpack.c.b16 %v1305, %v1304
        %vm1318 = vcmask 785408
        %v1320 = vsel %vm1318, %v1275, 0
        %1322 = vmatprep.subr.bf16.mxu0 0
        %1323 = vmatpush1.bf16.msra.mxu0 %v1306
        %1324 = vmatprep.subr.bf16.mxu0 0
        %1325 = vmatpush1.bf16.msra.mxu0 %v1307
        %1326 = vmatprep.subr.bf16.mxu0 0
        %1327 = vmatpush1.bf16.msra.mxu0 %v1308
        %1328 = vmatprep.subr.bf16.mxu0 0
        %1329 = vmatpush1.bf16.msra.mxu0 %v1309
        %1330 = vmatprep.subr.bf16.mxu0 0
        %1331 = vmatpush1.bf16.msra.mxu0 %v1310
        %1332 = vmatprep.subr.bf16.mxu0 0
        %1333 = vmatpush1.bf16.msra.mxu0 %v1311
        %1334 = vmatprep.subr.bf16.mxu0 0
        %1335 = vmatpush1.bf16.msra.mxu0 0
        %1336 = vmatprep.subr.bf16.mxu0 0
        %1337 = vmatpush1.bf16.msra.mxu0 0
        %1338 = vmatprep.subr.bf16.mxu0 0
        %1339 = vmatpush1.bf16.msra.mxu0 0
        %1340 = vmatprep.subr.bf16.mxu0 0
        %1341 = vmatpush1.bf16.msra.mxu0 0
        %1342 = vmatprep.subr.bf16.mxu0 0
        %1343 = vmatpush1.bf16.msra.mxu0 0
        %1344 = vmatprep.subr.bf16.mxu0 0
        %1345 = vmatpush1.bf16.msra.mxu0 0
        %1346 = vmatprep.subr.bf16.mxu0 0
        %1347 = vmatpush1.bf16.msra.mxu0 0
        %1348 = vmatprep.subr.bf16.mxu0 0
        %1349 = vmatpush1.bf16.msra.mxu0 0
        %1350 = vmatprep.subr.bf16.mxu0 0
        %1351 = vmatpush1.bf16.msra.mxu0 0
        %1352 = vmatprep.subr.bf16.mxu0 0
        %1353 = vmatpush1.bf16.msra.mxu0 0
        %1354 = vmatprep.mubr.bf16.mxu0 0
        %1355 = vmatmul.mubr.bf16.gmra.mrb[0].mxu0 %v1320
        %v1356 = vpop.f32.mrb[0].mxu0
        %v1357 = vadd.f32 %v1280, %v1356
        %v1358 = vpop.f32.mrb[0].mxu0
        %v1359 = vpop.f32.mrb[0].mxu0
        %v1360 = vadd.f32 %v1280, %v1359
        %v1361 = vpop.f32.mrb[0].mxu0
        %1362 = vdwg.mxu0
        %v1363 = vmax.f32 %v1357, 0.0
        %v1364 = vmax.f32 %v1360, 0.0
        %v1365 = vrot.slane %v1363, 7
        %v1366 = vrot.slane %v1364, 7
        %v1367 = vsel %vm1237, %v1365, %v1366
        %v1368 = vsel %vm1237, %v1366, %v1365
        %v1369 = vsel %vm1241, 0.0, %v1368
        %v1370 = vsel %vm1242, 0.0, %v1367
        %v1371 = vrot.slane %v1363, 1
        %v1372 = vrot.slane %v1364, 1
        %v1373 = vsel %vm1247, %v1371, %v1372
        %v1374 = vsel %vm1247, %v1372, %v1371
        %v1375 = vsel %vm1250, 0.0, %v1373
        %v1376 = vsel %vm1251, 0.0, %v1374
        %1379 = vrot.lane.b32.xlu0 %v1363, 64
        %v1380 = vpop.permute.xlu0 %1379
        %1381 = vrot.lane.b32.xlu0 %v1364, 64
        %v1382 = vpop.permute.xlu0 %1381
        %v1385 = vsel %vm1272, %v1369, %v1380
        %v1386 = vsel %vm1272, %v1370, %v1382
        %v1387 = vpack.c.bf16 %v1386, %v1385
        %v1388 = vpack.c.bf16 %v1376, %v1375
        %v1390 = vlaneseq
        %v1391 = vshrl.u32 %v1390, 7
        %v1392 = vsub.s32 0, %v1391
        %v1393 = vrot.slane %v535, %v1392
        %v1419 = vunpack.c.l.b16 %v511
        %v1420 = vunpack.c.l.b16 %v512
        %v1421 = vunpack.c.l.b16 %v513
        %v1422 = vunpack.c.l.b16 %v514
        %v1423 = vunpack.c.l.b16 %v515
        %v1424 = vunpack.c.l.b16 %v516
        %v1425 = vunpack.c.l.b16 %v517
        %v1426 = vunpack.c.l.b16 %v518
        %v1427 = vunpack.c.l.b16 %v519
        %v1428 = vunpack.c.l.b16 %v520
        %v1429 = vunpack.c.l.b16 %v521
        %v1430 = vunpack.c.l.b16 %v522
        %v1431 = vunpack.c.l.b16 %v523
        %v1432 = vunpack.c.l.b16 %v524
        %v1433 = vunpack.c.l.b16 %v525
        %v1434 = vunpack.c.l.b16 %v526
        %v1435 = vunpack.c.l.b16 %v527
        %v1436 = vunpack.c.l.b16 %v528
        %v1437 = vunpack.c.l.b16 %v529
        %v1438 = vunpack.c.l.b16 %v530
        %v1439 = vunpack.c.l.b16 %v531
        %v1440 = vunpack.c.l.b16 %v532
        %v1441 = vunpack.c.l.b16 %v533
        %v1442 = vunpack.c.l.b16 %v534
        %v1443 = vpack.c.b16 %v1420, %v1419
        %v1444 = vpack.c.b16 %v1422, %v1421
        %v1445 = vpack.c.b16 %v1424, %v1423
        %v1446 = vpack.c.b16 %v1426, %v1425
        %v1447 = vpack.c.b16 %v1428, %v1427
        %v1448 = vpack.c.b16 %v1430, %v1429
        %v1449 = vpack.c.b16 %v1432, %v1431
        %v1450 = vpack.c.b16 %v1434, %v1433
        %v1451 = vpack.c.b16 %v1436, %v1435
        %v1452 = vpack.c.b16 %v1438, %v1437
        %v1453 = vpack.c.b16 %v1440, %v1439
        %v1454 = vpack.c.b16 %v1442, %v1441
        %v1468 = vsel %vm1272, %v1388, 0
        %1470 = vmatprep.subr.bf16.mxu0 0
        %1471 = vmatpush1.bf16.msra.mxu0 %v1443
        %1472 = vmatprep.subr.bf16.mxu0 0
        %1473 = vmatpush1.bf16.msra.mxu0 %v1444
        %1474 = vmatprep.subr.bf16.mxu0 0
        %1475 = vmatpush1.bf16.msra.mxu0 %v1445
        %1476 = vmatprep.subr.bf16.mxu0 0
        %1477 = vmatpush1.bf16.msra.mxu0 %v1446
        %1478 = vmatprep.subr.bf16.mxu0 0
        %1479 = vmatpush1.bf16.msra.mxu0 %v1447
        %1480 = vmatprep.subr.bf16.mxu0 0
        %1481 = vmatpush1.bf16.msra.mxu0 %v1448
        %1482 = vmatprep.subr.bf16.mxu0 0
        %1483 = vmatpush1.bf16.msra.mxu0 %v1449
        %1484 = vmatprep.subr.bf16.mxu0 0
        %1485 = vmatpush1.bf16.msra.mxu0 %v1450
        %1486 = vmatprep.subr.bf16.mxu0 0
        %1487 = vmatpush1.bf16.msra.mxu0 %v1451
        %1488 = vmatprep.subr.bf16.mxu0 0
        %1489 = vmatpush1.bf16.msra.mxu0 %v1452
        %1490 = vmatprep.subr.bf16.mxu0 0
        %1491 = vmatpush1.bf16.msra.mxu0 %v1453
        %1492 = vmatprep.subr.bf16.mxu0 0
        %1493 = vmatpush1.bf16.msra.mxu0 %v1454
        %1494 = vmatprep.subr.bf16.mxu0 0
        %1495 = vmatpush1.bf16.msra.mxu0 0
        %1496 = vmatprep.subr.bf16.mxu0 0
        %1497 = vmatpush1.bf16.msra.mxu0 0
        %1498 = vmatprep.subr.bf16.mxu0 0
        %1499 = vmatpush1.bf16.msra.mxu0 0
        %1500 = vmatprep.subr.bf16.mxu0 0
        %1501 = vmatpush1.bf16.msra.mxu0 0
        %1502 = vmatprep.mubr.bf16.mxu0 %v1468
        %1503 = vmatmul.mubr.bf16.gmra.mrb[0].mxu0 %v1387
        %v1504 = vpop.f32.mrb[0].mxu0
        %v1505 = vadd.f32 %v1393, %v1504
        %v1506 = vpop.f32.mrb[0].mxu0
        %v1507 = vpop.f32.mrb[0].mxu0
        %v1508 = vadd.f32 %v1393, %v1507
        %v1509 = vpop.f32.mrb[0].mxu0
        %1510 = vdwg.mxu0
        %v1511 = vadd.f32 %v1231, %v1505
        %v1512 = vadd.f32 %v1232, %v1508
        %v1513 = vsel %vm555, %v1511, 0.0
        %1514 = vadd.xlane.f32.xlu0 %v1513
        %v1515 = vpop.xlane.xlu0 %1514
        %v1516 = vsel %vm555, %v1512, 0.0
        %1517 = vadd.xlane.f32.xlu0 %v1516
        %v1518 = vpop.xlane.xlu0 %1517
        %v1519 = vmul.f32 %v1515, %v1196
        %v1520 = vmul.f32 %v1518, %v1196
        %v1521 = vsub.f32 %v1511, %v1519
        %v1522 = vsub.f32 %v1512, %v1520
        %v1523 = vmul.f32 %v1521, %v1521
        %v1524 = vmul.f32 %v1522, %v1522
        %v1525 = vsel %vm555, %v1523, 0.0
        %1526 = vadd.xlane.f32.xlu0 %v1525
        %v1527 = vpop.xlane.xlu0 %1526
        %v1528 = vsel %vm555, %v1524, 0.0
        %1529 = vadd.xlane.f32.xlu0 %v1528
        %v1530 = vpop.xlane.xlu0 %1529
        %v1531 = vmul.f32 %v1527, %v1196
        %v1532 = vmul.f32 %v1530, %v1196
        %v1533 = vadd.f32 %v1531, 1e-05
        %v1534 = vadd.f32 %v1532, 1e-05
        %v1535 = vrsqrt.pop %v1533
        %v1536 = vrsqrt.pop %v1534
        %v1537 = vmul.f32 %v1521, %v1535
        %v1538 = vmul.f32 %v1522, %v1536
        %v1539 = vmul.f32 %v1537, %v482
        %v1540 = vmul.f32 %v1538, %v483
        %v1541 = vadd.f32 %v1539, %v484
        %v1542 = vadd.f32 %v1540, %v485
        %s1543 = scalar_lea.vmem %s3, 16
        %v1544 = vld [vmem:[%s1543] sm:$0xf]
        %v1545 = vld [vmem:[%s1543 + $0x4] sm:$0xf]
        %v1546 = vld [vmem:[%s1543 + $0x8] sm:$0xf]
        %v1547 = vld [vmem:[%s1543 + $0xc] sm:$0xf]
        %s1548 = scalar_lea.vmem %s4, 1
        %v1549 = vld [vmem:[%s1548] sm:$0x1]
        %s1550 = scalar_lea.vmem %s5, 16
        %v1551 = vld [vmem:[%s1550] sm:$0xf]
        %v1552 = vld [vmem:[%s1550 + $0x4] sm:$0xf]
        %v1553 = vld [vmem:[%s1550 + $0x8] sm:$0xf]
        %v1554 = vld [vmem:[%s1550 + $0xc] sm:$0xf]
        %s1555 = scalar_lea.vmem %s6, 1
        %v1556 = vld [vmem:[%s1555] sm:$0x1]
        %s1557 = scalar_lea.vmem %s7, 1
        %v1558 = vld [vmem:[%s1557] sm:$0x1]
        %s1559 = scalar_lea.vmem %s8, 1
        %v1560 = vld [vmem:[%s1559] sm:$0x1]
        %s1561 = scalar_lea.vmem %s9, 48
        %v1562 = vld [vmem:[%s1561] sm:$0xf]
        %v1563 = vld [vmem:[%s1561 + $0x4] sm:$0xf]
        %v1564 = vld [vmem:[%s1561 + $0x8] sm:$0xf]
        %v1565 = vld [vmem:[%s1561 + $0xc] sm:$0xf]
        %v1566 = vld [vmem:[%s1561 + $0x10] sm:$0xf]
        %v1567 = vld [vmem:[%s1561 + $0x14] sm:$0xf]
        %v1568 = vld [vmem:[%s1561 + $0x18] sm:$0xf]
        %v1569 = vld [vmem:[%s1561 + $0x1c] sm:$0xf]
        %v1570 = vld [vmem:[%s1561 + $0x20] sm:$0xf]
        %v1571 = vld [vmem:[%s1561 + $0x24] sm:$0xf]
        %v1572 = vld [vmem:[%s1561 + $0x28] sm:$0xf]
        %v1573 = vld [vmem:[%s1561 + $0x2c] sm:$0xf]
        %s1574 = scalar_lea.vmem %s10, 1
        %v1575 = vld [vmem:[%s1574] sm:$0x1]
        %s1576 = scalar_lea.vmem %s11, 96
        %v1577 = vld [vmem:[%s1576] sm:$0xf]
        %v1578 = vld [vmem:[%s1576 + $0x4] sm:$0xf]
        %v1579 = vld [vmem:[%s1576 + $0x8] sm:$0xf]
        %v1580 = vld [vmem:[%s1576 + $0xc] sm:$0xf]
        %v1581 = vld [vmem:[%s1576 + $0x10] sm:$0xf]
        %v1582 = vld [vmem:[%s1576 + $0x14] sm:$0xf]
        %v1583 = vld [vmem:[%s1576 + $0x18] sm:$0xf]
        %v1584 = vld [vmem:[%s1576 + $0x1c] sm:$0xf]
        %v1585 = vld [vmem:[%s1576 + $0x20] sm:$0xf]
        %v1586 = vld [vmem:[%s1576 + $0x24] sm:$0xf]
        %v1587 = vld [vmem:[%s1576 + $0x28] sm:$0xf]
        %v1588 = vld [vmem:[%s1576 + $0x2c] sm:$0xf]
        %v1589 = vld [vmem:[%s1576 + $0x30] sm:$0xf]
        %v1590 = vld [vmem:[%s1576 + $0x34] sm:$0xf]
        %v1591 = vld [vmem:[%s1576 + $0x38] sm:$0xf]
        %v1592 = vld [vmem:[%s1576 + $0x3c] sm:$0xf]
        %v1593 = vld [vmem:[%s1576 + $0x40] sm:$0xf]
        %v1594 = vld [vmem:[%s1576 + $0x44] sm:$0xf]
        %v1595 = vld [vmem:[%s1576 + $0x48] sm:$0xf]
        %v1596 = vld [vmem:[%s1576 + $0x4c] sm:$0xf]
        %v1597 = vld [vmem:[%s1576 + $0x50] sm:$0xf]
        %v1598 = vld [vmem:[%s1576 + $0x54] sm:$0xf]
        %v1599 = vld [vmem:[%s1576 + $0x58] sm:$0xf]
        %v1600 = vld [vmem:[%s1576 + $0x5c] sm:$0xf]
        %s1601 = scalar_lea.vmem %s12, 1
        %v1602 = vld [vmem:[%s1601] sm:$0x1]
        %v1603 = vpack.c.bf16 %v1542, %v1541
        %v1605 = vlaneseq
        %v1606 = vshrl.u32 %v1605, 7
        %v1607 = vsub.s32 0, %v1606
        %v1608 = vrot.slane %v1549, %v1607
        %v1614 = vunpack.c.l.b16 %v1544
        %v1615 = vunpack.c.l.b16 %v1545
        %v1616 = vunpack.c.l.b16 %v1546
        %v1617 = vunpack.c.l.b16 %v1547
        %v1618 = vpack.c.b16 %v1615, %v1614
        %v1619 = vpack.c.b16 %v1617, %v1616
        %v1623 = vsel %vm555, %v1603, 0
        %1625 = vmatprep.subr.bf16.mxu0 0
        %1626 = vmatpush1.bf16.msra.mxu0 %v1618
        %1627 = vmatprep.subr.bf16.mxu0 0
        %1628 = vmatpush1.bf16.msra.mxu0 %v1619
        %1629 = vmatprep.subr.bf16.mxu0 0
        %1630 = vmatpush1.bf16.msra.mxu0 0
        %1631 = vmatprep.subr.bf16.mxu0 0
        %1632 = vmatpush1.bf16.msra.mxu0 0
        %1633 = vmatprep.subr.bf16.mxu0 0
        %1634 = vmatpush1.bf16.msra.mxu0 0
        %1635 = vmatprep.subr.bf16.mxu0 0
        %1636 = vmatpush1.bf16.msra.mxu0 0
        %1637 = vmatprep.subr.bf16.mxu0 0
        %1638 = vmatpush1.bf16.msra.mxu0 0
        %1639 = vmatprep.subr.bf16.mxu0 0
        %1640 = vmatpush1.bf16.msra.mxu0 0
        %1641 = vmatprep.subr.bf16.mxu0 0
        %1642 = vmatpush1.bf16.msra.mxu0 0
        %1643 = vmatprep.subr.bf16.mxu0 0
        %1644 = vmatpush1.bf16.msra.mxu0 0
        %1645 = vmatprep.subr.bf16.mxu0 0
        %1646 = vmatpush1.bf16.msra.mxu0 0
        %1647 = vmatprep.subr.bf16.mxu0 0
        %1648 = vmatpush1.bf16.msra.mxu0 0
        %1649 = vmatprep.subr.bf16.mxu0 0
        %1650 = vmatpush1.bf16.msra.mxu0 0
        %1651 = vmatprep.subr.bf16.mxu0 0
        %1652 = vmatpush1.bf16.msra.mxu0 0
        %1653 = vmatprep.subr.bf16.mxu0 0
        %1654 = vmatpush1.bf16.msra.mxu0 0
        %1655 = vmatprep.subr.bf16.mxu0 0
        %1656 = vmatpush1.bf16.msra.mxu0 0
        %1657 = vmatprep.mubr.bf16.mxu0 0
        %1658 = vmatmul.mubr.bf16.gmra.mrb[0].mxu0 %v1623
        %v1659 = vpop.f32.mrb[0].mxu0
        %v1660 = vadd.f32 %v1608, %v1659
        %v1661 = vpop.f32.mrb[0].mxu0
        %v1662 = vpop.f32.mrb[0].mxu0
        %v1663 = vadd.f32 %v1608, %v1662
        %v1664 = vpop.f32.mrb[0].mxu0
        %1665 = vdwg.mxu0
        %v1666 = vpack.c.bf16 %v1663, %v1660
        %1668 = vrot.lane.b32.xlu0 %v1666, 96
        %v1669 = vpop.permute.xlu0 %1668
        %v1671 = vsel %vm604, %v1666, 0
        %v1674 = vsel %vm604, %v1669, 0
        %1676 = vmatprep.subr.bf16.mxu0 0
        %1677 = vmatpush1.bf16.xpose.msra.mxu0 %v1674
        %1678 = vmatprep.subr.bf16.mxu0 0
        %1679 = vmatpush1.bf16.xpose.msra.mxu0 0
        %1680 = vmatprep.subr.bf16.mxu0 0
        %1681 = vmatpush1.bf16.xpose.msra.mxu0 0
        %1682 = vmatprep.subr.bf16.mxu0 0
        %1683 = vmatpush1.bf16.xpose.msra.mxu0 0
        %1684 = vmatprep.subr.bf16.mxu0 0
        %1685 = vmatpush1.bf16.xpose.msra.mxu0 0
        %1686 = vmatprep.subr.bf16.mxu0 0
        %1687 = vmatpush1.bf16.xpose.msra.mxu0 0
        %1688 = vmatprep.subr.bf16.mxu0 0
        %1689 = vmatpush1.bf16.xpose.msra.mxu0 0
        %1690 = vmatprep.subr.bf16.mxu0 0
        %1691 = vmatpush1.bf16.xpose.msra.mxu0 0
        %1692 = vmatprep.subr.bf16.mxu0 0
        %1693 = vmatpush1.bf16.xpose.msra.mxu0 0
        %1694 = vmatprep.subr.bf16.mxu0 0
        %1695 = vmatpush1.bf16.xpose.msra.mxu0 0
        %1696 = vmatprep.subr.bf16.mxu0 0
        %1697 = vmatpush1.bf16.xpose.msra.mxu0 0
        %1698 = vmatprep.subr.bf16.mxu0 0
        %1699 = vmatpush1.bf16.xpose.msra.mxu0 0
        %1700 = vmatprep.subr.bf16.mxu0 0
        %1701 = vmatpush1.bf16.xpose.msra.mxu0 0
        %1702 = vmatprep.subr.bf16.mxu0 0
        %1703 = vmatpush1.bf16.xpose.msra.mxu0 0
        %1704 = vmatprep.subr.bf16.mxu0 0
        %1705 = vmatpush1.bf16.xpose.msra.mxu0 0
        %1706 = vmatprep.subr.bf16.mxu0 0
        %1707 = vmatpush1.bf16.xpose.msra.mxu0 0
        %1708 = vmatprep.mubr.bf16.mxu0 0
        %1709 = vmatmul.mubr.bf16.gmra.mrb[0].mxu0 %v1671
        %v1710 = vpop.f32.mrb[0].mxu0
        %v1711 = vadd.f32 0.0, %v1710
        %v1712 = vpop.f32.mrb[0].mxu0
        %v1713 = vpop.f32.mrb[0].mxu0
        %v1714 = vadd.f32 0.0, %v1713
        %v1715 = vpop.f32.mrb[0].mxu0
        %1716 = vdwg.mxu0
        %v1717 = vmul.f32 %v1711, 0.35355338
        %v1718 = vmul.f32 %v1714, 0.35355338
        %v1719 = vsel %vm654, %v1717, -inf
        %1720 = vmax.xlane.f32.xlu0 %v1719
        %v1721 = vpop.xlane.xlu0 %1720
        %v1722 = vsel %vm654, %v1718, -inf
        %1723 = vmax.xlane.f32.xlu0 %v1722
        %v1724 = vpop.xlane.xlu0 %1723
        %v1725 = vsub.f32 %v1717, %v1721
        %v1726 = vsub.f32 %v1718, %v1724
        %v1727 = vmul.f32 %v1725, 1.442695
        %v1728 = vpow.pop %v1727
        %v1729 = vmul.f32 %v1726, 1.442695
        %v1730 = vpow.pop %v1729
        %v1731 = vsel %vm654, %v1728, 0.0
        %1732 = vadd.xlane.f32.xlu0 %v1731
        %v1733 = vpop.xlane.xlu0 %1732
        %v1734 = vsel %vm654, %v1730, 0.0
        %1735 = vadd.xlane.f32.xlu0 %v1734
        %v1736 = vpop.xlane.xlu0 %1735
        %v1737 = vrcp.pop %v1733
        %v1738 = vrcp.pop %v1736
        %v1739 = vmul.f32 %v1728, %v1737
        %v1740 = vmul.f32 %v1730, %v1738
        %v1741 = vpack.c.bf16 %v1740, %v1739
        %1742 = vrot.lane.b32.xlu0 %v1666, 64
        %v1743 = vpop.permute.xlu0 %1742
        %v1746 = vsel %vm654, %v1741, 0
        %1748 = vmatprep.subr.bf16.mxu0 0
        %1749 = vmatpush1.bf16.msra.mxu0 %v1743
        %1750 = vmatprep.subr.bf16.mxu0 0
        %1751 = vmatpush1.bf16.msra.mxu0 0
        %1752 = vmatprep.subr.bf16.mxu0 0
        %1753 = vmatpush1.bf16.msra.mxu0 0
        %1754 = vmatprep.subr.bf16.mxu0 0
        %1755 = vmatpush1.bf16.msra.mxu0 0
        %1756 = vmatprep.subr.bf16.mxu0 0
        %1757 = vmatpush1.bf16.msra.mxu0 0
        %1758 = vmatprep.subr.bf16.mxu0 0
        %1759 = vmatpush1.bf16.msra.mxu0 0
        %1760 = vmatprep.subr.bf16.mxu0 0
        %1761 = vmatpush1.bf16.msra.mxu0 0
        %1762 = vmatprep.subr.bf16.mxu0 0
        %1763 = vmatpush1.bf16.msra.mxu0 0
        %1764 = vmatprep.subr.bf16.mxu0 0
        %1765 = vmatpush1.bf16.msra.mxu0 0
        %1766 = vmatprep.subr.bf16.mxu0 0
        %1767 = vmatpush1.bf16.msra.mxu0 0
        %1768 = vmatprep.subr.bf16.mxu0 0
        %1769 = vmatpush1.bf16.msra.mxu0 0
        %1770 = vmatprep.subr.bf16.mxu0 0
        %1771 = vmatpush1.bf16.msra.mxu0 0
        %1772 = vmatprep.subr.bf16.mxu0 0
        %1773 = vmatpush1.bf16.msra.mxu0 0
        %1774 = vmatprep.subr.bf16.mxu0 0
        %1775 = vmatpush1.bf16.msra.mxu0 0
        %1776 = vmatprep.subr.bf16.mxu0 0
        %1777 = vmatpush1.bf16.msra.mxu0 0
        %1778 = vmatprep.subr.bf16.mxu0 0
        %1779 = vmatpush1.bf16.msra.mxu0 0
        %1780 = vmatprep.mubr.bf16.mxu0 0
        %1781 = vmatmul.mubr.bf16.gmra.mrb[0].mxu0 %v1746
        %v1782 = vpop.f32.mrb[0].mxu0
        %v1783 = vadd.f32 0.0, %v1782
        %v1784 = vpop.f32.mrb[0].mxu0
        %v1785 = vpop.f32.mrb[0].mxu0
        %v1786 = vadd.f32 0.0, %v1785
        %v1787 = vpop.f32.mrb[0].mxu0
        %1788 = vdwg.mxu0
        %1789 = vrot.lane.b32.xlu0 %v1666, 120
        %v1790 = vpop.permute.xlu0 %1789
        %1791 = vrot.lane.b32.xlu0 %v1666, 88
        %v1792 = vpop.permute.xlu0 %1791
        %v1794 = vsel %vm604, %v1790, 0
        %v1797 = vsel %vm604, %v1792, 0
        %1799 = vmatprep.subr.bf16.mxu0 0
        %1800 = vmatpush1.bf16.xpose.msra.mxu0 %v1797
        %1801 = vmatprep.subr.bf16.mxu0 0
        %1802 = vmatpush1.bf16.xpose.msra.mxu0 0
        %1803 = vmatprep.subr.bf16.mxu0 0
        %1804 = vmatpush1.bf16.xpose.msra.mxu0 0
        %1805 = vmatprep.subr.bf16.mxu0 0
        %1806 = vmatpush1.bf16.xpose.msra.mxu0 0
        %1807 = vmatprep.subr.bf16.mxu0 0
        %1808 = vmatpush1.bf16.xpose.msra.mxu0 0
        %1809 = vmatprep.subr.bf16.mxu0 0
        %1810 = vmatpush1.bf16.xpose.msra.mxu0 0
        %1811 = vmatprep.subr.bf16.mxu0 0
        %1812 = vmatpush1.bf16.xpose.msra.mxu0 0
        %1813 = vmatprep.subr.bf16.mxu0 0
        %1814 = vmatpush1.bf16.xpose.msra.mxu0 0
        %1815 = vmatprep.subr.bf16.mxu0 0
        %1816 = vmatpush1.bf16.xpose.msra.mxu0 0
        %1817 = vmatprep.subr.bf16.mxu0 0
        %1818 = vmatpush1.bf16.xpose.msra.mxu0 0
        %1819 = vmatprep.subr.bf16.mxu0 0
        %1820 = vmatpush1.bf16.xpose.msra.mxu0 0
        %1821 = vmatprep.subr.bf16.mxu0 0
        %1822 = vmatpush1.bf16.xpose.msra.mxu0 0
        %1823 = vmatprep.subr.bf16.mxu0 0
        %1824 = vmatpush1.bf16.xpose.msra.mxu0 0
        %1825 = vmatprep.subr.bf16.mxu0 0
        %1826 = vmatpush1.bf16.xpose.msra.mxu0 0
        %1827 = vmatprep.subr.bf16.mxu0 0
        %1828 = vmatpush1.bf16.xpose.msra.mxu0 0
        %1829 = vmatprep.subr.bf16.mxu0 0
        %1830 = vmatpush1.bf16.xpose.msra.mxu0 0
        %1831 = vmatprep.mubr.bf16.mxu0 0
        %1832 = vmatmul.mubr.bf16.gmra.mrb[0].mxu0 %v1794
        %v1833 = vpop.f32.mrb[0].mxu0
        %v1834 = vadd.f32 0.0, %v1833
        %v1835 = vpop.f32.mrb[0].mxu0
        %v1836 = vpop.f32.mrb[0].mxu0
        %v1837 = vadd.f32 0.0, %v1836
        %v1838 = vpop.f32.mrb[0].mxu0
        %1839 = vdwg.mxu0
        %v1840 = vmul.f32 %v1834, 0.35355338
        %v1841 = vmul.f32 %v1837, 0.35355338
        %v1842 = vsel %vm654, %v1840, -inf
        %1843 = vmax.xlane.f32.xlu0 %v1842
        %v1844 = vpop.xlane.xlu0 %1843
        %v1845 = vsel %vm654, %v1841, -inf
        %1846 = vmax.xlane.f32.xlu0 %v1845
        %v1847 = vpop.xlane.xlu0 %1846
        %v1848 = vsub.f32 %v1840, %v1844
        %v1849 = vsub.f32 %v1841, %v1847
        %v1850 = vmul.f32 %v1848, 1.442695
        %v1851 = vpow.pop %v1850
        %v1852 = vmul.f32 %v1849, 1.442695
        %v1853 = vpow.pop %v1852
        %v1854 = vsel %vm654, %v1851, 0.0
        %1855 = vadd.xlane.f32.xlu0 %v1854
        %v1856 = vpop.xlane.xlu0 %1855
        %v1857 = vsel %vm654, %v1853, 0.0
        %1858 = vadd.xlane.f32.xlu0 %v1857
        %v1859 = vpop.xlane.xlu0 %1858
        %v1860 = vrcp.pop %v1856
        %v1861 = vrcp.pop %v1859
        %v1862 = vmul.f32 %v1851, %v1860
        %v1863 = vmul.f32 %v1853, %v1861
        %v1864 = vpack.c.bf16 %v1863, %v1862
        %1865 = vrot.lane.b32.xlu0 %v1666, 56
        %v1866 = vpop.permute.xlu0 %1865
        %v1869 = vsel %vm654, %v1864, 0
        %1871 = vmatprep.subr.bf16.mxu0 0
        %1872 = vmatpush1.bf16.msra.mxu0 %v1866
        %1873 = vmatprep.subr.bf16.mxu0 0
        %1874 = vmatpush1.bf16.msra.mxu0 0
        %1875 = vmatprep.subr.bf16.mxu0 0
        %1876 = vmatpush1.bf16.msra.mxu0 0
        %1877 = vmatprep.subr.bf16.mxu0 0
        %1878 = vmatpush1.bf16.msra.mxu0 0
        %1879 = vmatprep.subr.bf16.mxu0 0
        %1880 = vmatpush1.bf16.msra.mxu0 0
        %1881 = vmatprep.subr.bf16.mxu0 0
        %1882 = vmatpush1.bf16.msra.mxu0 0
        %1883 = vmatprep.subr.bf16.mxu0 0
        %1884 = vmatpush1.bf16.msra.mxu0 0
        %1885 = vmatprep.subr.bf16.mxu0 0
        %1886 = vmatpush1.bf16.msra.mxu0 0
        %1887 = vmatprep.subr.bf16.mxu0 0
        %1888 = vmatpush1.bf16.msra.mxu0 0
        %1889 = vmatprep.subr.bf16.mxu0 0
        %1890 = vmatpush1.bf16.msra.mxu0 0
        %1891 = vmatprep.subr.bf16.mxu0 0
        %1892 = vmatpush1.bf16.msra.mxu0 0
        %1893 = vmatprep.subr.bf16.mxu0 0
        %1894 = vmatpush1.bf16.msra.mxu0 0
        %1895 = vmatprep.subr.bf16.mxu0 0
        %1896 = vmatpush1.bf16.msra.mxu0 0
        %1897 = vmatprep.subr.bf16.mxu0 0
        %1898 = vmatpush1.bf16.msra.mxu0 0
        %1899 = vmatprep.subr.bf16.mxu0 0
        %1900 = vmatpush1.bf16.msra.mxu0 0
        %1901 = vmatprep.subr.bf16.mxu0 0
        %1902 = vmatpush1.bf16.msra.mxu0 0
        %1903 = vmatprep.mubr.bf16.mxu0 0
        %1904 = vmatmul.mubr.bf16.gmra.mrb[0].mxu0 %v1869
        %v1905 = vpop.f32.mrb[0].mxu0
        %v1906 = vadd.f32 0.0, %v1905
        %v1907 = vpop.f32.mrb[0].mxu0
        %v1908 = vpop.f32.mrb[0].mxu0
        %v1909 = vadd.f32 0.0, %v1908
        %v1910 = vpop.f32.mrb[0].mxu0
        %1911 = vdwg.mxu0
        %1912 = vrot.lane.b32.xlu0 %v1666, 112
        %v1913 = vpop.permute.xlu0 %1912
        %1914 = vrot.lane.b32.xlu0 %v1666, 80
        %v1915 = vpop.permute.xlu0 %1914
        %v1917 = vsel %vm604, %v1913, 0
        %v1920 = vsel %vm604, %v1915, 0
        %1922 = vmatprep.subr.bf16.mxu0 0
        %1923 = vmatpush1.bf16.xpose.msra.mxu0 %v1920
        %1924 = vmatprep.subr.bf16.mxu0 0
        %1925 = vmatpush1.bf16.xpose.msra.mxu0 0
        %1926 = vmatprep.subr.bf16.mxu0 0
        %1927 = vmatpush1.bf16.xpose.msra.mxu0 0
        %1928 = vmatprep.subr.bf16.mxu0 0
        %1929 = vmatpush1.bf16.xpose.msra.mxu0 0
        %1930 = vmatprep.subr.bf16.mxu0 0
        %1931 = vmatpush1.bf16.xpose.msra.mxu0 0
        %1932 = vmatprep.subr.bf16.mxu0 0
        %1933 = vmatpush1.bf16.xpose.msra.mxu0 0
        %1934 = vmatprep.subr.bf16.mxu0 0
        %1935 = vmatpush1.bf16.xpose.msra.mxu0 0
        %1936 = vmatprep.subr.bf16.mxu0 0
        %1937 = vmatpush1.bf16.xpose.msra.mxu0 0
        %1938 = vmatprep.subr.bf16.mxu0 0
        %1939 = vmatpush1.bf16.xpose.msra.mxu0 0
        %1940 = vmatprep.subr.bf16.mxu0 0
        %1941 = vmatpush1.bf16.xpose.msra.mxu0 0
        %1942 = vmatprep.subr.bf16.mxu0 0
        %1943 = vmatpush1.bf16.xpose.msra.mxu0 0
        %1944 = vmatprep.subr.bf16.mxu0 0
        %1945 = vmatpush1.bf16.xpose.msra.mxu0 0
        %1946 = vmatprep.subr.bf16.mxu0 0
        %1947 = vmatpush1.bf16.xpose.msra.mxu0 0
        %1948 = vmatprep.subr.bf16.mxu0 0
        %1949 = vmatpush1.bf16.xpose.msra.mxu0 0
        %1950 = vmatprep.subr.bf16.mxu0 0
        %1951 = vmatpush1.bf16.xpose.msra.mxu0 0
        %1952 = vmatprep.subr.bf16.mxu0 0
        %1953 = vmatpush1.bf16.xpose.msra.mxu0 0
        %1954 = vmatprep.mubr.bf16.mxu0 0
        %1955 = vmatmul.mubr.bf16.gmra.mrb[0].mxu0 %v1917
        %v1956 = vpop.f32.mrb[0].mxu0
        %v1957 = vadd.f32 0.0, %v1956
        %v1958 = vpop.f32.mrb[0].mxu0
        %v1959 = vpop.f32.mrb[0].mxu0
        %v1960 = vadd.f32 0.0, %v1959
        %v1961 = vpop.f32.mrb[0].mxu0
        %1962 = vdwg.mxu0
        %v1963 = vmul.f32 %v1957, 0.35355338
        %v1964 = vmul.f32 %v1960, 0.35355338
        %v1965 = vsel %vm654, %v1963, -inf
        %1966 = vmax.xlane.f32.xlu0 %v1965
        %v1967 = vpop.xlane.xlu0 %1966
        %v1968 = vsel %vm654, %v1964, -inf
        %1969 = vmax.xlane.f32.xlu0 %v1968
        %v1970 = vpop.xlane.xlu0 %1969
        %v1971 = vsub.f32 %v1963, %v1967
        %v1972 = vsub.f32 %v1964, %v1970
        %v1973 = vmul.f32 %v1971, 1.442695
        %v1974 = vpow.pop %v1973
        %v1975 = vmul.f32 %v1972, 1.442695
        %v1976 = vpow.pop %v1975
        %v1977 = vsel %vm654, %v1974, 0.0
        %1978 = vadd.xlane.f32.xlu0 %v1977
        %v1979 = vpop.xlane.xlu0 %1978
        %v1980 = vsel %vm654, %v1976, 0.0
        %1981 = vadd.xlane.f32.xlu0 %v1980
        %v1982 = vpop.xlane.xlu0 %1981
        %v1983 = vrcp.pop %v1979
        %v1984 = vrcp.pop %v1982
        %v1985 = vmul.f32 %v1974, %v1983
        %v1986 = vmul.f32 %v1976, %v1984
        %v1987 = vpack.c.bf16 %v1986, %v1985
        %1988 = vrot.lane.b32.xlu0 %v1666, 48
        %v1989 = vpop.permute.xlu0 %1988
        %v1992 = vsel %vm654, %v1987, 0
        %1994 = vmatprep.subr.bf16.mxu0 0
        %1995 = vmatpush1.bf16.msra.mxu0 %v1989
        %1996 = vmatprep.subr.bf16.mxu0 0
        %1997 = vmatpush1.bf16.msra.mxu0 0
        %1998 = vmatprep.subr.bf16.mxu0 0
        %1999 = vmatpush1.bf16.msra.mxu0 0
        %2000 = vmatprep.subr.bf16.mxu0 0
        %2001 = vmatpush1.bf16.msra.mxu0 0
        %2002 = vmatprep.subr.bf16.mxu0 0
        %2003 = vmatpush1.bf16.msra.mxu0 0
        %2004 = vmatprep.subr.bf16.mxu0 0
        %2005 = vmatpush1.bf16.msra.mxu0 0
        %2006 = vmatprep.subr.bf16.mxu0 0
        %2007 = vmatpush1.bf16.msra.mxu0 0
        %2008 = vmatprep.subr.bf16.mxu0 0
        %2009 = vmatpush1.bf16.msra.mxu0 0
        %2010 = vmatprep.subr.bf16.mxu0 0
        %2011 = vmatpush1.bf16.msra.mxu0 0
        %2012 = vmatprep.subr.bf16.mxu0 0
        %2013 = vmatpush1.bf16.msra.mxu0 0
        %2014 = vmatprep.subr.bf16.mxu0 0
        %2015 = vmatpush1.bf16.msra.mxu0 0
        %2016 = vmatprep.subr.bf16.mxu0 0
        %2017 = vmatpush1.bf16.msra.mxu0 0
        %2018 = vmatprep.subr.bf16.mxu0 0
        %2019 = vmatpush1.bf16.msra.mxu0 0
        %2020 = vmatprep.subr.bf16.mxu0 0
        %2021 = vmatpush1.bf16.msra.mxu0 0
        %2022 = vmatprep.subr.bf16.mxu0 0
        %2023 = vmatpush1.bf16.msra.mxu0 0
        %2024 = vmatprep.subr.bf16.mxu0 0
        %2025 = vmatpush1.bf16.msra.mxu0 0
        %2026 = vmatprep.mubr.bf16.mxu0 0
        %2027 = vmatmul.mubr.bf16.gmra.mrb[0].mxu0 %v1992
        %v2028 = vpop.f32.mrb[0].mxu0
        %v2029 = vadd.f32 0.0, %v2028
        %v2030 = vpop.f32.mrb[0].mxu0
        %v2031 = vpop.f32.mrb[0].mxu0
        %v2032 = vadd.f32 0.0, %v2031
        %v2033 = vpop.f32.mrb[0].mxu0
        %2034 = vdwg.mxu0
        %2035 = vrot.lane.b32.xlu0 %v1666, 104
        %v2036 = vpop.permute.xlu0 %2035
        %2037 = vrot.lane.b32.xlu0 %v1666, 72
        %v2038 = vpop.permute.xlu0 %2037
        %v2040 = vsel %vm604, %v2036, 0
        %v2043 = vsel %vm604, %v2038, 0
        %2045 = vmatprep.subr.bf16.mxu0 0
        %2046 = vmatpush1.bf16.xpose.msra.mxu0 %v2043
        %2047 = vmatprep.subr.bf16.mxu0 0
        %2048 = vmatpush1.bf16.xpose.msra.mxu0 0
        %2049 = vmatprep.subr.bf16.mxu0 0
        %2050 = vmatpush1.bf16.xpose.msra.mxu0 0
        %2051 = vmatprep.subr.bf16.mxu0 0
        %2052 = vmatpush1.bf16.xpose.msra.mxu0 0
        %2053 = vmatprep.subr.bf16.mxu0 0
        %2054 = vmatpush1.bf16.xpose.msra.mxu0 0
        %2055 = vmatprep.subr.bf16.mxu0 0
        %2056 = vmatpush1.bf16.xpose.msra.mxu0 0
        %2057 = vmatprep.subr.bf16.mxu0 0
        %2058 = vmatpush1.bf16.xpose.msra.mxu0 0
        %2059 = vmatprep.subr.bf16.mxu0 0
        %2060 = vmatpush1.bf16.xpose.msra.mxu0 0
        %2061 = vmatprep.subr.bf16.mxu0 0
        %2062 = vmatpush1.bf16.xpose.msra.mxu0 0
        %2063 = vmatprep.subr.bf16.mxu0 0
        %2064 = vmatpush1.bf16.xpose.msra.mxu0 0
        %2065 = vmatprep.subr.bf16.mxu0 0
        %2066 = vmatpush1.bf16.xpose.msra.mxu0 0
        %2067 = vmatprep.subr.bf16.mxu0 0
        %2068 = vmatpush1.bf16.xpose.msra.mxu0 0
        %2069 = vmatprep.subr.bf16.mxu0 0
        %2070 = vmatpush1.bf16.xpose.msra.mxu0 0
        %2071 = vmatprep.subr.bf16.mxu0 0
        %2072 = vmatpush1.bf16.xpose.msra.mxu0 0
        %2073 = vmatprep.subr.bf16.mxu0 0
        %2074 = vmatpush1.bf16.xpose.msra.mxu0 0
        %2075 = vmatprep.subr.bf16.mxu0 0
        %2076 = vmatpush1.bf16.xpose.msra.mxu0 0
        %2077 = vmatprep.mubr.bf16.mxu0 0
        %2078 = vmatmul.mubr.bf16.gmra.mrb[0].mxu0 %v2040
        %v2079 = vpop.f32.mrb[0].mxu0
        %v2080 = vadd.f32 0.0, %v2079
        %v2081 = vpop.f32.mrb[0].mxu0
        %v2082 = vpop.f32.mrb[0].mxu0
        %v2083 = vadd.f32 0.0, %v2082
        %v2084 = vpop.f32.mrb[0].mxu0
        %2085 = vdwg.mxu0
        %v2086 = vmul.f32 %v2080, 0.35355338
        %v2087 = vmul.f32 %v2083, 0.35355338
        %v2088 = vsel %vm654, %v2086, -inf
        %2089 = vmax.xlane.f32.xlu0 %v2088
        %v2090 = vpop.xlane.xlu0 %2089
        %v2091 = vsel %vm654, %v2087, -inf
        %2092 = vmax.xlane.f32.xlu0 %v2091
        %v2093 = vpop.xlane.xlu0 %2092
        %v2094 = vsub.f32 %v2086, %v2090
        %v2095 = vsub.f32 %v2087, %v2093
        %v2096 = vmul.f32 %v2094, 1.442695
        %v2097 = vpow.pop %v2096
        %v2098 = vmul.f32 %v2095, 1.442695
        %v2099 = vpow.pop %v2098
        %v2100 = vsel %vm654, %v2097, 0.0
        %2101 = vadd.xlane.f32.xlu0 %v2100
        %v2102 = vpop.xlane.xlu0 %2101
        %v2103 = vsel %vm654, %v2099, 0.0
        %2104 = vadd.xlane.f32.xlu0 %v2103
        %v2105 = vpop.xlane.xlu0 %2104
        %v2106 = vrcp.pop %v2102
        %v2107 = vrcp.pop %v2105
        %v2108 = vmul.f32 %v2097, %v2106
        %v2109 = vmul.f32 %v2099, %v2107
        %v2110 = vpack.c.bf16 %v2109, %v2108
        %2111 = vrot.lane.b32.xlu0 %v1666, 40
        %v2112 = vpop.permute.xlu0 %2111
        %v2115 = vsel %vm654, %v2110, 0
        %2117 = vmatprep.subr.bf16.mxu0 0
        %2118 = vmatpush1.bf16.msra.mxu0 %v2112
        %2119 = vmatprep.subr.bf16.mxu0 0
        %2120 = vmatpush1.bf16.msra.mxu0 0
        %2121 = vmatprep.subr.bf16.mxu0 0
        %2122 = vmatpush1.bf16.msra.mxu0 0
        %2123 = vmatprep.subr.bf16.mxu0 0
        %2124 = vmatpush1.bf16.msra.mxu0 0
        %2125 = vmatprep.subr.bf16.mxu0 0
        %2126 = vmatpush1.bf16.msra.mxu0 0
        %2127 = vmatprep.subr.bf16.mxu0 0
        %2128 = vmatpush1.bf16.msra.mxu0 0
        %2129 = vmatprep.subr.bf16.mxu0 0
        %2130 = vmatpush1.bf16.msra.mxu0 0
        %2131 = vmatprep.subr.bf16.mxu0 0
        %2132 = vmatpush1.bf16.msra.mxu0 0
        %2133 = vmatprep.subr.bf16.mxu0 0
        %2134 = vmatpush1.bf16.msra.mxu0 0
        %2135 = vmatprep.subr.bf16.mxu0 0
        %2136 = vmatpush1.bf16.msra.mxu0 0
        %2137 = vmatprep.subr.bf16.mxu0 0
        %2138 = vmatpush1.bf16.msra.mxu0 0
        %2139 = vmatprep.subr.bf16.mxu0 0
        %2140 = vmatpush1.bf16.msra.mxu0 0
        %2141 = vmatprep.subr.bf16.mxu0 0
        %2142 = vmatpush1.bf16.msra.mxu0 0
        %2143 = vmatprep.subr.bf16.mxu0 0
        %2144 = vmatpush1.bf16.msra.mxu0 0
        %2145 = vmatprep.subr.bf16.mxu0 0
        %2146 = vmatpush1.bf16.msra.mxu0 0
        %2147 = vmatprep.subr.bf16.mxu0 0
        %2148 = vmatpush1.bf16.msra.mxu0 0
        %2149 = vmatprep.mubr.bf16.mxu0 0
        %2150 = vmatmul.mubr.bf16.gmra.mrb[0].mxu0 %v2115
        %v2151 = vpop.f32.mrb[0].mxu0
        %v2152 = vadd.f32 0.0, %v2151
        %v2153 = vpop.f32.mrb[0].mxu0
        %v2154 = vpop.f32.mrb[0].mxu0
        %v2155 = vadd.f32 0.0, %v2154
        %v2156 = vpop.f32.mrb[0].mxu0
        %2157 = vdwg.mxu0
        %2160 = vrot.lane.b32.xlu0 %v1906, 8
        %v2161 = vpop.permute.xlu0 %2160
        %2162 = vrot.lane.b32.xlu0 %v1909, 8
        %v2163 = vpop.permute.xlu0 %2162
        %2168 = vrot.lane.b32.xlu0 %v2029, 16
        %v2169 = vpop.permute.xlu0 %2168
        %2170 = vrot.lane.b32.xlu0 %v2032, 16
        %v2171 = vpop.permute.xlu0 %2170
        %2176 = vrot.lane.b32.xlu0 %v2152, 24
        %v2177 = vpop.permute.xlu0 %2176
        %2178 = vrot.lane.b32.xlu0 %v2155, 24
        %v2179 = vpop.permute.xlu0 %2178
        %v2182 = vsel %vm604, %v1783, %v2161
        %v2183 = vsel %vm604, %v1786, %v2163
        %v2184 = vsel %vm654, %v2182, %v2169
        %v2185 = vsel %vm654, %v2183, %v2171
        %v2186 = vsel %vm1122, %v2184, %v2177
        %v2187 = vsel %vm1122, %v2185, %v2179
        %v2188 = vpack.c.bf16 %v2187, %v2186
        %v2190 = vlaneseq
        %v2191 = vshrl.u32 %v2190, 7
        %v2192 = vsub.s32 0, %v2191
        %v2193 = vrot.slane %v1556, %v2192
        %v2199 = vunpack.c.l.b16 %v1551
        %v2200 = vunpack.c.l.b16 %v1552
        %v2201 = vunpack.c.l.b16 %v1553
        %v2202 = vunpack.c.l.b16 %v1554
        %v2203 = vpack.c.b16 %v2200, %v2199
        %v2204 = vpack.c.b16 %v2202, %v2201
        %v2208 = vsel %vm555, %v2188, 0
        %2210 = vmatprep.subr.bf16.mxu0 0
        %2211 = vmatpush1.bf16.msra.mxu0 %v2203
        %2212 = vmatprep.subr.bf16.mxu0 0
        %2213 = vmatpush1.bf16.msra.mxu0 %v2204
        %2214 = vmatprep.subr.bf16.mxu0 0
        %2215 = vmatpush1.bf16.msra.mxu0 0
        %2216 = vmatprep.subr.bf16.mxu0 0
        %2217 = vmatpush1.bf16.msra.mxu0 0
        %2218 = vmatprep.subr.bf16.mxu0 0
        %2219 = vmatpush1.bf16.msra.mxu0 0
        %2220 = vmatprep.subr.bf16.mxu0 0
        %2221 = vmatpush1.bf16.msra.mxu0 0
        %2222 = vmatprep.subr.bf16.mxu0 0
        %2223 = vmatpush1.bf16.msra.mxu0 0
        %2224 = vmatprep.subr.bf16.mxu0 0
        %2225 = vmatpush1.bf16.msra.mxu0 0
        %2226 = vmatprep.subr.bf16.mxu0 0
        %2227 = vmatpush1.bf16.msra.mxu0 0
        %2228 = vmatprep.subr.bf16.mxu0 0
        %2229 = vmatpush1.bf16.msra.mxu0 0
        %2230 = vmatprep.subr.bf16.mxu0 0
        %2231 = vmatpush1.bf16.msra.mxu0 0
        %2232 = vmatprep.subr.bf16.mxu0 0
        %2233 = vmatpush1.bf16.msra.mxu0 0
        %2234 = vmatprep.subr.bf16.mxu0 0
        %2235 = vmatpush1.bf16.msra.mxu0 0
        %2236 = vmatprep.subr.bf16.mxu0 0
        %2237 = vmatpush1.bf16.msra.mxu0 0
        %2238 = vmatprep.subr.bf16.mxu0 0
        %2239 = vmatpush1.bf16.msra.mxu0 0
        %2240 = vmatprep.subr.bf16.mxu0 0
        %2241 = vmatpush1.bf16.msra.mxu0 0
        %2242 = vmatprep.mubr.bf16.mxu0 0
        %2243 = vmatmul.mubr.bf16.gmra.mrb[0].mxu0 %v2208
        %v2244 = vpop.f32.mrb[0].mxu0
        %v2245 = vadd.f32 %v2193, %v2244
        %v2246 = vpop.f32.mrb[0].mxu0
        %v2247 = vpop.f32.mrb[0].mxu0
        %v2248 = vadd.f32 %v2193, %v2247
        %v2249 = vpop.f32.mrb[0].mxu0
        %2250 = vdwg.mxu0
        %v2251 = vadd.f32 %v1541, %v2245
        %v2252 = vadd.f32 %v1542, %v2248
        %v2253 = vsel %vm555, %v2251, 0.0
        %2254 = vadd.xlane.f32.xlu0 %v2253
        %v2255 = vpop.xlane.xlu0 %2254
        %v2256 = vsel %vm555, %v2252, 0.0
        %2257 = vadd.xlane.f32.xlu0 %v2256
        %v2258 = vpop.xlane.xlu0 %2257
        %v2259 = vmul.f32 %v2255, %v1196
        %v2260 = vmul.f32 %v2258, %v1196
        %v2261 = vsub.f32 %v2251, %v2259
        %v2262 = vsub.f32 %v2252, %v2260
        %v2263 = vmul.f32 %v2261, %v2261
        %v2264 = vmul.f32 %v2262, %v2262
        %v2265 = vsel %vm555, %v2263, 0.0
        %2266 = vadd.xlane.f32.xlu0 %v2265
        %v2267 = vpop.xlane.xlu0 %2266
        %v2268 = vsel %vm555, %v2264, 0.0
        %2269 = vadd.xlane.f32.xlu0 %v2268
        %v2270 = vpop.xlane.xlu0 %2269
        %v2271 = vmul.f32 %v2267, %v1196
        %v2272 = vmul.f32 %v2270, %v1196
        %v2273 = vadd.f32 %v2271, 1e-05
        %v2274 = vadd.f32 %v2272, 1e-05
        %v2275 = vrsqrt.pop %v2273
        %v2276 = vrsqrt.pop %v2274
        %v2277 = vmul.f32 %v2261, %v2275
        %v2278 = vmul.f32 %v2262, %v2276
        %v2280 = vlaneseq
        %v2281 = vshrl.u32 %v2280, 7
        %v2282 = vsub.s32 0, %v2281
        %v2283 = vrot.slane %v1558, %v2282
        %v2285 = vmul.f32 %v2277, %v2283
        %v2286 = vmul.f32 %v2278, %v2283
        %v2288 = vlaneseq
        %v2289 = vshrl.u32 %v2288, 7
        %v2290 = vsub.s32 0, %v2289
        %v2291 = vrot.slane %v1560, %v2290
        %v2293 = vadd.f32 %v2285, %v2291
        %v2294 = vadd.f32 %v2286, %v2291
        %v2295 = vrot.slane %v2293, 7
        %v2296 = vrot.slane %v2294, 7
        %v2297 = vsel %vm1237, %v2295, %v2296
        %v2298 = vsel %vm1237, %v2296, %v2295
        %v2299 = vsel %vm1241, 0.0, %v2298
        %v2300 = vsel %vm1242, 0.0, %v2297
        %v2301 = vrot.slane %v2293, 1
        %v2302 = vrot.slane %v2294, 1
        %v2303 = vsel %vm1247, %v2301, %v2302
        %v2304 = vsel %vm1247, %v2302, %v2301
        %v2305 = vsel %vm1250, 0.0, %v2303
        %v2306 = vsel %vm1251, 0.0, %v2304
        %2309 = vrot.lane.b32.xlu0 %v2293, 32
        %v2310 = vpop.permute.xlu0 %2309
        %2311 = vrot.lane.b32.xlu0 %v2294, 32
        %v2312 = vpop.permute.xlu0 %2311
        %2317 = vrot.lane.b32.xlu0 %v2305, 64
        %v2318 = vpop.permute.xlu0 %2317
        %2319 = vrot.lane.b32.xlu0 %v2306, 64
        %v2320 = vpop.permute.xlu0 %2319
        %v2323 = vsel %vm555, %v2299, %v2310
        %v2324 = vsel %vm555, %v2300, %v2312
        %v2325 = vsel %vm1272, %v2323, %v2318
        %v2326 = vsel %vm1272, %v2324, %v2320
        %v2327 = vpack.c.bf16 %v2326, %v2325
        %v2329 = vlaneseq
        %v2330 = vshrl.u32 %v2329, 7
        %v2331 = vsub.s32 0, %v2330
        %v2332 = vrot.slane %v1575, %v2331
        %v2346 = vunpack.c.l.b16 %v1562
        %v2347 = vunpack.c.l.b16 %v1563
        %v2348 = vunpack.c.l.b16 %v1564
        %v2349 = vunpack.c.l.b16 %v1565
        %v2350 = vunpack.c.l.b16 %v1566
        %v2351 = vunpack.c.l.b16 %v1567
        %v2352 = vunpack.c.l.b16 %v1568
        %v2353 = vunpack.c.l.b16 %v1569
        %v2354 = vunpack.c.l.b16 %v1570
        %v2355 = vunpack.c.l.b16 %v1571
        %v2356 = vunpack.c.l.b16 %v1572
        %v2357 = vunpack.c.l.b16 %v1573
        %v2358 = vpack.c.b16 %v2347, %v2346
        %v2359 = vpack.c.b16 %v2349, %v2348
        %v2360 = vpack.c.b16 %v2351, %v2350
        %v2361 = vpack.c.b16 %v2353, %v2352
        %v2362 = vpack.c.b16 %v2355, %v2354
        %v2363 = vpack.c.b16 %v2357, %v2356
        %v2371 = vsel %vm1318, %v2327, 0
        %2373 = vmatprep.subr.bf16.mxu0 0
        %2374 = vmatpush1.bf16.msra.mxu0 %v2358
        %2375 = vmatprep.subr.bf16.mxu0 0
        %2376 = vmatpush1.bf16.msra.mxu0 %v2359
        %2377 = vmatprep.subr.bf16.mxu0 0
        %2378 = vmatpush1.bf16.msra.mxu0 %v2360
        %2379 = vmatprep.subr.bf16.mxu0 0
        %2380 = vmatpush1.bf16.msra.mxu0 %v2361
        %2381 = vmatprep.subr.bf16.mxu0 0
        %2382 = vmatpush1.bf16.msra.mxu0 %v2362
        %2383 = vmatprep.subr.bf16.mxu0 0
        %2384 = vmatpush1.bf16.msra.mxu0 %v2363
        %2385 = vmatprep.subr.bf16.mxu0 0
        %2386 = vmatpush1.bf16.msra.mxu0 0
        %2387 = vmatprep.subr.bf16.mxu0 0
        %2388 = vmatpush1.bf16.msra.mxu0 0
        %2389 = vmatprep.subr.bf16.mxu0 0
        %2390 = vmatpush1.bf16.msra.mxu0 0
        %2391 = vmatprep.subr.bf16.mxu0 0
        %2392 = vmatpush1.bf16.msra.mxu0 0
        %2393 = vmatprep.subr.bf16.mxu0 0
        %2394 = vmatpush1.bf16.msra.mxu0 0
        %2395 = vmatprep.subr.bf16.mxu0 0
        %2396 = vmatpush1.bf16.msra.mxu0 0
        %2397 = vmatprep.subr.bf16.mxu0 0
        %2398 = vmatpush1.bf16.msra.mxu0 0
        %2399 = vmatprep.subr.bf16.mxu0 0
        %2400 = vmatpush1.bf16.msra.mxu0 0
        %2401 = vmatprep.subr.bf16.mxu0 0
        %2402 = vmatpush1.bf16.msra.mxu0 0
        %2403 = vmatprep.subr.bf16.mxu0 0
        %2404 = vmatpush1.bf16.msra.mxu0 0
        %2405 = vmatprep.mubr.bf16.mxu0 0
        %2406 = vmatmul.mubr.bf16.gmra.mrb[0].mxu0 %v2371
        %v2407 = vpop.f32.mrb[0].mxu0
        %v2408 = vadd.f32 %v2332, %v2407
        %v2409 = vpop.f32.mrb[0].mxu0
        %v2410 = vpop.f32.mrb[0].mxu0
        %v2411 = vadd.f32 %v2332, %v2410
        %v2412 = vpop.f32.mrb[0].mxu0
        %2413 = vdwg.mxu0
        %v2414 = vmax.f32 %v2408, 0.0
        %v2415 = vmax.f32 %v2411, 0.0
        %v2416 = vrot.slane %v2414, 7
        %v2417 = vrot.slane %v2415, 7
        %v2418 = vsel %vm1237, %v2416, %v2417
        %v2419 = vsel %vm1237, %v2417, %v2416
        %v2420 = vsel %vm1241, 0.0, %v2419
        %v2421 = vsel %vm1242, 0.0, %v2418
        %v2422 = vrot.slane %v2414, 1
        %v2423 = vrot.slane %v2415, 1
        %v2424 = vsel %vm1247, %v2422, %v2423
        %v2425 = vsel %vm1247, %v2423, %v2422
        %v2426 = vsel %vm1250, 0.0, %v2424
        %v2427 = vsel %vm1251, 0.0, %v2425
        %2430 = vrot.lane.b32.xlu0 %v2414, 64
        %v2431 = vpop.permute.xlu0 %2430
        %2432 = vrot.lane.b32.xlu0 %v2415, 64
        %v2433 = vpop.permute.xlu0 %2432
        %v2436 = vsel %vm1272, %v2420, %v2431
        %v2437 = vsel %vm1272, %v2421, %v2433
        %v2438 = vpack.c.bf16 %v2437, %v2436
        %v2439 = vpack.c.bf16 %v2427, %v2426
        %v2441 = vlaneseq
        %v2442 = vshrl.u32 %v2441, 7
        %v2443 = vsub.s32 0, %v2442
        %v2444 = vrot.slane %v1602, %v2443
        %v2470 = vunpack.c.l.b16 %v1577
        %v2471 = vunpack.c.l.b16 %v1578
        %v2472 = vunpack.c.l.b16 %v1579
        %v2473 = vunpack.c.l.b16 %v1580
        %v2474 = vunpack.c.l.b16 %v1581
        %v2475 = vunpack.c.l.b16 %v1582
        %v2476 = vunpack.c.l.b16 %v1583
        %v2477 = vunpack.c.l.b16 %v1584
        %v2478 = vunpack.c.l.b16 %v1585
        %v2479 = vunpack.c.l.b16 %v1586
        %v2480 = vunpack.c.l.b16 %v1587
        %v2481 = vunpack.c.l.b16 %v1588
        %v2482 = vunpack.c.l.b16 %v1589
        %v2483 = vunpack.c.l.b16 %v1590
        %v2484 = vunpack.c.l.b16 %v1591
        %v2485 = vunpack.c.l.b16 %v1592
        %v2486 = vunpack.c.l.b16 %v1593
        %v2487 = vunpack.c.l.b16 %v1594
        %v2488 = vunpack.c.l.b16 %v1595
        %v2489 = vunpack.c.l.b16 %v1596
        %v2490 = vunpack.c.l.b16 %v1597
        %v2491 = vunpack.c.l.b16 %v1598
        %v2492 = vunpack.c.l.b16 %v1599
        %v2493 = vunpack.c.l.b16 %v1600
        %v2494 = vpack.c.b16 %v2471, %v2470
        %v2495 = vpack.c.b16 %v2473, %v2472
        %v2496 = vpack.c.b16 %v2475, %v2474
        %v2497 = vpack.c.b16 %v2477, %v2476
        %v2498 = vpack.c.b16 %v2479, %v2478
        %v2499 = vpack.c.b16 %v2481, %v2480
        %v2500 = vpack.c.b16 %v2483, %v2482
        %v2501 = vpack.c.b16 %v2485, %v2484
        %v2502 = vpack.c.b16 %v2487, %v2486
        %v2503 = vpack.c.b16 %v2489, %v2488
        %v2504 = vpack.c.b16 %v2491, %v2490
        %v2505 = vpack.c.b16 %v2493, %v2492
        %v2519 = vsel %vm1272, %v2439, 0
        %2521 = vmatprep.subr.bf16.mxu0 0
        %2522 = vmatpush1.bf16.msra.mxu0 %v2494
        %2523 = vmatprep.subr.bf16.mxu0 0
        %2524 = vmatpush1.bf16.msra.mxu0 %v2495
        %2525 = vmatprep.subr.bf16.mxu0 0
        %2526 = vmatpush1.bf16.msra.mxu0 %v2496
        %2527 = vmatprep.subr.bf16.mxu0 0
        %2528 = vmatpush1.bf16.msra.mxu0 %v2497
        %2529 = vmatprep.subr.bf16.mxu0 0
        %2530 = vmatpush1.bf16.msra.mxu0 %v2498
        %2531 = vmatprep.subr.bf16.mxu0 0
        %2532 = vmatpush1.bf16.msra.mxu0 %v2499
        %2533 = vmatprep.subr.bf16.mxu0 0
        %2534 = vmatpush1.bf16.msra.mxu0 %v2500
        %2535 = vmatprep.subr.bf16.mxu0 0
        %2536 = vmatpush1.bf16.msra.mxu0 %v2501
        %2537 = vmatprep.subr.bf16.mxu0 0
        %2538 = vmatpush1.bf16.msra.mxu0 %v2502
        %2539 = vmatprep.subr.bf16.mxu0 0
        %2540 = vmatpush1.bf16.msra.mxu0 %v2503
        %2541 = vmatprep.subr.bf16.mxu0 0
        %2542 = vmatpush1.bf16.msra.mxu0 %v2504
        %2543 = vmatprep.subr.bf16.mxu0 0
        %2544 = vmatpush1.bf16.msra.mxu0 %v2505
        %2545 = vmatprep.subr.bf16.mxu0 0
        %2546 = vmatpush1.bf16.msra.mxu0 0
        %2547 = vmatprep.subr.bf16.mxu0 0
        %2548 = vmatpush1.bf16.msra.mxu0 0
        %2549 = vmatprep.subr.bf16.mxu0 0
        %2550 = vmatpush1.bf16.msra.mxu0 0
        %2551 = vmatprep.subr.bf16.mxu0 0
        %2552 = vmatpush1.bf16.msra.mxu0 0
        %2553 = vmatprep.mubr.bf16.mxu0 %v2519
        %2554 = vmatmul.mubr.bf16.gmra.mrb[0].mxu0 %v2438
        %v2555 = vpop.f32.mrb[0].mxu0
        %v2556 = vadd.f32 %v2444, %v2555
        %v2557 = vpop.f32.mrb[0].mxu0
        %v2558 = vpop.f32.mrb[0].mxu0
        %v2559 = vadd.f32 %v2444, %v2558
        %v2560 = vpop.f32.mrb[0].mxu0
        %2561 = vdwg.mxu0
        %v2562 = vadd.f32 %v2293, %v2556
        %v2563 = vadd.f32 %v2294, %v2559
        %v2564 = vsel %vm555, %v2562, 0.0
        %2565 = vadd.xlane.f32.xlu0 %v2564
        %v2566 = vpop.xlane.xlu0 %2565
        %v2567 = vsel %vm555, %v2563, 0.0
        %2568 = vadd.xlane.f32.xlu0 %v2567
        %v2569 = vpop.xlane.xlu0 %2568
        %v2570 = vmul.f32 %v2566, %v1196
        %v2571 = vmul.f32 %v2569, %v1196
        %v2572 = vsub.f32 %v2562, %v2570
        %v2573 = vsub.f32 %v2563, %v2571
        %v2574 = vmul.f32 %v2572, %v2572
        %v2575 = vmul.f32 %v2573, %v2573
        %v2576 = vsel %vm555, %v2574, 0.0
        %2577 = vadd.xlane.f32.xlu0 %v2576
        %v2578 = vpop.xlane.xlu0 %2577
        %v2579 = vsel %vm555, %v2575, 0.0
        %2580 = vadd.xlane.f32.xlu0 %v2579
        %v2581 = vpop.xlane.xlu0 %2580
        %v2582 = vmul.f32 %v2578, %v1196
        %v2583 = vmul.f32 %v2581, %v1196
        %v2584 = vadd.f32 %v2582, 1e-05
        %v2585 = vadd.f32 %v2583, 1e-05
        %v2586 = vrsqrt.pop %v2584
        %v2587 = vrsqrt.pop %v2585
        %v2588 = vmul.f32 %v2572, %v2586
        %v2589 = vmul.f32 %v2573, %v2587
        %v2590 = vmul.f32 %v2588, %v482
        %v2591 = vmul.f32 %v2589, %v483
        %v2592 = vadd.f32 %v2590, %v484
        %v2593 = vadd.f32 %v2591, %v485
        %2594 = vst.msk [vmem:[%s463] sm:$0xff] %vm555, %v2592
        %2595 = vst.msk [vmem:[%s463 + $0x8] sm:$0xff] %vm555, %v2593
        %s2596 = sand.u32 %s323, 1
        %s2597 = scalar_lea.sflag [#allocation3], %s2596
        %s2598 = sand.u32 %s323, 1
        %s2599 = smul.addr %s2598, 16
        %s2600 = scalar_lea.vmem [#allocation2], %s2599
        // Predicated region
        $region73: #{tpu_custom_call.1} parent=71 // pred_check
          %p2601 = pneg %p333
        $region74: #{tpu_custom_call.1} parent=71 // pred_check_branch
          %2603 = sbr.rel (%p2601) target = $region76
        $region75: #{tpu_custom_call.1} parent=71 // pred_region
          %s2605 = ssub.s32 256, 256
          %2606 = vsyncadd %s2597, %s2605
          %s2607 = smul.addr %s27, 2
          %s2608 = smul.addr %s2607, 128
          %s2609 = scalar_lea.hbm %s13, %s2608
          %s2610 = sshll.u32 %s2600, 4
          %s2611 = int_to_ptr.vmem [resolvable:$true] %s2610
          %2616 = dma.vmem_to_hbm [thread:$0]  %s2611, 256, %s2609, %s2597, 128, 128, 8
        $region76: #{tpu_custom_call.1} parent=71 // pred_fallthru
          _
      $region72: #{tpu_custom_call.1} parent=5 // pred_fallthru
        _
      %p2617 = scmp.le.s32.totalorder 2, %s22
      // Predicated region
      $region77: #{tpu_custom_call.1} parent=5 // pred_check
        %p2618 = pneg %p2617
      $region78: #{tpu_custom_call.1} parent=5 // pred_check_branch
        %2620 = sbr.rel (%p2618) target = $region80
      $region79: #{tpu_custom_call.1} parent=5 // pred_region
        %s2621 = ssub.s32 %s22, 2
        // Predicated region
        $region81: #{tpu_custom_call.1} parent=79 // pred_check
          %p2622 = pneg %p339
        $region82: #{tpu_custom_call.1} parent=79 // pred_check_branch
          %2624 = sbr.rel (%p2622) target = $region84
        $region83: #{tpu_custom_call.1} parent=79 // pred_region
          %s2625 = sand.u32 %s324, 1
          %s2626 = scalar_lea.sflag [#allocation3], %s2625
          %s2627 = sand.u32 %s324, 1
          %s2628 = smul.addr %s2627, 16
          %s2629 = scalar_lea.vmem [#allocation2], %s2628
          %2630 = dma.done %s2626, 256
        $region84: #{tpu_custom_call.1} parent=79 // pred_fallthru
          _
      $region80: #{tpu_custom_call.1} parent=5 // pred_fallthru
        _
    $region6: #{tpu_custom_call.1} parent=1 // loop_footer
      %s26 = sadd.s32 1, %s22
    $region7: #{tpu_custom_call.1} parent=1 // loop_footer_branch
      %21 = sbr.rel target = $region3
    $region8: #{tpu_custom_call.1} parent=1 // loop_exit
      _
    %2631 = vsyncpa [#allocation3], 1
    %s2632 = scalar_lea.sflag [#allocation3], 1
    %2633 = vsyncpa %s2632, 1

</llo_original>
